<compile_context>
chip_gen: v6e
topology: v6e:2x2x1
jax: 0.10.0
libtpu: 0.0.40
codegen_flags: <defaults>
</compile_context>

<pallas_src>
import functools

import jax
import jax.numpy as jnp
from jax.experimental import pallas as pl
from jax.experimental.pallas import tpu as pltpu


# k = ky*3 + kx  ->  (dy, dx) = (ky-1, kx-1); matches the wrapper's weight
# flattening and the column-mask construction.
_TAPS = [(k // 3 - 1, k % 3 - 1) for k in range(9)]


def _resblock_kernel(x_ref, w1_ref, b1_ref, w2_ref, b2_ref, mask_ref, y_ref,
                     ebuf, *, B, C, H, W, PAD):
    # x_ref    : (B*C, L)        B images, spatial flattened on lanes   (VMEM)
    # w1_ref   : (C, 9*C)        conv1 weights, [co, k*C + ci]          (VMEM)
    # b1_ref   : (C, 1)          conv1 bias                             (VMEM)
    # w2_ref   : (C, 9*C)        conv2 weights                          (VMEM)
    # b2_ref   : (C, 1)          conv2 bias                             (VMEM)
    # mask_ref : (2, L)          row 0: dx=-1 column mask, row 1: dx=+1 (VMEM)
    # y_ref    : (B*C, L)        output block                           (VMEM)
    # ebuf     : (B*C, 2*PAD+L)  scratch; activations live in [PAD, PAD+L).
    L = H * W
    BC = B * C

    # Halo zeroing (replaces the old per-tap dy masks): only lanes outside
    # [PAD, PAD+L) can be touched by the shifted tap slices; two dense
    # lane-aligned stores per grid step.
    ebuf[:, 0:PAD] = jnp.zeros((BC, PAD), jnp.float32)
    ebuf[:, PAD + L:2 * PAD + L] = jnp.zeros((BC, PAD), jnp.float32)

    x = x_ref[...]                                    # (BC, L), one dense load
    ebuf[:, PAD:PAD + L] = jnp.maximum(x, 0.0)        # relu(x), coalesced store

    # Column-wrap masks for dx = -1 / +1 taps; broadcast once and reuse
    # (JAX does not CSE broadcasts -- keep them hoisted out of the loops).
    mask_l = jnp.broadcast_to(mask_ref[0:1, :], (C, L))
    mask_r = jnp.broadcast_to(mask_ref[1:2, :], (C, L))

    def conv_image(b, w_ref, b_ref):
        """3x3 conv (padding=1) for image b, reading relu'd activations
        from ebuf rows [b*C, (b+1)*C).  Returns the (C, L) conv output
        (bias included), vectorized over output channels on the VPU."""
        base = b * C
        # Two accumulators to break the serial FMA dependence chain.
        acc0 = jnp.broadcast_to(b_ref[...], (C, L))   # bias init (one broadcast)
        acc1 = jnp.zeros((C, L), jnp.float32)
        accs = [acc0, acc1]
        for k, (dy, dx) in enumerate(_TAPS):
            d = dy * W + dx
            sl = ebuf[base:base + C, PAD + d:PAD + d + L]   # (C, L) shifted taps
            if dx == -1:
                sl = sl * mask_l
            elif dx == 1:
                sl = sl * mask_r
            for ci in range(C):
                j = k * C + ci
                wcol = w_ref[:, j:j + 1]                    # (C, 1) weight column
                accs[ci & 1] = accs[ci & 1] + wcol * sl[ci:ci + 1, :]
        return accs[0] + accs[1]

    # ---- r = conv1(relu(x)); stage relu(r) back into ebuf (one dense store) ----
    r1 = jnp.concatenate([conv_image(b, w1_ref, b1_ref) for b in range(B)],
                         axis=0)
    ebuf[:, PAD:PAD + L] = jnp.maximum(r1, 0.0)

    # ---- r = conv2(relu(r)); identity shortcut, single lane-dense store ----
    r2 = jnp.concatenate([conv_image(b, w2_ref, b2_ref) for b in range(B)],
                         axis=0)
    y_ref[...] = x + r2


def resblock_forward(x_nchw, w1, b1, w2, b2):
    """x_nchw: (N, C, H, W); w*: (Cout, Cin, 3, 3) PyTorch OIHW; b*: (Cout,)."""
    N, Cin, H, W = x_nchw.shape
    Cout = w1.shape[0]
    assert Cin == Cout, "identity-shortcut ResBlock requires indim == outdim"
    C = Cin
    L = H * W
    PAD = 128                       # lane-aligned halo; >= W + 1 shift range
    assert W + 1 <= PAD

    # Batch block per grid step (amortizes fixed per-step cost).  For the
    # tiny test batch this collapses to a single grid step.
    B = 1
    for cand in range(min(N, 8), 0, -1):
        if N % cand == 0:
            B = cand
            break
    n_blocks = N // B

    # Free reshape: NCHW with (H, W) flattened -> spatial on the lane axis.
    x_flat = x_nchw.reshape(N * C, L).astype(jnp.float32)

    def stage_w(w):
        # OIHW (co, ci, ky, kx) -> (co, (ky*3+kx)*C + ci): co on sublanes so a
        # single static lane slice yields the (C, 1) weight column per (k, ci).
        return jnp.transpose(w, (0, 2, 3, 1)).reshape(C, 9 * C).astype(jnp.float32)

    w1k, w2k = stage_w(w1), stage_w(w2)
    b1k = b1.reshape(C, 1).astype(jnp.float32)
    b2k = b2.reshape(C, 1).astype(jnp.float32)

    # Output-column validity masks for the dx = -1 / +1 taps (2*L floats,
    # stays VMEM-resident: constant index_map -> no re-DMA between steps).
    col = jnp.arange(L, dtype=jnp.int32) % W
    masks = jnp.stack([(col != 0), (col != W - 1)], axis=0).astype(jnp.float32)

    kernel = functools.partial(_resblock_kernel, B=B, C=C, H=H, W=W, PAD=PAD)

    out_flat = pl.pallas_call(
        kernel,
        out_shape=jax.ShapeDtypeStruct((N * C, L), jnp.float32),
        grid_spec=pltpu.PrefetchScalarGridSpec(
            num_scalar_prefetch=0,
            grid=(n_blocks,),
            in_specs=[
                pl.BlockSpec((B * C, L), lambda n: (n, 0)),     # x (B images)
                pl.BlockSpec((C, 9 * C), lambda n: (0, 0)),     # w1 (resident)
                pl.BlockSpec((C, 1), lambda n: (0, 0)),         # b1
                pl.BlockSpec((C, 9 * C), lambda n: (0, 0)),     # w2
                pl.BlockSpec((C, 1), lambda n: (0, 0)),         # b2
                pl.BlockSpec((2, L), lambda n: (0, 0)),         # column masks
            ],
            out_specs=pl.BlockSpec((B * C, L), lambda n: (n, 0)),
            scratch_shapes=[pltpu.VMEM((B * C, 2 * PAD + L), jnp.float32)],
        ),
        compiler_params=pltpu.CompilerParams(
            dimension_semantics=("parallel",)),
    )(x_flat, w1k, b1k, w2k, b2k, masks)

    return out_flat.reshape(N, C, H, W)


def _reference(x_nchw, w1, b1, w2, b2):
    """Pure-JAX reference of the same forward (NCHW, like PyTorch)."""
    def conv(x, w, b):
        y = jax.lax.conv_general_dilated(
            x, w, window_strides=(1, 1), padding=((1, 1), (1, 1)),
            dimension_numbers=("NCHW", "OIHW", "NCHW"))
        return y + b[None, :, None, None]
    r = conv(jax.nn.relu(x_nchw), w1, b1)
    r = conv(jax.nn.relu(r), w2, b2)
    return x_nchw + r


if __name__ == "__main__":
    N, C, H, W = 2, 4, 16, 16   # indim == outdim == 4, stride == 1
    key = jax.random.PRNGKey(0)
    kx, kw1, kb1, kw2, kb2 = jax.random.split(key, 5)

    x = jax.random.normal(kx, (N, C, H, W), jnp.float32)
    # Deterministic synthetic parameters (Conv2d shapes: (out, in, 3, 3), (out,)).
    w1 = jax.random.normal(kw1, (C, C, 3, 3), jnp.float32) * 0.1
    b1 = jax.random.normal(kb1, (C,), jnp.float32) * 0.1
    w2 = jax.random.normal(kw2, (C, C, 3, 3), jnp.float32) * 0.1
    b2 = jax.random.normal(kb2, (C,), jnp.float32) * 0.1

    fwd = jax.jit(resblock_forward)
    y = jax.block_until_ready(fwd(x, w1, b1, w2, b2))

    y_ref = _reference(x, w1, b1, w2, b2)
    assert y.shape == (N, C, H, W)
    assert jnp.allclose(y, y_ref, atol=1e-4, rtol=1e-4), "mismatch vs reference"

    print("KERNEL_OK")
</pallas_src>

<mosaic_0001>
module attributes {stable_mosaic.version = 11 : i64} {
  func.func @_resblock_kernel(%arg0: i32, %arg1: memref<8x256xf32, #tpu.memory_space<vmem>>, %arg2: memref<4x36xf32, #tpu.memory_space<vmem>>, %arg3: memref<4x1xf32, #tpu.memory_space<vmem>>, %arg4: memref<4x36xf32, #tpu.memory_space<vmem>>, %arg5: memref<4x1xf32, #tpu.memory_space<vmem>>, %arg6: memref<2x256xf32, #tpu.memory_space<vmem>>, %arg7: memref<8x256xf32, #tpu.memory_space<vmem>>, %arg8: memref<8x512xf32, #tpu.memory_space<vmem>>) attributes {dimension_semantics = [#tpu.dimension_semantics<parallel>], iteration_bounds = array<i64: 1>, scalar_prefetch = 0 : i64, scratch_operands = 1 : i64, tpu.core_type = #tpu.core_type<tc>, window_params = [{transform_indices = @transform_0, window_bounds = array<i64: 8, 256>}, {pipeline_mode = #tpu.pipeline_mode<synchronous>, transform_indices = @transform_1, window_bounds = array<i64: 4, 36>}, {pipeline_mode = #tpu.pipeline_mode<synchronous>, transform_indices = @transform_2, window_bounds = array<i64: 4, 1>}, {pipeline_mode = #tpu.pipeline_mode<synchronous>, transform_indices = @transform_3, window_bounds = array<i64: 4, 36>}, {pipeline_mode = #tpu.pipeline_mode<synchronous>, transform_indices = @transform_4, window_bounds = array<i64: 4, 1>}, {pipeline_mode = #tpu.pipeline_mode<synchronous>, transform_indices = @transform_5, window_bounds = array<i64: 2, 256>}, {transform_indices = @transform_6, window_bounds = array<i64: 8, 256>}]} {
    %cst = arith.constant 0.000000e+00 : f32
    %0 = vector.broadcast %cst : f32 to vector<8x128xf32>
    %c0 = arith.constant 0 : index
    %c0_0 = arith.constant 0 : index
    %1 = vector.load %arg8[%c0, %c0_0] : memref<8x512xf32, #tpu.memory_space<vmem>>, vector<8x128xf32>
    tpu.vector_store %arg8[%c0, %c0_0], %0 {strides = array<i32>} : memref<8x512xf32, #tpu.memory_space<vmem>>, vector<8x128xf32>,
    %cst_1 = arith.constant 0.000000e+00 : f32
    %2 = vector.broadcast %cst_1 : f32 to vector<8x128xf32>
    %c0_2 = arith.constant 0 : index
    %c384 = arith.constant 384 : index
    %3 = vector.load %arg8[%c0_2, %c384] : memref<8x512xf32, #tpu.memory_space<vmem>>, vector<8x128xf32>
    tpu.vector_store %arg8[%c0_2, %c384], %2 {strides = array<i32>} : memref<8x512xf32, #tpu.memory_space<vmem>>, vector<8x128xf32>,
    %c0_3 = arith.constant 0 : index
    %c0_4 = arith.constant 0 : index
    %4 = vector.load %arg1[%c0_3, %c0_4] : memref<8x256xf32, #tpu.memory_space<vmem>>, vector<8x256xf32>
    %cst_5 = arith.constant 0.000000e+00 : f32
    %5 = vector.broadcast %cst_5 : f32 to vector<8x256xf32>
    %6 = arith.maximumf %4, %5 : vector<8x256xf32>
    %c0_6 = arith.constant 0 : index
    %c128 = arith.constant 128 : index
    %7 = vector.load %arg8[%c0_6, %c128] : memref<8x512xf32, #tpu.memory_space<vmem>>, vector<8x256xf32>
    tpu.vector_store %arg8[%c0_6, %c128], %6 {strides = array<i32>} : memref<8x512xf32, #tpu.memory_space<vmem>>, vector<8x256xf32>,
    %c0_7 = arith.constant 0 : index
    %c0_8 = arith.constant 0 : index
    %8 = vector.load %arg6[%c0_7, %c0_8] : memref<2x256xf32, #tpu.memory_space<vmem>>, vector<1x256xf32>
    %9 = vector.shape_cast %8 : vector<1x256xf32> to vector<1x256xf32>
    %10 = vector.broadcast %9 : vector<1x256xf32> to vector<4x256xf32>
    %c1 = arith.constant 1 : index
    %c0_9 = arith.constant 0 : index
    %11 = vector.load %arg6[%c1, %c0_9] : memref<2x256xf32, #tpu.memory_space<vmem>>, vector<1x256xf32>
    %12 = vector.shape_cast %11 : vector<1x256xf32> to vector<1x256xf32>
    %13 = vector.broadcast %12 : vector<1x256xf32> to vector<4x256xf32>
    %c0_10 = arith.constant 0 : index
    %c0_11 = arith.constant 0 : index
    %14 = vector.load %arg3[%c0_10, %c0_11] : memref<4x1xf32, #tpu.memory_space<vmem>>, vector<4x1xf32>
    %15 = vector.shape_cast %14 : vector<4x1xf32> to vector<4x1xf32>
    %16 = vector.broadcast %15 : vector<4x1xf32> to vector<4x256xf32>
    %cst_12 = arith.constant 0.000000e+00 : f32
    %17 = vector.broadcast %cst_12 : f32 to vector<4x256xf32>
    %c0_13 = arith.constant 0 : index
    %c111 = arith.constant 111 : index
    %18 = vector.load %arg8[%c0_13, %c111] : memref<8x512xf32, #tpu.memory_space<vmem>>, vector<4x256xf32>
    %19 = arith.mulf %18, %10 : vector<4x256xf32>
    %c0_14 = arith.constant 0 : index
    %c0_15 = arith.constant 0 : index
    %20 = vector.load %arg2[%c0_14, %c0_15] : memref<4x36xf32, #tpu.memory_space<vmem>>, vector<4x1xf32>
    %21 = vector.extract_strided_slice %19 {offsets = [0, 0], sizes = [1, 256], strides = [1, 1]} : vector<4x256xf32> to vector<1x256xf32>
    %22 = vector.broadcast %20 : vector<4x1xf32> to vector<4x256xf32>
    %23 = vector.broadcast %21 : vector<1x256xf32> to vector<4x256xf32>
    %24 = arith.mulf %22, %23 : vector<4x256xf32>
    %25 = arith.addf %16, %24 : vector<4x256xf32>
    %c0_16 = arith.constant 0 : index
    %c1_17 = arith.constant 1 : index
    %26 = vector.load %arg2[%c0_16, %c1_17] : memref<4x36xf32, #tpu.memory_space<vmem>>, vector<4x1xf32>
    %27 = vector.extract_strided_slice %19 {offsets = [1, 0], sizes = [1, 256], strides = [1, 1]} : vector<4x256xf32> to vector<1x256xf32>
    %28 = vector.broadcast %26 : vector<4x1xf32> to vector<4x256xf32>
    %29 = vector.broadcast %27 : vector<1x256xf32> to vector<4x256xf32>
    %30 = arith.mulf %28, %29 : vector<4x256xf32>
    %31 = arith.addf %17, %30 : vector<4x256xf32>
    %c0_18 = arith.constant 0 : index
    %c2 = arith.constant 2 : index
    %32 = vector.load %arg2[%c0_18, %c2] : memref<4x36xf32, #tpu.memory_space<vmem>>, vector<4x1xf32>
    %33 = vector.extract_strided_slice %19 {offsets = [2, 0], sizes = [1, 256], strides = [1, 1]} : vector<4x256xf32> to vector<1x256xf32>
    %34 = vector.broadcast %32 : vector<4x1xf32> to vector<4x256xf32>
    %35 = vector.broadcast %33 : vector<1x256xf32> to vector<4x256xf32>
    %36 = arith.mulf %34, %35 : vector<4x256xf32>
    %37 = arith.addf %25, %36 : vector<4x256xf32>
    %c0_19 = arith.constant 0 : index
    %c3 = arith.constant 3 : index
    %38 = vector.load %arg2[%c0_19, %c3] : memref<4x36xf32, #tpu.memory_space<vmem>>, vector<4x1xf32>
    %39 = vector.extract_strided_slice %19 {offsets = [3, 0], sizes = [1, 256], strides = [1, 1]} : vector<4x256xf32> to vector<1x256xf32>
    %40 = vector.broadcast %38 : vector<4x1xf32> to vector<4x256xf32>
    %41 = vector.broadcast %39 : vector<1x256xf32> to vector<4x256xf32>
    %42 = arith.mulf %40, %41 : vector<4x256xf32>
    %43 = arith.addf %31, %42 : vector<4x256xf32>
    %c0_20 = arith.constant 0 : index
    %c112 = arith.constant 112 : index
    %44 = vector.load %arg8[%c0_20, %c112] : memref<8x512xf32, #tpu.memory_space<vmem>>, vector<4x256xf32>
    %c0_21 = arith.constant 0 : index
    %c4 = arith.constant 4 : index
    %45 = vector.load %arg2[%c0_21, %c4] : memref<4x36xf32, #tpu.memory_space<vmem>>, vector<4x1xf32>
    %46 = vector.extract_strided_slice %44 {offsets = [0, 0], sizes = [1, 256], strides = [1, 1]} : vector<4x256xf32> to vector<1x256xf32>
    %47 = vector.broadcast %45 : vector<4x1xf32> to vector<4x256xf32>
    %48 = vector.broadcast %46 : vector<1x256xf32> to vector<4x256xf32>
    %49 = arith.mulf %47, %48 : vector<4x256xf32>
    %50 = arith.addf %37, %49 : vector<4x256xf32>
    %c0_22 = arith.constant 0 : index
    %c5 = arith.constant 5 : index
    %51 = vector.load %arg2[%c0_22, %c5] : memref<4x36xf32, #tpu.memory_space<vmem>>, vector<4x1xf32>
    %52 = vector.extract_strided_slice %44 {offsets = [1, 0], sizes = [1, 256], strides = [1, 1]} : vector<4x256xf32> to vector<1x256xf32>
    %53 = vector.broadcast %51 : vector<4x1xf32> to vector<4x256xf32>
    %54 = vector.broadcast %52 : vector<1x256xf32> to vector<4x256xf32>
    %55 = arith.mulf %53, %54 : vector<4x256xf32>
    %56 = arith.addf %43, %55 : vector<4x256xf32>
    %c0_23 = arith.constant 0 : index
    %c6 = arith.constant 6 : index
    %57 = vector.load %arg2[%c0_23, %c6] : memref<4x36xf32, #tpu.memory_space<vmem>>, vector<4x1xf32>
    %58 = vector.extract_strided_slice %44 {offsets = [2, 0], sizes = [1, 256], strides = [1, 1]} : vector<4x256xf32> to vector<1x256xf32>
    %59 = vector.broadcast %57 : vector<4x1xf32> to vector<4x256xf32>
    %60 = vector.broadcast %58 : vector<1x256xf32> to vector<4x256xf32>
    %61 = arith.mulf %59, %60 : vector<4x256xf32>
    %62 = arith.addf %50, %61 : vector<4x256xf32>
    %c0_24 = arith.constant 0 : index
    %c7 = arith.constant 7 : index
    %63 = vector.load %arg2[%c0_24, %c7] : memref<4x36xf32, #tpu.memory_space<vmem>>, vector<4x1xf32>
    %64 = vector.extract_strided_slice %44 {offsets = [3, 0], sizes = [1, 256], strides = [1, 1]} : vector<4x256xf32> to vector<1x256xf32>
    %65 = vector.broadcast %63 : vector<4x1xf32> to vector<4x256xf32>
    %66 = vector.broadcast %64 : vector<1x256xf32> to vector<4x256xf32>
    %67 = arith.mulf %65, %66 : vector<4x256xf32>
    %68 = arith.addf %56, %67 : vector<4x256xf32>
    %c0_25 = arith.constant 0 : index
    %c113 = arith.constant 113 : index
    %69 = vector.load %arg8[%c0_25, %c113] : memref<8x512xf32, #tpu.memory_space<vmem>>, vector<4x256xf32>
    %70 = arith.mulf %69, %13 : vector<4x256xf32>
    %c0_26 = arith.constant 0 : index
    %c8 = arith.constant 8 : index
    %71 = vector.load %arg2[%c0_26, %c8] : memref<4x36xf32, #tpu.memory_space<vmem>>, vector<4x1xf32>
    %72 = vector.extract_strided_slice %70 {offsets = [0, 0], sizes = [1, 256], strides = [1, 1]} : vector<4x256xf32> to vector<1x256xf32>
    %73 = vector.broadcast %71 : vector<4x1xf32> to vector<4x256xf32>
    %74 = vector.broadcast %72 : vector<1x256xf32> to vector<4x256xf32>
    %75 = arith.mulf %73, %74 : vector<4x256xf32>
    %76 = arith.addf %62, %75 : vector<4x256xf32>
    %c0_27 = arith.constant 0 : index
    %c9 = arith.constant 9 : index
    %77 = vector.load %arg2[%c0_27, %c9] : memref<4x36xf32, #tpu.memory_space<vmem>>, vector<4x1xf32>
    %78 = vector.extract_strided_slice %70 {offsets = [1, 0], sizes = [1, 256], strides = [1, 1]} : vector<4x256xf32> to vector<1x256xf32>
    %79 = vector.broadcast %77 : vector<4x1xf32> to vector<4x256xf32>
    %80 = vector.broadcast %78 : vector<1x256xf32> to vector<4x256xf32>
    %81 = arith.mulf %79, %80 : vector<4x256xf32>
    %82 = arith.addf %68, %81 : vector<4x256xf32>
    %c0_28 = arith.constant 0 : index
    %c10 = arith.constant 10 : index
    %83 = vector.load %arg2[%c0_28, %c10] : memref<4x36xf32, #tpu.memory_space<vmem>>, vector<4x1xf32>
    %84 = vector.extract_strided_slice %70 {offsets = [2, 0], sizes = [1, 256], strides = [1, 1]} : vector<4x256xf32> to vector<1x256xf32>
    %85 = vector.broadcast %83 : vector<4x1xf32> to vector<4x256xf32>
    %86 = vector.broadcast %84 : vector<1x256xf32> to vector<4x256xf32>
    %87 = arith.mulf %85, %86 : vector<4x256xf32>
    %88 = arith.addf %76, %87 : vector<4x256xf32>
    %c0_29 = arith.constant 0 : index
    %c11 = arith.constant 11 : index
    %89 = vector.load %arg2[%c0_29, %c11] : memref<4x36xf32, #tpu.memory_space<vmem>>, vector<4x1xf32>
    %90 = vector.extract_strided_slice %70 {offsets = [3, 0], sizes = [1, 256], strides = [1, 1]} : vector<4x256xf32> to vector<1x256xf32>
    %91 = vector.broadcast %89 : vector<4x1xf32> to vector<4x256xf32>
    %92 = vector.broadcast %90 : vector<1x256xf32> to vector<4x256xf32>
    %93 = arith.mulf %91, %92 : vector<4x256xf32>
    %94 = arith.addf %82, %93 : vector<4x256xf32>
    %c0_30 = arith.constant 0 : index
    %c127 = arith.constant 127 : index
    %95 = vector.load %arg8[%c0_30, %c127] : memref<8x512xf32, #tpu.memory_space<vmem>>, vector<4x256xf32>
    %96 = arith.mulf %95, %10 : vector<4x256xf32>
    %c0_31 = arith.constant 0 : index
    %c12 = arith.constant 12 : index
    %97 = vector.load %arg2[%c0_31, %c12] : memref<4x36xf32, #tpu.memory_space<vmem>>, vector<4x1xf32>
    %98 = vector.extract_strided_slice %96 {offsets = [0, 0], sizes = [1, 256], strides = [1, 1]} : vector<4x256xf32> to vector<1x256xf32>
    %99 = vector.broadcast %97 : vector<4x1xf32> to vector<4x256xf32>
    %100 = vector.broadcast %98 : vector<1x256xf32> to vector<4x256xf32>
    %101 = arith.mulf %99, %100 : vector<4x256xf32>
    %102 = arith.addf %88, %101 : vector<4x256xf32>
    %c0_32 = arith.constant 0 : index
    %c13 = arith.constant 13 : index
    %103 = vector.load %arg2[%c0_32, %c13] : memref<4x36xf32, #tpu.memory_space<vmem>>, vector<4x1xf32>
    %104 = vector.extract_strided_slice %96 {offsets = [1, 0], sizes = [1, 256], strides = [1, 1]} : vector<4x256xf32> to vector<1x256xf32>
    %105 = vector.broadcast %103 : vector<4x1xf32> to vector<4x256xf32>
    %106 = vector.broadcast %104 : vector<1x256xf32> to vector<4x256xf32>
    %107 = arith.mulf %105, %106 : vector<4x256xf32>
    %108 = arith.addf %94, %107 : vector<4x256xf32>
    %c0_33 = arith.constant 0 : index
    %c14 = arith.constant 14 : index
    %109 = vector.load %arg2[%c0_33, %c14] : memref<4x36xf32, #tpu.memory_space<vmem>>, vector<4x1xf32>
    %110 = vector.extract_strided_slice %96 {offsets = [2, 0], sizes = [1, 256], strides = [1, 1]} : vector<4x256xf32> to vector<1x256xf32>
    %111 = vector.broadcast %109 : vector<4x1xf32> to vector<4x256xf32>
    %112 = vector.broadcast %110 : vector<1x256xf32> to vector<4x256xf32>
    %113 = arith.mulf %111, %112 : vector<4x256xf32>
    %114 = arith.addf %102, %113 : vector<4x256xf32>
    %c0_34 = arith.constant 0 : index
    %c15 = arith.constant 15 : index
    %115 = vector.load %arg2[%c0_34, %c15] : memref<4x36xf32, #tpu.memory_space<vmem>>, vector<4x1xf32>
    %116 = vector.extract_strided_slice %96 {offsets = [3, 0], sizes = [1, 256], strides = [1, 1]} : vector<4x256xf32> to vector<1x256xf32>
    %117 = vector.broadcast %115 : vector<4x1xf32> to vector<4x256xf32>
    %118 = vector.broadcast %116 : vector<1x256xf32> to vector<4x256xf32>
    %119 = arith.mulf %117, %118 : vector<4x256xf32>
    %120 = arith.addf %108, %119 : vector<4x256xf32>
    %c0_35 = arith.constant 0 : index
    %c128_36 = arith.constant 128 : index
    %121 = vector.load %arg8[%c0_35, %c128_36] : memref<8x512xf32, #tpu.memory_space<vmem>>, vector<4x256xf32>
    %c0_37 = arith.constant 0 : index
    %c16 = arith.constant 16 : index
    %122 = vector.load %arg2[%c0_37, %c16] : memref<4x36xf32, #tpu.memory_space<vmem>>, vector<4x1xf32>
    %123 = vector.extract_strided_slice %121 {offsets = [0, 0], sizes = [1, 256], strides = [1, 1]} : vector<4x256xf32> to vector<1x256xf32>
    %124 = vector.broadcast %122 : vector<4x1xf32> to vector<4x256xf32>
    %125 = vector.broadcast %123 : vector<1x256xf32> to vector<4x256xf32>
    %126 = arith.mulf %124, %125 : vector<4x256xf32>
    %127 = arith.addf %114, %126 : vector<4x256xf32>
    %c0_38 = arith.constant 0 : index
    %c17 = arith.constant 17 : index
    %128 = vector.load %arg2[%c0_38, %c17] : memref<4x36xf32, #tpu.memory_space<vmem>>, vector<4x1xf32>
    %129 = vector.extract_strided_slice %121 {offsets = [1, 0], sizes = [1, 256], strides = [1, 1]} : vector<4x256xf32> to vector<1x256xf32>
    %130 = vector.broadcast %128 : vector<4x1xf32> to vector<4x256xf32>
    %131 = vector.broadcast %129 : vector<1x256xf32> to vector<4x256xf32>
    %132 = arith.mulf %130, %131 : vector<4x256xf32>
    %133 = arith.addf %120, %132 : vector<4x256xf32>
    %c0_39 = arith.constant 0 : index
    %c18 = arith.constant 18 : index
    %134 = vector.load %arg2[%c0_39, %c18] : memref<4x36xf32, #tpu.memory_space<vmem>>, vector<4x1xf32>
    %135 = vector.extract_strided_slice %121 {offsets = [2, 0], sizes = [1, 256], strides = [1, 1]} : vector<4x256xf32> to vector<1x256xf32>
    %136 = vector.broadcast %134 : vector<4x1xf32> to vector<4x256xf32>
    %137 = vector.broadcast %135 : vector<1x256xf32> to vector<4x256xf32>
    %138 = arith.mulf %136, %137 : vector<4x256xf32>
    %139 = arith.addf %127, %138 : vector<4x256xf32>
    %c0_40 = arith.constant 0 : index
    %c19 = arith.constant 19 : index
    %140 = vector.load %arg2[%c0_40, %c19] : memref<4x36xf32, #tpu.memory_space<vmem>>, vector<4x1xf32>
    %141 = vector.extract_strided_slice %121 {offsets = [3, 0], sizes = [1, 256], strides = [1, 1]} : vector<4x256xf32> to vector<1x256xf32>
    %142 = vector.broadcast %140 : vector<4x1xf32> to vector<4x256xf32>
    %143 = vector.broadcast %141 : vector<1x256xf32> to vector<4x256xf32>
    %144 = arith.mulf %142, %143 : vector<4x256xf32>
    %145 = arith.addf %133, %144 : vector<4x256xf32>
    %c0_41 = arith.constant 0 : index
    %c129 = arith.constant 129 : index
    %146 = vector.load %arg8[%c0_41, %c129] : memref<8x512xf32, #tpu.memory_space<vmem>>, vector<4x256xf32>
    %147 = arith.mulf %146, %13 : vector<4x256xf32>
    %c0_42 = arith.constant 0 : index
    %c20 = arith.constant 20 : index
    %148 = vector.load %arg2[%c0_42, %c20] : memref<4x36xf32, #tpu.memory_space<vmem>>, vector<4x1xf32>
    %149 = vector.extract_strided_slice %147 {offsets = [0, 0], sizes = [1, 256], strides = [1, 1]} : vector<4x256xf32> to vector<1x256xf32>
    %150 = vector.broadcast %148 : vector<4x1xf32> to vector<4x256xf32>
    %151 = vector.broadcast %149 : vector<1x256xf32> to vector<4x256xf32>
    %152 = arith.mulf %150, %151 : vector<4x256xf32>
    %153 = arith.addf %139, %152 : vector<4x256xf32>
    %c0_43 = arith.constant 0 : index
    %c21 = arith.constant 21 : index
    %154 = vector.load %arg2[%c0_43, %c21] : memref<4x36xf32, #tpu.memory_space<vmem>>, vector<4x1xf32>
    %155 = vector.extract_strided_slice %147 {offsets = [1, 0], sizes = [1, 256], strides = [1, 1]} : vector<4x256xf32> to vector<1x256xf32>
    %156 = vector.broadcast %154 : vector<4x1xf32> to vector<4x256xf32>
    %157 = vector.broadcast %155 : vector<1x256xf32> to vector<4x256xf32>
    %158 = arith.mulf %156, %157 : vector<4x256xf32>
    %159 = arith.addf %145, %158 : vector<4x256xf32>
    %c0_44 = arith.constant 0 : index
    %c22 = arith.constant 22 : index
    %160 = vector.load %arg2[%c0_44, %c22] : memref<4x36xf32, #tpu.memory_space<vmem>>, vector<4x1xf32>
    %161 = vector.extract_strided_slice %147 {offsets = [2, 0], sizes = [1, 256], strides = [1, 1]} : vector<4x256xf32> to vector<1x256xf32>
    %162 = vector.broadcast %160 : vector<4x1xf32> to vector<4x256xf32>
    %163 = vector.broadcast %161 : vector<1x256xf32> to vector<4x256xf32>
    %164 = arith.mulf %162, %163 : vector<4x256xf32>
    %165 = arith.addf %153, %164 : vector<4x256xf32>
    %c0_45 = arith.constant 0 : index
    %c23 = arith.constant 23 : index
    %166 = vector.load %arg2[%c0_45, %c23] : memref<4x36xf32, #tpu.memory_space<vmem>>, vector<4x1xf32>
    %167 = vector.extract_strided_slice %147 {offsets = [3, 0], sizes = [1, 256], strides = [1, 1]} : vector<4x256xf32> to vector<1x256xf32>
    %168 = vector.broadcast %166 : vector<4x1xf32> to vector<4x256xf32>
    %169 = vector.broadcast %167 : vector<1x256xf32> to vector<4x256xf32>
    %170 = arith.mulf %168, %169 : vector<4x256xf32>
    %171 = arith.addf %159, %170 : vector<4x256xf32>
    %c0_46 = arith.constant 0 : index
    %c143 = arith.constant 143 : index
    %172 = vector.load %arg8[%c0_46, %c143] : memref<8x512xf32, #tpu.memory_space<vmem>>, vector<4x256xf32>
    %173 = arith.mulf %172, %10 : vector<4x256xf32>
    %c0_47 = arith.constant 0 : index
    %c24 = arith.constant 24 : index
    %174 = vector.load %arg2[%c0_47, %c24] : memref<4x36xf32, #tpu.memory_space<vmem>>, vector<4x1xf32>
    %175 = vector.extract_strided_slice %173 {offsets = [0, 0], sizes = [1, 256], strides = [1, 1]} : vector<4x256xf32> to vector<1x256xf32>
    %176 = vector.broadcast %174 : vector<4x1xf32> to vector<4x256xf32>
    %177 = vector.broadcast %175 : vector<1x256xf32> to vector<4x256xf32>
    %178 = arith.mulf %176, %177 : vector<4x256xf32>
    %179 = arith.addf %165, %178 : vector<4x256xf32>
    %c0_48 = arith.constant 0 : index
    %c25 = arith.constant 25 : index
    %180 = vector.load %arg2[%c0_48, %c25] : memref<4x36xf32, #tpu.memory_space<vmem>>, vector<4x1xf32>
    %181 = vector.extract_strided_slice %173 {offsets = [1, 0], sizes = [1, 256], strides = [1, 1]} : vector<4x256xf32> to vector<1x256xf32>
    %182 = vector.broadcast %180 : vector<4x1xf32> to vector<4x256xf32>
    %183 = vector.broadcast %181 : vector<1x256xf32> to vector<4x256xf32>
    %184 = arith.mulf %182, %183 : vector<4x256xf32>
    %185 = arith.addf %171, %184 : vector<4x256xf32>
    %c0_49 = arith.constant 0 : index
    %c26 = arith.constant 26 : index
    %186 = vector.load %arg2[%c0_49, %c26] : memref<4x36xf32, #tpu.memory_space<vmem>>, vector<4x1xf32>
    %187 = vector.extract_strided_slice %173 {offsets = [2, 0], sizes = [1, 256], strides = [1, 1]} : vector<4x256xf32> to vector<1x256xf32>
    %188 = vector.broadcast %186 : vector<4x1xf32> to vector<4x256xf32>
    %189 = vector.broadcast %187 : vector<1x256xf32> to vector<4x256xf32>
    %190 = arith.mulf %188, %189 : vector<4x256xf32>
    %191 = arith.addf %179, %190 : vector<4x256xf32>
    %c0_50 = arith.constant 0 : index
    %c27 = arith.constant 27 : index
    %192 = vector.load %arg2[%c0_50, %c27] : memref<4x36xf32, #tpu.memory_space<vmem>>, vector<4x1xf32>
    %193 = vector.extract_strided_slice %173 {offsets = [3, 0], sizes = [1, 256], strides = [1, 1]} : vector<4x256xf32> to vector<1x256xf32>
    %194 = vector.broadcast %192 : vector<4x1xf32> to vector<4x256xf32>
    %195 = vector.broadcast %193 : vector<1x256xf32> to vector<4x256xf32>
    %196 = arith.mulf %194, %195 : vector<4x256xf32>
    %197 = arith.addf %185, %196 : vector<4x256xf32>
    %c0_51 = arith.constant 0 : index
    %c144 = arith.constant 144 : index
    %198 = vector.load %arg8[%c0_51, %c144] : memref<8x512xf32, #tpu.memory_space<vmem>>, vector<4x256xf32>
    %c0_52 = arith.constant 0 : index
    %c28 = arith.constant 28 : index
    %199 = vector.load %arg2[%c0_52, %c28] : memref<4x36xf32, #tpu.memory_space<vmem>>, vector<4x1xf32>
    %200 = vector.extract_strided_slice %198 {offsets = [0, 0], sizes = [1, 256], strides = [1, 1]} : vector<4x256xf32> to vector<1x256xf32>
    %201 = vector.broadcast %199 : vector<4x1xf32> to vector<4x256xf32>
    %202 = vector.broadcast %200 : vector<1x256xf32> to vector<4x256xf32>
    %203 = arith.mulf %201, %202 : vector<4x256xf32>
    %204 = arith.addf %191, %203 : vector<4x256xf32>
    %c0_53 = arith.constant 0 : index
    %c29 = arith.constant 29 : index
    %205 = vector.load %arg2[%c0_53, %c29] : memref<4x36xf32, #tpu.memory_space<vmem>>, vector<4x1xf32>
    %206 = vector.extract_strided_slice %198 {offsets = [1, 0], sizes = [1, 256], strides = [1, 1]} : vector<4x256xf32> to vector<1x256xf32>
    %207 = vector.broadcast %205 : vector<4x1xf32> to vector<4x256xf32>
    %208 = vector.broadcast %206 : vector<1x256xf32> to vector<4x256xf32>
    %209 = arith.mulf %207, %208 : vector<4x256xf32>
    %210 = arith.addf %197, %209 : vector<4x256xf32>
    %c0_54 = arith.constant 0 : index
    %c30 = arith.constant 30 : index
    %211 = vector.load %arg2[%c0_54, %c30] : memref<4x36xf32, #tpu.memory_space<vmem>>, vector<4x1xf32>
    %212 = vector.extract_strided_slice %198 {offsets = [2, 0], sizes = [1, 256], strides = [1, 1]} : vector<4x256xf32> to vector<1x256xf32>
    %213 = vector.broadcast %211 : vector<4x1xf32> to vector<4x256xf32>
    %214 = vector.broadcast %212 : vector<1x256xf32> to vector<4x256xf32>
    %215 = arith.mulf %213, %214 : vector<4x256xf32>
    %216 = arith.addf %204, %215 : vector<4x256xf32>
    %c0_55 = arith.constant 0 : index
    %c31 = arith.constant 31 : index
    %217 = vector.load %arg2[%c0_55, %c31] : memref<4x36xf32, #tpu.memory_space<vmem>>, vector<4x1xf32>
    %218 = vector.extract_strided_slice %198 {offsets = [3, 0], sizes = [1, 256], strides = [1, 1]} : vector<4x256xf32> to vector<1x256xf32>
    %219 = vector.broadcast %217 : vector<4x1xf32> to vector<4x256xf32>
    %220 = vector.broadcast %218 : vector<1x256xf32> to vector<4x256xf32>
    %221 = arith.mulf %219, %220 : vector<4x256xf32>
    %222 = arith.addf %210, %221 : vector<4x256xf32>
    %c0_56 = arith.constant 0 : index
    %c145 = arith.constant 145 : index
    %223 = vector.load %arg8[%c0_56, %c145] : memref<8x512xf32, #tpu.memory_space<vmem>>, vector<4x256xf32>
    %224 = arith.mulf %223, %13 : vector<4x256xf32>
    %c0_57 = arith.constant 0 : index
    %c32 = arith.constant 32 : index
    %225 = vector.load %arg2[%c0_57, %c32] : memref<4x36xf32, #tpu.memory_space<vmem>>, vector<4x1xf32>
    %226 = vector.extract_strided_slice %224 {offsets = [0, 0], sizes = [1, 256], strides = [1, 1]} : vector<4x256xf32> to vector<1x256xf32>
    %227 = vector.broadcast %225 : vector<4x1xf32> to vector<4x256xf32>
    %228 = vector.broadcast %226 : vector<1x256xf32> to vector<4x256xf32>
    %229 = arith.mulf %227, %228 : vector<4x256xf32>
    %230 = arith.addf %216, %229 : vector<4x256xf32>
    %c0_58 = arith.constant 0 : index
    %c33 = arith.constant 33 : index
    %231 = vector.load %arg2[%c0_58, %c33] : memref<4x36xf32, #tpu.memory_space<vmem>>, vector<4x1xf32>
    %232 = vector.extract_strided_slice %224 {offsets = [1, 0], sizes = [1, 256], strides = [1, 1]} : vector<4x256xf32> to vector<1x256xf32>
    %233 = vector.broadcast %231 : vector<4x1xf32> to vector<4x256xf32>
    %234 = vector.broadcast %232 : vector<1x256xf32> to vector<4x256xf32>
    %235 = arith.mulf %233, %234 : vector<4x256xf32>
    %236 = arith.addf %222, %235 : vector<4x256xf32>
    %c0_59 = arith.constant 0 : index
    %c34 = arith.constant 34 : index
    %237 = vector.load %arg2[%c0_59, %c34] : memref<4x36xf32, #tpu.memory_space<vmem>>, vector<4x1xf32>
    %238 = vector.extract_strided_slice %224 {offsets = [2, 0], sizes = [1, 256], strides = [1, 1]} : vector<4x256xf32> to vector<1x256xf32>
    %239 = vector.broadcast %237 : vector<4x1xf32> to vector<4x256xf32>
    %240 = vector.broadcast %238 : vector<1x256xf32> to vector<4x256xf32>
    %241 = arith.mulf %239, %240 : vector<4x256xf32>
    %242 = arith.addf %230, %241 : vector<4x256xf32>
    %c0_60 = arith.constant 0 : index
    %c35 = arith.constant 35 : index
    %243 = vector.load %arg2[%c0_60, %c35] : memref<4x36xf32, #tpu.memory_space<vmem>>, vector<4x1xf32>
    %244 = vector.extract_strided_slice %224 {offsets = [3, 0], sizes = [1, 256], strides = [1, 1]} : vector<4x256xf32> to vector<1x256xf32>
    %245 = vector.broadcast %243 : vector<4x1xf32> to vector<4x256xf32>
    %246 = vector.broadcast %244 : vector<1x256xf32> to vector<4x256xf32>
    %247 = arith.mulf %245, %246 : vector<4x256xf32>
    %248 = arith.addf %236, %247 : vector<4x256xf32>
    %249 = arith.addf %242, %248 : vector<4x256xf32>
    %c0_61 = arith.constant 0 : index
    %c0_62 = arith.constant 0 : index
    %250 = vector.load %arg3[%c0_61, %c0_62] : memref<4x1xf32, #tpu.memory_space<vmem>>, vector<4x1xf32>
    %251 = vector.shape_cast %250 : vector<4x1xf32> to vector<4x1xf32>
    %252 = vector.broadcast %251 : vector<4x1xf32> to vector<4x256xf32>
    %cst_63 = arith.constant 0.000000e+00 : f32
    %253 = vector.broadcast %cst_63 : f32 to vector<4x256xf32>
    %c4_64 = arith.constant 4 : index
    %c111_65 = arith.constant 111 : index
    %254 = vector.load %arg8[%c4_64, %c111_65] : memref<8x512xf32, #tpu.memory_space<vmem>>, vector<4x256xf32>
    %255 = arith.mulf %254, %10 : vector<4x256xf32>
    %c0_66 = arith.constant 0 : index
    %c0_67 = arith.constant 0 : index
    %256 = vector.load %arg2[%c0_66, %c0_67] : memref<4x36xf32, #tpu.memory_space<vmem>>, vector<4x1xf32>
    %257 = vector.extract_strided_slice %255 {offsets = [0, 0], sizes = [1, 256], strides = [1, 1]} : vector<4x256xf32> to vector<1x256xf32>
    %258 = vector.broadcast %256 : vector<4x1xf32> to vector<4x256xf32>
    %259 = vector.broadcast %257 : vector<1x256xf32> to vector<4x256xf32>
    %260 = arith.mulf %258, %259 : vector<4x256xf32>
    %261 = arith.addf %252, %260 : vector<4x256xf32>
    %c0_68 = arith.constant 0 : index
    %c1_69 = arith.constant 1 : index
    %262 = vector.load %arg2[%c0_68, %c1_69] : memref<4x36xf32, #tpu.memory_space<vmem>>, vector<4x1xf32>
    %263 = vector.extract_strided_slice %255 {offsets = [1, 0], sizes = [1, 256], strides = [1, 1]} : vector<4x256xf32> to vector<1x256xf32>
    %264 = vector.broadcast %262 : vector<4x1xf32> to vector<4x256xf32>
    %265 = vector.broadcast %263 : vector<1x256xf32> to vector<4x256xf32>
    %266 = arith.mulf %264, %265 : vector<4x256xf32>
    %267 = arith.addf %253, %266 : vector<4x256xf32>
    %c0_70 = arith.constant 0 : index
    %c2_71 = arith.constant 2 : index
    %268 = vector.load %arg2[%c0_70, %c2_71] : memref<4x36xf32, #tpu.memory_space<vmem>>, vector<4x1xf32>
    %269 = vector.extract_strided_slice %255 {offsets = [2, 0], sizes = [1, 256], strides = [1, 1]} : vector<4x256xf32> to vector<1x256xf32>
    %270 = vector.broadcast %268 : vector<4x1xf32> to vector<4x256xf32>
    %271 = vector.broadcast %269 : vector<1x256xf32> to vector<4x256xf32>
    %272 = arith.mulf %270, %271 : vector<4x256xf32>
    %273 = arith.addf %261, %272 : vector<4x256xf32>
    %c0_72 = arith.constant 0 : index
    %c3_73 = arith.constant 3 : index
    %274 = vector.load %arg2[%c0_72, %c3_73] : memref<4x36xf32, #tpu.memory_space<vmem>>, vector<4x1xf32>
    %275 = vector.extract_strided_slice %255 {offsets = [3, 0], sizes = [1, 256], strides = [1, 1]} : vector<4x256xf32> to vector<1x256xf32>
    %276 = vector.broadcast %274 : vector<4x1xf32> to vector<4x256xf32>
    %277 = vector.broadcast %275 : vector<1x256xf32> to vector<4x256xf32>
    %278 = arith.mulf %276, %277 : vector<4x256xf32>
    %279 = arith.addf %267, %278 : vector<4x256xf32>
    %c4_74 = arith.constant 4 : index
    %c112_75 = arith.constant 112 : index
    %280 = vector.load %arg8[%c4_74, %c112_75] : memref<8x512xf32, #tpu.memory_space<vmem>>, vector<4x256xf32>
    %c0_76 = arith.constant 0 : index
    %c4_77 = arith.constant 4 : index
    %281 = vector.load %arg2[%c0_76, %c4_77] : memref<4x36xf32, #tpu.memory_space<vmem>>, vector<4x1xf32>
    %282 = vector.extract_strided_slice %280 {offsets = [0, 0], sizes = [1, 256], strides = [1, 1]} : vector<4x256xf32> to vector<1x256xf32>
    %283 = vector.broadcast %281 : vector<4x1xf32> to vector<4x256xf32>
    %284 = vector.broadcast %282 : vector<1x256xf32> to vector<4x256xf32>
    %285 = arith.mulf %283, %284 : vector<4x256xf32>
    %286 = arith.addf %273, %285 : vector<4x256xf32>
    %c0_78 = arith.constant 0 : index
    %c5_79 = arith.constant 5 : index
    %287 = vector.load %arg2[%c0_78, %c5_79] : memref<4x36xf32, #tpu.memory_space<vmem>>, vector<4x1xf32>
    %288 = vector.extract_strided_slice %280 {offsets = [1, 0], sizes = [1, 256], strides = [1, 1]} : vector<4x256xf32> to vector<1x256xf32>
    %289 = vector.broadcast %287 : vector<4x1xf32> to vector<4x256xf32>
    %290 = vector.broadcast %288 : vector<1x256xf32> to vector<4x256xf32>
    %291 = arith.mulf %289, %290 : vector<4x256xf32>
    %292 = arith.addf %279, %291 : vector<4x256xf32>
    %c0_80 = arith.constant 0 : index
    %c6_81 = arith.constant 6 : index
    %293 = vector.load %arg2[%c0_80, %c6_81] : memref<4x36xf32, #tpu.memory_space<vmem>>, vector<4x1xf32>
    %294 = vector.extract_strided_slice %280 {offsets = [2, 0], sizes = [1, 256], strides = [1, 1]} : vector<4x256xf32> to vector<1x256xf32>
    %295 = vector.broadcast %293 : vector<4x1xf32> to vector<4x256xf32>
    %296 = vector.broadcast %294 : vector<1x256xf32> to vector<4x256xf32>
    %297 = arith.mulf %295, %296 : vector<4x256xf32>
    %298 = arith.addf %286, %297 : vector<4x256xf32>
    %c0_82 = arith.constant 0 : index
    %c7_83 = arith.constant 7 : index
    %299 = vector.load %arg2[%c0_82, %c7_83] : memref<4x36xf32, #tpu.memory_space<vmem>>, vector<4x1xf32>
    %300 = vector.extract_strided_slice %280 {offsets = [3, 0], sizes = [1, 256], strides = [1, 1]} : vector<4x256xf32> to vector<1x256xf32>
    %301 = vector.broadcast %299 : vector<4x1xf32> to vector<4x256xf32>
    %302 = vector.broadcast %300 : vector<1x256xf32> to vector<4x256xf32>
    %303 = arith.mulf %301, %302 : vector<4x256xf32>
    %304 = arith.addf %292, %303 : vector<4x256xf32>
    %c4_84 = arith.constant 4 : index
    %c113_85 = arith.constant 113 : index
    %305 = vector.load %arg8[%c4_84, %c113_85] : memref<8x512xf32, #tpu.memory_space<vmem>>, vector<4x256xf32>
    %306 = arith.mulf %305, %13 : vector<4x256xf32>
    %c0_86 = arith.constant 0 : index
    %c8_87 = arith.constant 8 : index
    %307 = vector.load %arg2[%c0_86, %c8_87] : memref<4x36xf32, #tpu.memory_space<vmem>>, vector<4x1xf32>
    %308 = vector.extract_strided_slice %306 {offsets = [0, 0], sizes = [1, 256], strides = [1, 1]} : vector<4x256xf32> to vector<1x256xf32>
    %309 = vector.broadcast %307 : vector<4x1xf32> to vector<4x256xf32>
    %310 = vector.broadcast %308 : vector<1x256xf32> to vector<4x256xf32>
    %311 = arith.mulf %309, %310 : vector<4x256xf32>
    %312 = arith.addf %298, %311 : vector<4x256xf32>
    %c0_88 = arith.constant 0 : index
    %c9_89 = arith.constant 9 : index
    %313 = vector.load %arg2[%c0_88, %c9_89] : memref<4x36xf32, #tpu.memory_space<vmem>>, vector<4x1xf32>
    %314 = vector.extract_strided_slice %306 {offsets = [1, 0], sizes = [1, 256], strides = [1, 1]} : vector<4x256xf32> to vector<1x256xf32>
    %315 = vector.broadcast %313 : vector<4x1xf32> to vector<4x256xf32>
    %316 = vector.broadcast %314 : vector<1x256xf32> to vector<4x256xf32>
    %317 = arith.mulf %315, %316 : vector<4x256xf32>
    %318 = arith.addf %304, %317 : vector<4x256xf32>
    %c0_90 = arith.constant 0 : index
    %c10_91 = arith.constant 10 : index
    %319 = vector.load %arg2[%c0_90, %c10_91] : memref<4x36xf32, #tpu.memory_space<vmem>>, vector<4x1xf32>
    %320 = vector.extract_strided_slice %306 {offsets = [2, 0], sizes = [1, 256], strides = [1, 1]} : vector<4x256xf32> to vector<1x256xf32>
    %321 = vector.broadcast %319 : vector<4x1xf32> to vector<4x256xf32>
    %322 = vector.broadcast %320 : vector<1x256xf32> to vector<4x256xf32>
    %323 = arith.mulf %321, %322 : vector<4x256xf32>
    %324 = arith.addf %312, %323 : vector<4x256xf32>
    %c0_92 = arith.constant 0 : index
    %c11_93 = arith.constant 11 : index
    %325 = vector.load %arg2[%c0_92, %c11_93] : memref<4x36xf32, #tpu.memory_space<vmem>>, vector<4x1xf32>
    %326 = vector.extract_strided_slice %306 {offsets = [3, 0], sizes = [1, 256], strides = [1, 1]} : vector<4x256xf32> to vector<1x256xf32>
    %327 = vector.broadcast %325 : vector<4x1xf32> to vector<4x256xf32>
    %328 = vector.broadcast %326 : vector<1x256xf32> to vector<4x256xf32>
    %329 = arith.mulf %327, %328 : vector<4x256xf32>
    %330 = arith.addf %318, %329 : vector<4x256xf32>
    %c4_94 = arith.constant 4 : index
    %c127_95 = arith.constant 127 : index
    %331 = vector.load %arg8[%c4_94, %c127_95] : memref<8x512xf32, #tpu.memory_space<vmem>>, vector<4x256xf32>
    %332 = arith.mulf %331, %10 : vector<4x256xf32>
    %c0_96 = arith.constant 0 : index
    %c12_97 = arith.constant 12 : index
    %333 = vector.load %arg2[%c0_96, %c12_97] : memref<4x36xf32, #tpu.memory_space<vmem>>, vector<4x1xf32>
    %334 = vector.extract_strided_slice %332 {offsets = [0, 0], sizes = [1, 256], strides = [1, 1]} : vector<4x256xf32> to vector<1x256xf32>
    %335 = vector.broadcast %333 : vector<4x1xf32> to vector<4x256xf32>
    %336 = vector.broadcast %334 : vector<1x256xf32> to vector<4x256xf32>
    %337 = arith.mulf %335, %336 : vector<4x256xf32>
    %338 = arith.addf %324, %337 : vector<4x256xf32>
    %c0_98 = arith.constant 0 : index
    %c13_99 = arith.constant 13 : index
    %339 = vector.load %arg2[%c0_98, %c13_99] : memref<4x36xf32, #tpu.memory_space<vmem>>, vector<4x1xf32>
    %340 = vector.extract_strided_slice %332 {offsets = [1, 0], sizes = [1, 256], strides = [1, 1]} : vector<4x256xf32> to vector<1x256xf32>
    %341 = vector.broadcast %339 : vector<4x1xf32> to vector<4x256xf32>
    %342 = vector.broadcast %340 : vector<1x256xf32> to vector<4x256xf32>
    %343 = arith.mulf %341, %342 : vector<4x256xf32>
    %344 = arith.addf %330, %343 : vector<4x256xf32>
    %c0_100 = arith.constant 0 : index
    %c14_101 = arith.constant 14 : index
    %345 = vector.load %arg2[%c0_100, %c14_101] : memref<4x36xf32, #tpu.memory_space<vmem>>, vector<4x1xf32>
    %346 = vector.extract_strided_slice %332 {offsets = [2, 0], sizes = [1, 256], strides = [1, 1]} : vector<4x256xf32> to vector<1x256xf32>
    %347 = vector.broadcast %345 : vector<4x1xf32> to vector<4x256xf32>
    %348 = vector.broadcast %346 : vector<1x256xf32> to vector<4x256xf32>
    %349 = arith.mulf %347, %348 : vector<4x256xf32>
    %350 = arith.addf %338, %349 : vector<4x256xf32>
    %c0_102 = arith.constant 0 : index
    %c15_103 = arith.constant 15 : index
    %351 = vector.load %arg2[%c0_102, %c15_103] : memref<4x36xf32, #tpu.memory_space<vmem>>, vector<4x1xf32>
    %352 = vector.extract_strided_slice %332 {offsets = [3, 0], sizes = [1, 256], strides = [1, 1]} : vector<4x256xf32> to vector<1x256xf32>
    %353 = vector.broadcast %351 : vector<4x1xf32> to vector<4x256xf32>
    %354 = vector.broadcast %352 : vector<1x256xf32> to vector<4x256xf32>
    %355 = arith.mulf %353, %354 : vector<4x256xf32>
    %356 = arith.addf %344, %355 : vector<4x256xf32>
    %c4_104 = arith.constant 4 : index
    %c128_105 = arith.constant 128 : index
    %357 = vector.load %arg8[%c4_104, %c128_105] : memref<8x512xf32, #tpu.memory_space<vmem>>, vector<4x256xf32>
    %c0_106 = arith.constant 0 : index
    %c16_107 = arith.constant 16 : index
    %358 = vector.load %arg2[%c0_106, %c16_107] : memref<4x36xf32, #tpu.memory_space<vmem>>, vector<4x1xf32>
    %359 = vector.extract_strided_slice %357 {offsets = [0, 0], sizes = [1, 256], strides = [1, 1]} : vector<4x256xf32> to vector<1x256xf32>
    %360 = vector.broadcast %358 : vector<4x1xf32> to vector<4x256xf32>
    %361 = vector.broadcast %359 : vector<1x256xf32> to vector<4x256xf32>
    %362 = arith.mulf %360, %361 : vector<4x256xf32>
    %363 = arith.addf %350, %362 : vector<4x256xf32>
    %c0_108 = arith.constant 0 : index
    %c17_109 = arith.constant 17 : index
    %364 = vector.load %arg2[%c0_108, %c17_109] : memref<4x36xf32, #tpu.memory_space<vmem>>, vector<4x1xf32>
    %365 = vector.extract_strided_slice %357 {offsets = [1, 0], sizes = [1, 256], strides = [1, 1]} : vector<4x256xf32> to vector<1x256xf32>
    %366 = vector.broadcast %364 : vector<4x1xf32> to vector<4x256xf32>
    %367 = vector.broadcast %365 : vector<1x256xf32> to vector<4x256xf32>
    %368 = arith.mulf %366, %367 : vector<4x256xf32>
    %369 = arith.addf %356, %368 : vector<4x256xf32>
    %c0_110 = arith.constant 0 : index
    %c18_111 = arith.constant 18 : index
    %370 = vector.load %arg2[%c0_110, %c18_111] : memref<4x36xf32, #tpu.memory_space<vmem>>, vector<4x1xf32>
    %371 = vector.extract_strided_slice %357 {offsets = [2, 0], sizes = [1, 256], strides = [1, 1]} : vector<4x256xf32> to vector<1x256xf32>
    %372 = vector.broadcast %370 : vector<4x1xf32> to vector<4x256xf32>
    %373 = vector.broadcast %371 : vector<1x256xf32> to vector<4x256xf32>
    %374 = arith.mulf %372, %373 : vector<4x256xf32>
    %375 = arith.addf %363, %374 : vector<4x256xf32>
    %c0_112 = arith.constant 0 : index
    %c19_113 = arith.constant 19 : index
    %376 = vector.load %arg2[%c0_112, %c19_113] : memref<4x36xf32, #tpu.memory_space<vmem>>, vector<4x1xf32>
    %377 = vector.extract_strided_slice %357 {offsets = [3, 0], sizes = [1, 256], strides = [1, 1]} : vector<4x256xf32> to vector<1x256xf32>
    %378 = vector.broadcast %376 : vector<4x1xf32> to vector<4x256xf32>
    %379 = vector.broadcast %377 : vector<1x256xf32> to vector<4x256xf32>
    %380 = arith.mulf %378, %379 : vector<4x256xf32>
    %381 = arith.addf %369, %380 : vector<4x256xf32>
    %c4_114 = arith.constant 4 : index
    %c129_115 = arith.constant 129 : index
    %382 = vector.load %arg8[%c4_114, %c129_115] : memref<8x512xf32, #tpu.memory_space<vmem>>, vector<4x256xf32>
    %383 = arith.mulf %382, %13 : vector<4x256xf32>
    %c0_116 = arith.constant 0 : index
    %c20_117 = arith.constant 20 : index
    %384 = vector.load %arg2[%c0_116, %c20_117] : memref<4x36xf32, #tpu.memory_space<vmem>>, vector<4x1xf32>
    %385 = vector.extract_strided_slice %383 {offsets = [0, 0], sizes = [1, 256], strides = [1, 1]} : vector<4x256xf32> to vector<1x256xf32>
    %386 = vector.broadcast %384 : vector<4x1xf32> to vector<4x256xf32>
    %387 = vector.broadcast %385 : vector<1x256xf32> to vector<4x256xf32>
    %388 = arith.mulf %386, %387 : vector<4x256xf32>
    %389 = arith.addf %375, %388 : vector<4x256xf32>
    %c0_118 = arith.constant 0 : index
    %c21_119 = arith.constant 21 : index
    %390 = vector.load %arg2[%c0_118, %c21_119] : memref<4x36xf32, #tpu.memory_space<vmem>>, vector<4x1xf32>
    %391 = vector.extract_strided_slice %383 {offsets = [1, 0], sizes = [1, 256], strides = [1, 1]} : vector<4x256xf32> to vector<1x256xf32>
    %392 = vector.broadcast %390 : vector<4x1xf32> to vector<4x256xf32>
    %393 = vector.broadcast %391 : vector<1x256xf32> to vector<4x256xf32>
    %394 = arith.mulf %392, %393 : vector<4x256xf32>
    %395 = arith.addf %381, %394 : vector<4x256xf32>
    %c0_120 = arith.constant 0 : index
    %c22_121 = arith.constant 22 : index
    %396 = vector.load %arg2[%c0_120, %c22_121] : memref<4x36xf32, #tpu.memory_space<vmem>>, vector<4x1xf32>
    %397 = vector.extract_strided_slice %383 {offsets = [2, 0], sizes = [1, 256], strides = [1, 1]} : vector<4x256xf32> to vector<1x256xf32>
    %398 = vector.broadcast %396 : vector<4x1xf32> to vector<4x256xf32>
    %399 = vector.broadcast %397 : vector<1x256xf32> to vector<4x256xf32>
    %400 = arith.mulf %398, %399 : vector<4x256xf32>
    %401 = arith.addf %389, %400 : vector<4x256xf32>
    %c0_122 = arith.constant 0 : index
    %c23_123 = arith.constant 23 : index
    %402 = vector.load %arg2[%c0_122, %c23_123] : memref<4x36xf32, #tpu.memory_space<vmem>>, vector<4x1xf32>
    %403 = vector.extract_strided_slice %383 {offsets = [3, 0], sizes = [1, 256], strides = [1, 1]} : vector<4x256xf32> to vector<1x256xf32>
    %404 = vector.broadcast %402 : vector<4x1xf32> to vector<4x256xf32>
    %405 = vector.broadcast %403 : vector<1x256xf32> to vector<4x256xf32>
    %406 = arith.mulf %404, %405 : vector<4x256xf32>
    %407 = arith.addf %395, %406 : vector<4x256xf32>
    %c4_124 = arith.constant 4 : index
    %c143_125 = arith.constant 143 : index
    %408 = vector.load %arg8[%c4_124, %c143_125] : memref<8x512xf32, #tpu.memory_space<vmem>>, vector<4x256xf32>
    %409 = arith.mulf %408, %10 : vector<4x256xf32>
    %c0_126 = arith.constant 0 : index
    %c24_127 = arith.constant 24 : index
    %410 = vector.load %arg2[%c0_126, %c24_127] : memref<4x36xf32, #tpu.memory_space<vmem>>, vector<4x1xf32>
    %411 = vector.extract_strided_slice %409 {offsets = [0, 0], sizes = [1, 256], strides = [1, 1]} : vector<4x256xf32> to vector<1x256xf32>
    %412 = vector.broadcast %410 : vector<4x1xf32> to vector<4x256xf32>
    %413 = vector.broadcast %411 : vector<1x256xf32> to vector<4x256xf32>
    %414 = arith.mulf %412, %413 : vector<4x256xf32>
    %415 = arith.addf %401, %414 : vector<4x256xf32>
    %c0_128 = arith.constant 0 : index
    %c25_129 = arith.constant 25 : index
    %416 = vector.load %arg2[%c0_128, %c25_129] : memref<4x36xf32, #tpu.memory_space<vmem>>, vector<4x1xf32>
    %417 = vector.extract_strided_slice %409 {offsets = [1, 0], sizes = [1, 256], strides = [1, 1]} : vector<4x256xf32> to vector<1x256xf32>
    %418 = vector.broadcast %416 : vector<4x1xf32> to vector<4x256xf32>
    %419 = vector.broadcast %417 : vector<1x256xf32> to vector<4x256xf32>
    %420 = arith.mulf %418, %419 : vector<4x256xf32>
    %421 = arith.addf %407, %420 : vector<4x256xf32>
    %c0_130 = arith.constant 0 : index
    %c26_131 = arith.constant 26 : index
    %422 = vector.load %arg2[%c0_130, %c26_131] : memref<4x36xf32, #tpu.memory_space<vmem>>, vector<4x1xf32>
    %423 = vector.extract_strided_slice %409 {offsets = [2, 0], sizes = [1, 256], strides = [1, 1]} : vector<4x256xf32> to vector<1x256xf32>
    %424 = vector.broadcast %422 : vector<4x1xf32> to vector<4x256xf32>
    %425 = vector.broadcast %423 : vector<1x256xf32> to vector<4x256xf32>
    %426 = arith.mulf %424, %425 : vector<4x256xf32>
    %427 = arith.addf %415, %426 : vector<4x256xf32>
    %c0_132 = arith.constant 0 : index
    %c27_133 = arith.constant 27 : index
    %428 = vector.load %arg2[%c0_132, %c27_133] : memref<4x36xf32, #tpu.memory_space<vmem>>, vector<4x1xf32>
    %429 = vector.extract_strided_slice %409 {offsets = [3, 0], sizes = [1, 256], strides = [1, 1]} : vector<4x256xf32> to vector<1x256xf32>
    %430 = vector.broadcast %428 : vector<4x1xf32> to vector<4x256xf32>
    %431 = vector.broadcast %429 : vector<1x256xf32> to vector<4x256xf32>
    %432 = arith.mulf %430, %431 : vector<4x256xf32>
    %433 = arith.addf %421, %432 : vector<4x256xf32>
    %c4_134 = arith.constant 4 : index
    %c144_135 = arith.constant 144 : index
    %434 = vector.load %arg8[%c4_134, %c144_135] : memref<8x512xf32, #tpu.memory_space<vmem>>, vector<4x256xf32>
    %c0_136 = arith.constant 0 : index
    %c28_137 = arith.constant 28 : index
    %435 = vector.load %arg2[%c0_136, %c28_137] : memref<4x36xf32, #tpu.memory_space<vmem>>, vector<4x1xf32>
    %436 = vector.extract_strided_slice %434 {offsets = [0, 0], sizes = [1, 256], strides = [1, 1]} : vector<4x256xf32> to vector<1x256xf32>
    %437 = vector.broadcast %435 : vector<4x1xf32> to vector<4x256xf32>
    %438 = vector.broadcast %436 : vector<1x256xf32> to vector<4x256xf32>
    %439 = arith.mulf %437, %438 : vector<4x256xf32>
    %440 = arith.addf %427, %439 : vector<4x256xf32>
    %c0_138 = arith.constant 0 : index
    %c29_139 = arith.constant 29 : index
    %441 = vector.load %arg2[%c0_138, %c29_139] : memref<4x36xf32, #tpu.memory_space<vmem>>, vector<4x1xf32>
    %442 = vector.extract_strided_slice %434 {offsets = [1, 0], sizes = [1, 256], strides = [1, 1]} : vector<4x256xf32> to vector<1x256xf32>
    %443 = vector.broadcast %441 : vector<4x1xf32> to vector<4x256xf32>
    %444 = vector.broadcast %442 : vector<1x256xf32> to vector<4x256xf32>
    %445 = arith.mulf %443, %444 : vector<4x256xf32>
    %446 = arith.addf %433, %445 : vector<4x256xf32>
    %c0_140 = arith.constant 0 : index
    %c30_141 = arith.constant 30 : index
    %447 = vector.load %arg2[%c0_140, %c30_141] : memref<4x36xf32, #tpu.memory_space<vmem>>, vector<4x1xf32>
    %448 = vector.extract_strided_slice %434 {offsets = [2, 0], sizes = [1, 256], strides = [1, 1]} : vector<4x256xf32> to vector<1x256xf32>
    %449 = vector.broadcast %447 : vector<4x1xf32> to vector<4x256xf32>
    %450 = vector.broadcast %448 : vector<1x256xf32> to vector<4x256xf32>
    %451 = arith.mulf %449, %450 : vector<4x256xf32>
    %452 = arith.addf %440, %451 : vector<4x256xf32>
    %c0_142 = arith.constant 0 : index
    %c31_143 = arith.constant 31 : index
    %453 = vector.load %arg2[%c0_142, %c31_143] : memref<4x36xf32, #tpu.memory_space<vmem>>, vector<4x1xf32>
    %454 = vector.extract_strided_slice %434 {offsets = [3, 0], sizes = [1, 256], strides = [1, 1]} : vector<4x256xf32> to vector<1x256xf32>
    %455 = vector.broadcast %453 : vector<4x1xf32> to vector<4x256xf32>
    %456 = vector.broadcast %454 : vector<1x256xf32> to vector<4x256xf32>
    %457 = arith.mulf %455, %456 : vector<4x256xf32>
    %458 = arith.addf %446, %457 : vector<4x256xf32>
    %c4_144 = arith.constant 4 : index
    %c145_145 = arith.constant 145 : index
    %459 = vector.load %arg8[%c4_144, %c145_145] : memref<8x512xf32, #tpu.memory_space<vmem>>, vector<4x256xf32>
    %460 = arith.mulf %459, %13 : vector<4x256xf32>
    %c0_146 = arith.constant 0 : index
    %c32_147 = arith.constant 32 : index
    %461 = vector.load %arg2[%c0_146, %c32_147] : memref<4x36xf32, #tpu.memory_space<vmem>>, vector<4x1xf32>
    %462 = vector.extract_strided_slice %460 {offsets = [0, 0], sizes = [1, 256], strides = [1, 1]} : vector<4x256xf32> to vector<1x256xf32>
    %463 = vector.broadcast %461 : vector<4x1xf32> to vector<4x256xf32>
    %464 = vector.broadcast %462 : vector<1x256xf32> to vector<4x256xf32>
    %465 = arith.mulf %463, %464 : vector<4x256xf32>
    %466 = arith.addf %452, %465 : vector<4x256xf32>
    %c0_148 = arith.constant 0 : index
    %c33_149 = arith.constant 33 : index
    %467 = vector.load %arg2[%c0_148, %c33_149] : memref<4x36xf32, #tpu.memory_space<vmem>>, vector<4x1xf32>
    %468 = vector.extract_strided_slice %460 {offsets = [1, 0], sizes = [1, 256], strides = [1, 1]} : vector<4x256xf32> to vector<1x256xf32>
    %469 = vector.broadcast %467 : vector<4x1xf32> to vector<4x256xf32>
    %470 = vector.broadcast %468 : vector<1x256xf32> to vector<4x256xf32>
    %471 = arith.mulf %469, %470 : vector<4x256xf32>
    %472 = arith.addf %458, %471 : vector<4x256xf32>
    %c0_150 = arith.constant 0 : index
    %c34_151 = arith.constant 34 : index
    %473 = vector.load %arg2[%c0_150, %c34_151] : memref<4x36xf32, #tpu.memory_space<vmem>>, vector<4x1xf32>
    %474 = vector.extract_strided_slice %460 {offsets = [2, 0], sizes = [1, 256], strides = [1, 1]} : vector<4x256xf32> to vector<1x256xf32>
    %475 = vector.broadcast %473 : vector<4x1xf32> to vector<4x256xf32>
    %476 = vector.broadcast %474 : vector<1x256xf32> to vector<4x256xf32>
    %477 = arith.mulf %475, %476 : vector<4x256xf32>
    %478 = arith.addf %466, %477 : vector<4x256xf32>
    %c0_152 = arith.constant 0 : index
    %c35_153 = arith.constant 35 : index
    %479 = vector.load %arg2[%c0_152, %c35_153] : memref<4x36xf32, #tpu.memory_space<vmem>>, vector<4x1xf32>
    %480 = vector.extract_strided_slice %460 {offsets = [3, 0], sizes = [1, 256], strides = [1, 1]} : vector<4x256xf32> to vector<1x256xf32>
    %481 = vector.broadcast %479 : vector<4x1xf32> to vector<4x256xf32>
    %482 = vector.broadcast %480 : vector<1x256xf32> to vector<4x256xf32>
    %483 = arith.mulf %481, %482 : vector<4x256xf32>
    %484 = arith.addf %472, %483 : vector<4x256xf32>
    %485 = arith.addf %478, %484 : vector<4x256xf32>
    %486 = tpu.concatenate %249, %485 in 0 : vector<4x256xf32>, vector<4x256xf32> -> vector<8x256xf32>
    %cst_154 = arith.constant 0.000000e+00 : f32
    %487 = vector.broadcast %cst_154 : f32 to vector<8x256xf32>
    %488 = arith.maximumf %486, %487 : vector<8x256xf32>
    %c0_155 = arith.constant 0 : index
    %c128_156 = arith.constant 128 : index
    %489 = vector.load %arg8[%c0_155, %c128_156] : memref<8x512xf32, #tpu.memory_space<vmem>>, vector<8x256xf32>
    tpu.vector_store %arg8[%c0_155, %c128_156], %488 {strides = array<i32>} : memref<8x512xf32, #tpu.memory_space<vmem>>, vector<8x256xf32>,
    %c0_157 = arith.constant 0 : index
    %c0_158 = arith.constant 0 : index
    %490 = vector.load %arg5[%c0_157, %c0_158] : memref<4x1xf32, #tpu.memory_space<vmem>>, vector<4x1xf32>
    %491 = vector.shape_cast %490 : vector<4x1xf32> to vector<4x1xf32>
    %492 = vector.broadcast %491 : vector<4x1xf32> to vector<4x256xf32>
    %cst_159 = arith.constant 0.000000e+00 : f32
    %493 = vector.broadcast %cst_159 : f32 to vector<4x256xf32>
    %c0_160 = arith.constant 0 : index
    %c111_161 = arith.constant 111 : index
    %494 = vector.load %arg8[%c0_160, %c111_161] : memref<8x512xf32, #tpu.memory_space<vmem>>, vector<4x256xf32>
    %495 = arith.mulf %494, %10 : vector<4x256xf32>
    %c0_162 = arith.constant 0 : index
    %c0_163 = arith.constant 0 : index
    %496 = vector.load %arg4[%c0_162, %c0_163] : memref<4x36xf32, #tpu.memory_space<vmem>>, vector<4x1xf32>
    %497 = vector.extract_strided_slice %495 {offsets = [0, 0], sizes = [1, 256], strides = [1, 1]} : vector<4x256xf32> to vector<1x256xf32>
    %498 = vector.broadcast %496 : vector<4x1xf32> to vector<4x256xf32>
    %499 = vector.broadcast %497 : vector<1x256xf32> to vector<4x256xf32>
    %500 = arith.mulf %498, %499 : vector<4x256xf32>
    %501 = arith.addf %492, %500 : vector<4x256xf32>
    %c0_164 = arith.constant 0 : index
    %c1_165 = arith.constant 1 : index
    %502 = vector.load %arg4[%c0_164, %c1_165] : memref<4x36xf32, #tpu.memory_space<vmem>>, vector<4x1xf32>
    %503 = vector.extract_strided_slice %495 {offsets = [1, 0], sizes = [1, 256], strides = [1, 1]} : vector<4x256xf32> to vector<1x256xf32>
    %504 = vector.broadcast %502 : vector<4x1xf32> to vector<4x256xf32>
    %505 = vector.broadcast %503 : vector<1x256xf32> to vector<4x256xf32>
    %506 = arith.mulf %504, %505 : vector<4x256xf32>
    %507 = arith.addf %493, %506 : vector<4x256xf32>
    %c0_166 = arith.constant 0 : index
    %c2_167 = arith.constant 2 : index
    %508 = vector.load %arg4[%c0_166, %c2_167] : memref<4x36xf32, #tpu.memory_space<vmem>>, vector<4x1xf32>
    %509 = vector.extract_strided_slice %495 {offsets = [2, 0], sizes = [1, 256], strides = [1, 1]} : vector<4x256xf32> to vector<1x256xf32>
    %510 = vector.broadcast %508 : vector<4x1xf32> to vector<4x256xf32>
    %511 = vector.broadcast %509 : vector<1x256xf32> to vector<4x256xf32>
    %512 = arith.mulf %510, %511 : vector<4x256xf32>
    %513 = arith.addf %501, %512 : vector<4x256xf32>
    %c0_168 = arith.constant 0 : index
    %c3_169 = arith.constant 3 : index
    %514 = vector.load %arg4[%c0_168, %c3_169] : memref<4x36xf32, #tpu.memory_space<vmem>>, vector<4x1xf32>
    %515 = vector.extract_strided_slice %495 {offsets = [3, 0], sizes = [1, 256], strides = [1, 1]} : vector<4x256xf32> to vector<1x256xf32>
    %516 = vector.broadcast %514 : vector<4x1xf32> to vector<4x256xf32>
    %517 = vector.broadcast %515 : vector<1x256xf32> to vector<4x256xf32>
    %518 = arith.mulf %516, %517 : vector<4x256xf32>
    %519 = arith.addf %507, %518 : vector<4x256xf32>
    %c0_170 = arith.constant 0 : index
    %c112_171 = arith.constant 112 : index
    %520 = vector.load %arg8[%c0_170, %c112_171] : memref<8x512xf32, #tpu.memory_space<vmem>>, vector<4x256xf32>
    %c0_172 = arith.constant 0 : index
    %c4_173 = arith.constant 4 : index
    %521 = vector.load %arg4[%c0_172, %c4_173] : memref<4x36xf32, #tpu.memory_space<vmem>>, vector<4x1xf32>
    %522 = vector.extract_strided_slice %520 {offsets = [0, 0], sizes = [1, 256], strides = [1, 1]} : vector<4x256xf32> to vector<1x256xf32>
    %523 = vector.broadcast %521 : vector<4x1xf32> to vector<4x256xf32>
    %524 = vector.broadcast %522 : vector<1x256xf32> to vector<4x256xf32>
    %525 = arith.mulf %523, %524 : vector<4x256xf32>
    %526 = arith.addf %513, %525 : vector<4x256xf32>
    %c0_174 = arith.constant 0 : index
    %c5_175 = arith.constant 5 : index
    %527 = vector.load %arg4[%c0_174, %c5_175] : memref<4x36xf32, #tpu.memory_space<vmem>>, vector<4x1xf32>
    %528 = vector.extract_strided_slice %520 {offsets = [1, 0], sizes = [1, 256], strides = [1, 1]} : vector<4x256xf32> to vector<1x256xf32>
    %529 = vector.broadcast %527 : vector<4x1xf32> to vector<4x256xf32>
    %530 = vector.broadcast %528 : vector<1x256xf32> to vector<4x256xf32>
    %531 = arith.mulf %529, %530 : vector<4x256xf32>
    %532 = arith.addf %519, %531 : vector<4x256xf32>
    %c0_176 = arith.constant 0 : index
    %c6_177 = arith.constant 6 : index
    %533 = vector.load %arg4[%c0_176, %c6_177] : memref<4x36xf32, #tpu.memory_space<vmem>>, vector<4x1xf32>
    %534 = vector.extract_strided_slice %520 {offsets = [2, 0], sizes = [1, 256], strides = [1, 1]} : vector<4x256xf32> to vector<1x256xf32>
    %535 = vector.broadcast %533 : vector<4x1xf32> to vector<4x256xf32>
    %536 = vector.broadcast %534 : vector<1x256xf32> to vector<4x256xf32>
    %537 = arith.mulf %535, %536 : vector<4x256xf32>
    %538 = arith.addf %526, %537 : vector<4x256xf32>
    %c0_178 = arith.constant 0 : index
    %c7_179 = arith.constant 7 : index
    %539 = vector.load %arg4[%c0_178, %c7_179] : memref<4x36xf32, #tpu.memory_space<vmem>>, vector<4x1xf32>
    %540 = vector.extract_strided_slice %520 {offsets = [3, 0], sizes = [1, 256], strides = [1, 1]} : vector<4x256xf32> to vector<1x256xf32>
    %541 = vector.broadcast %539 : vector<4x1xf32> to vector<4x256xf32>
    %542 = vector.broadcast %540 : vector<1x256xf32> to vector<4x256xf32>
    %543 = arith.mulf %541, %542 : vector<4x256xf32>
    %544 = arith.addf %532, %543 : vector<4x256xf32>
    %c0_180 = arith.constant 0 : index
    %c113_181 = arith.constant 113 : index
    %545 = vector.load %arg8[%c0_180, %c113_181] : memref<8x512xf32, #tpu.memory_space<vmem>>, vector<4x256xf32>
    %546 = arith.mulf %545, %13 : vector<4x256xf32>
    %c0_182 = arith.constant 0 : index
    %c8_183 = arith.constant 8 : index
    %547 = vector.load %arg4[%c0_182, %c8_183] : memref<4x36xf32, #tpu.memory_space<vmem>>, vector<4x1xf32>
    %548 = vector.extract_strided_slice %546 {offsets = [0, 0], sizes = [1, 256], strides = [1, 1]} : vector<4x256xf32> to vector<1x256xf32>
    %549 = vector.broadcast %547 : vector<4x1xf32> to vector<4x256xf32>
    %550 = vector.broadcast %548 : vector<1x256xf32> to vector<4x256xf32>
    %551 = arith.mulf %549, %550 : vector<4x256xf32>
    %552 = arith.addf %538, %551 : vector<4x256xf32>
    %c0_184 = arith.constant 0 : index
    %c9_185 = arith.constant 9 : index
    %553 = vector.load %arg4[%c0_184, %c9_185] : memref<4x36xf32, #tpu.memory_space<vmem>>, vector<4x1xf32>
    %554 = vector.extract_strided_slice %546 {offsets = [1, 0], sizes = [1, 256], strides = [1, 1]} : vector<4x256xf32> to vector<1x256xf32>
    %555 = vector.broadcast %553 : vector<4x1xf32> to vector<4x256xf32>
    %556 = vector.broadcast %554 : vector<1x256xf32> to vector<4x256xf32>
    %557 = arith.mulf %555, %556 : vector<4x256xf32>
    %558 = arith.addf %544, %557 : vector<4x256xf32>
    %c0_186 = arith.constant 0 : index
    %c10_187 = arith.constant 10 : index
    %559 = vector.load %arg4[%c0_186, %c10_187] : memref<4x36xf32, #tpu.memory_space<vmem>>, vector<4x1xf32>
    %560 = vector.extract_strided_slice %546 {offsets = [2, 0], sizes = [1, 256], strides = [1, 1]} : vector<4x256xf32> to vector<1x256xf32>
    %561 = vector.broadcast %559 : vector<4x1xf32> to vector<4x256xf32>
    %562 = vector.broadcast %560 : vector<1x256xf32> to vector<4x256xf32>
    %563 = arith.mulf %561, %562 : vector<4x256xf32>
    %564 = arith.addf %552, %563 : vector<4x256xf32>
    %c0_188 = arith.constant 0 : index
    %c11_189 = arith.constant 11 : index
    %565 = vector.load %arg4[%c0_188, %c11_189] : memref<4x36xf32, #tpu.memory_space<vmem>>, vector<4x1xf32>
    %566 = vector.extract_strided_slice %546 {offsets = [3, 0], sizes = [1, 256], strides = [1, 1]} : vector<4x256xf32> to vector<1x256xf32>
    %567 = vector.broadcast %565 : vector<4x1xf32> to vector<4x256xf32>
    %568 = vector.broadcast %566 : vector<1x256xf32> to vector<4x256xf32>
    %569 = arith.mulf %567, %568 : vector<4x256xf32>
    %570 = arith.addf %558, %569 : vector<4x256xf32>
    %c0_190 = arith.constant 0 : index
    %c127_191 = arith.constant 127 : index
    %571 = vector.load %arg8[%c0_190, %c127_191] : memref<8x512xf32, #tpu.memory_space<vmem>>, vector<4x256xf32>
    %572 = arith.mulf %571, %10 : vector<4x256xf32>
    %c0_192 = arith.constant 0 : index
    %c12_193 = arith.constant 12 : index
    %573 = vector.load %arg4[%c0_192, %c12_193] : memref<4x36xf32, #tpu.memory_space<vmem>>, vector<4x1xf32>
    %574 = vector.extract_strided_slice %572 {offsets = [0, 0], sizes = [1, 256], strides = [1, 1]} : vector<4x256xf32> to vector<1x256xf32>
    %575 = vector.broadcast %573 : vector<4x1xf32> to vector<4x256xf32>
    %576 = vector.broadcast %574 : vector<1x256xf32> to vector<4x256xf32>
    %577 = arith.mulf %575, %576 : vector<4x256xf32>
    %578 = arith.addf %564, %577 : vector<4x256xf32>
    %c0_194 = arith.constant 0 : index
    %c13_195 = arith.constant 13 : index
    %579 = vector.load %arg4[%c0_194, %c13_195] : memref<4x36xf32, #tpu.memory_space<vmem>>, vector<4x1xf32>
    %580 = vector.extract_strided_slice %572 {offsets = [1, 0], sizes = [1, 256], strides = [1, 1]} : vector<4x256xf32> to vector<1x256xf32>
    %581 = vector.broadcast %579 : vector<4x1xf32> to vector<4x256xf32>
    %582 = vector.broadcast %580 : vector<1x256xf32> to vector<4x256xf32>
    %583 = arith.mulf %581, %582 : vector<4x256xf32>
    %584 = arith.addf %570, %583 : vector<4x256xf32>
    %c0_196 = arith.constant 0 : index
    %c14_197 = arith.constant 14 : index
    %585 = vector.load %arg4[%c0_196, %c14_197] : memref<4x36xf32, #tpu.memory_space<vmem>>, vector<4x1xf32>
    %586 = vector.extract_strided_slice %572 {offsets = [2, 0], sizes = [1, 256], strides = [1, 1]} : vector<4x256xf32> to vector<1x256xf32>
    %587 = vector.broadcast %585 : vector<4x1xf32> to vector<4x256xf32>
    %588 = vector.broadcast %586 : vector<1x256xf32> to vector<4x256xf32>
    %589 = arith.mulf %587, %588 : vector<4x256xf32>
    %590 = arith.addf %578, %589 : vector<4x256xf32>
    %c0_198 = arith.constant 0 : index
    %c15_199 = arith.constant 15 : index
    %591 = vector.load %arg4[%c0_198, %c15_199] : memref<4x36xf32, #tpu.memory_space<vmem>>, vector<4x1xf32>
    %592 = vector.extract_strided_slice %572 {offsets = [3, 0], sizes = [1, 256], strides = [1, 1]} : vector<4x256xf32> to vector<1x256xf32>
    %593 = vector.broadcast %591 : vector<4x1xf32> to vector<4x256xf32>
    %594 = vector.broadcast %592 : vector<1x256xf32> to vector<4x256xf32>
    %595 = arith.mulf %593, %594 : vector<4x256xf32>
    %596 = arith.addf %584, %595 : vector<4x256xf32>
    %c0_200 = arith.constant 0 : index
    %c128_201 = arith.constant 128 : index
    %597 = vector.load %arg8[%c0_200, %c128_201] : memref<8x512xf32, #tpu.memory_space<vmem>>, vector<4x256xf32>
    %c0_202 = arith.constant 0 : index
    %c16_203 = arith.constant 16 : index
    %598 = vector.load %arg4[%c0_202, %c16_203] : memref<4x36xf32, #tpu.memory_space<vmem>>, vector<4x1xf32>
    %599 = vector.extract_strided_slice %597 {offsets = [0, 0], sizes = [1, 256], strides = [1, 1]} : vector<4x256xf32> to vector<1x256xf32>
    %600 = vector.broadcast %598 : vector<4x1xf32> to vector<4x256xf32>
    %601 = vector.broadcast %599 : vector<1x256xf32> to vector<4x256xf32>
    %602 = arith.mulf %600, %601 : vector<4x256xf32>
    %603 = arith.addf %590, %602 : vector<4x256xf32>
    %c0_204 = arith.constant 0 : index
    %c17_205 = arith.constant 17 : index
    %604 = vector.load %arg4[%c0_204, %c17_205] : memref<4x36xf32, #tpu.memory_space<vmem>>, vector<4x1xf32>
    %605 = vector.extract_strided_slice %597 {offsets = [1, 0], sizes = [1, 256], strides = [1, 1]} : vector<4x256xf32> to vector<1x256xf32>
    %606 = vector.broadcast %604 : vector<4x1xf32> to vector<4x256xf32>
    %607 = vector.broadcast %605 : vector<1x256xf32> to vector<4x256xf32>
    %608 = arith.mulf %606, %607 : vector<4x256xf32>
    %609 = arith.addf %596, %608 : vector<4x256xf32>
    %c0_206 = arith.constant 0 : index
    %c18_207 = arith.constant 18 : index
    %610 = vector.load %arg4[%c0_206, %c18_207] : memref<4x36xf32, #tpu.memory_space<vmem>>, vector<4x1xf32>
    %611 = vector.extract_strided_slice %597 {offsets = [2, 0], sizes = [1, 256], strides = [1, 1]} : vector<4x256xf32> to vector<1x256xf32>
    %612 = vector.broadcast %610 : vector<4x1xf32> to vector<4x256xf32>
    %613 = vector.broadcast %611 : vector<1x256xf32> to vector<4x256xf32>
    %614 = arith.mulf %612, %613 : vector<4x256xf32>
    %615 = arith.addf %603, %614 : vector<4x256xf32>
    %c0_208 = arith.constant 0 : index
    %c19_209 = arith.constant 19 : index
    %616 = vector.load %arg4[%c0_208, %c19_209] : memref<4x36xf32, #tpu.memory_space<vmem>>, vector<4x1xf32>
    %617 = vector.extract_strided_slice %597 {offsets = [3, 0], sizes = [1, 256], strides = [1, 1]} : vector<4x256xf32> to vector<1x256xf32>
    %618 = vector.broadcast %616 : vector<4x1xf32> to vector<4x256xf32>
    %619 = vector.broadcast %617 : vector<1x256xf32> to vector<4x256xf32>
    %620 = arith.mulf %618, %619 : vector<4x256xf32>
    %621 = arith.addf %609, %620 : vector<4x256xf32>
    %c0_210 = arith.constant 0 : index
    %c129_211 = arith.constant 129 : index
    %622 = vector.load %arg8[%c0_210, %c129_211] : memref<8x512xf32, #tpu.memory_space<vmem>>, vector<4x256xf32>
    %623 = arith.mulf %622, %13 : vector<4x256xf32>
    %c0_212 = arith.constant 0 : index
    %c20_213 = arith.constant 20 : index
    %624 = vector.load %arg4[%c0_212, %c20_213] : memref<4x36xf32, #tpu.memory_space<vmem>>, vector<4x1xf32>
    %625 = vector.extract_strided_slice %623 {offsets = [0, 0], sizes = [1, 256], strides = [1, 1]} : vector<4x256xf32> to vector<1x256xf32>
    %626 = vector.broadcast %624 : vector<4x1xf32> to vector<4x256xf32>
    %627 = vector.broadcast %625 : vector<1x256xf32> to vector<4x256xf32>
    %628 = arith.mulf %626, %627 : vector<4x256xf32>
    %629 = arith.addf %615, %628 : vector<4x256xf32>
    %c0_214 = arith.constant 0 : index
    %c21_215 = arith.constant 21 : index
    %630 = vector.load %arg4[%c0_214, %c21_215] : memref<4x36xf32, #tpu.memory_space<vmem>>, vector<4x1xf32>
    %631 = vector.extract_strided_slice %623 {offsets = [1, 0], sizes = [1, 256], strides = [1, 1]} : vector<4x256xf32> to vector<1x256xf32>
    %632 = vector.broadcast %630 : vector<4x1xf32> to vector<4x256xf32>
    %633 = vector.broadcast %631 : vector<1x256xf32> to vector<4x256xf32>
    %634 = arith.mulf %632, %633 : vector<4x256xf32>
    %635 = arith.addf %621, %634 : vector<4x256xf32>
    %c0_216 = arith.constant 0 : index
    %c22_217 = arith.constant 22 : index
    %636 = vector.load %arg4[%c0_216, %c22_217] : memref<4x36xf32, #tpu.memory_space<vmem>>, vector<4x1xf32>
    %637 = vector.extract_strided_slice %623 {offsets = [2, 0], sizes = [1, 256], strides = [1, 1]} : vector<4x256xf32> to vector<1x256xf32>
    %638 = vector.broadcast %636 : vector<4x1xf32> to vector<4x256xf32>
    %639 = vector.broadcast %637 : vector<1x256xf32> to vector<4x256xf32>
    %640 = arith.mulf %638, %639 : vector<4x256xf32>
    %641 = arith.addf %629, %640 : vector<4x256xf32>
    %c0_218 = arith.constant 0 : index
    %c23_219 = arith.constant 23 : index
    %642 = vector.load %arg4[%c0_218, %c23_219] : memref<4x36xf32, #tpu.memory_space<vmem>>, vector<4x1xf32>
    %643 = vector.extract_strided_slice %623 {offsets = [3, 0], sizes = [1, 256], strides = [1, 1]} : vector<4x256xf32> to vector<1x256xf32>
    %644 = vector.broadcast %642 : vector<4x1xf32> to vector<4x256xf32>
    %645 = vector.broadcast %643 : vector<1x256xf32> to vector<4x256xf32>
    %646 = arith.mulf %644, %645 : vector<4x256xf32>
    %647 = arith.addf %635, %646 : vector<4x256xf32>
    %c0_220 = arith.constant 0 : index
    %c143_221 = arith.constant 143 : index
    %648 = vector.load %arg8[%c0_220, %c143_221] : memref<8x512xf32, #tpu.memory_space<vmem>>, vector<4x256xf32>
    %649 = arith.mulf %648, %10 : vector<4x256xf32>
    %c0_222 = arith.constant 0 : index
    %c24_223 = arith.constant 24 : index
    %650 = vector.load %arg4[%c0_222, %c24_223] : memref<4x36xf32, #tpu.memory_space<vmem>>, vector<4x1xf32>
    %651 = vector.extract_strided_slice %649 {offsets = [0, 0], sizes = [1, 256], strides = [1, 1]} : vector<4x256xf32> to vector<1x256xf32>
    %652 = vector.broadcast %650 : vector<4x1xf32> to vector<4x256xf32>
    %653 = vector.broadcast %651 : vector<1x256xf32> to vector<4x256xf32>
    %654 = arith.mulf %652, %653 : vector<4x256xf32>
    %655 = arith.addf %641, %654 : vector<4x256xf32>
    %c0_224 = arith.constant 0 : index
    %c25_225 = arith.constant 25 : index
    %656 = vector.load %arg4[%c0_224, %c25_225] : memref<4x36xf32, #tpu.memory_space<vmem>>, vector<4x1xf32>
    %657 = vector.extract_strided_slice %649 {offsets = [1, 0], sizes = [1, 256], strides = [1, 1]} : vector<4x256xf32> to vector<1x256xf32>
    %658 = vector.broadcast %656 : vector<4x1xf32> to vector<4x256xf32>
    %659 = vector.broadcast %657 : vector<1x256xf32> to vector<4x256xf32>
    %660 = arith.mulf %658, %659 : vector<4x256xf32>
    %661 = arith.addf %647, %660 : vector<4x256xf32>
    %c0_226 = arith.constant 0 : index
    %c26_227 = arith.constant 26 : index
    %662 = vector.load %arg4[%c0_226, %c26_227] : memref<4x36xf32, #tpu.memory_space<vmem>>, vector<4x1xf32>
    %663 = vector.extract_strided_slice %649 {offsets = [2, 0], sizes = [1, 256], strides = [1, 1]} : vector<4x256xf32> to vector<1x256xf32>
    %664 = vector.broadcast %662 : vector<4x1xf32> to vector<4x256xf32>
    %665 = vector.broadcast %663 : vector<1x256xf32> to vector<4x256xf32>
    %666 = arith.mulf %664, %665 : vector<4x256xf32>
    %667 = arith.addf %655, %666 : vector<4x256xf32>
    %c0_228 = arith.constant 0 : index
    %c27_229 = arith.constant 27 : index
    %668 = vector.load %arg4[%c0_228, %c27_229] : memref<4x36xf32, #tpu.memory_space<vmem>>, vector<4x1xf32>
    %669 = vector.extract_strided_slice %649 {offsets = [3, 0], sizes = [1, 256], strides = [1, 1]} : vector<4x256xf32> to vector<1x256xf32>
    %670 = vector.broadcast %668 : vector<4x1xf32> to vector<4x256xf32>
    %671 = vector.broadcast %669 : vector<1x256xf32> to vector<4x256xf32>
    %672 = arith.mulf %670, %671 : vector<4x256xf32>
    %673 = arith.addf %661, %672 : vector<4x256xf32>
    %c0_230 = arith.constant 0 : index
    %c144_231 = arith.constant 144 : index
    %674 = vector.load %arg8[%c0_230, %c144_231] : memref<8x512xf32, #tpu.memory_space<vmem>>, vector<4x256xf32>
    %c0_232 = arith.constant 0 : index
    %c28_233 = arith.constant 28 : index
    %675 = vector.load %arg4[%c0_232, %c28_233] : memref<4x36xf32, #tpu.memory_space<vmem>>, vector<4x1xf32>
    %676 = vector.extract_strided_slice %674 {offsets = [0, 0], sizes = [1, 256], strides = [1, 1]} : vector<4x256xf32> to vector<1x256xf32>
    %677 = vector.broadcast %675 : vector<4x1xf32> to vector<4x256xf32>
    %678 = vector.broadcast %676 : vector<1x256xf32> to vector<4x256xf32>
    %679 = arith.mulf %677, %678 : vector<4x256xf32>
    %680 = arith.addf %667, %679 : vector<4x256xf32>
    %c0_234 = arith.constant 0 : index
    %c29_235 = arith.constant 29 : index
    %681 = vector.load %arg4[%c0_234, %c29_235] : memref<4x36xf32, #tpu.memory_space<vmem>>, vector<4x1xf32>
    %682 = vector.extract_strided_slice %674 {offsets = [1, 0], sizes = [1, 256], strides = [1, 1]} : vector<4x256xf32> to vector<1x256xf32>
    %683 = vector.broadcast %681 : vector<4x1xf32> to vector<4x256xf32>
    %684 = vector.broadcast %682 : vector<1x256xf32> to vector<4x256xf32>
    %685 = arith.mulf %683, %684 : vector<4x256xf32>
    %686 = arith.addf %673, %685 : vector<4x256xf32>
    %c0_236 = arith.constant 0 : index
    %c30_237 = arith.constant 30 : index
    %687 = vector.load %arg4[%c0_236, %c30_237] : memref<4x36xf32, #tpu.memory_space<vmem>>, vector<4x1xf32>
    %688 = vector.extract_strided_slice %674 {offsets = [2, 0], sizes = [1, 256], strides = [1, 1]} : vector<4x256xf32> to vector<1x256xf32>
    %689 = vector.broadcast %687 : vector<4x1xf32> to vector<4x256xf32>
    %690 = vector.broadcast %688 : vector<1x256xf32> to vector<4x256xf32>
    %691 = arith.mulf %689, %690 : vector<4x256xf32>
    %692 = arith.addf %680, %691 : vector<4x256xf32>
    %c0_238 = arith.constant 0 : index
    %c31_239 = arith.constant 31 : index
    %693 = vector.load %arg4[%c0_238, %c31_239] : memref<4x36xf32, #tpu.memory_space<vmem>>, vector<4x1xf32>
    %694 = vector.extract_strided_slice %674 {offsets = [3, 0], sizes = [1, 256], strides = [1, 1]} : vector<4x256xf32> to vector<1x256xf32>
    %695 = vector.broadcast %693 : vector<4x1xf32> to vector<4x256xf32>
    %696 = vector.broadcast %694 : vector<1x256xf32> to vector<4x256xf32>
    %697 = arith.mulf %695, %696 : vector<4x256xf32>
    %698 = arith.addf %686, %697 : vector<4x256xf32>
    %c0_240 = arith.constant 0 : index
    %c145_241 = arith.constant 145 : index
    %699 = vector.load %arg8[%c0_240, %c145_241] : memref<8x512xf32, #tpu.memory_space<vmem>>, vector<4x256xf32>
    %700 = arith.mulf %699, %13 : vector<4x256xf32>
    %c0_242 = arith.constant 0 : index
    %c32_243 = arith.constant 32 : index
    %701 = vector.load %arg4[%c0_242, %c32_243] : memref<4x36xf32, #tpu.memory_space<vmem>>, vector<4x1xf32>
    %702 = vector.extract_strided_slice %700 {offsets = [0, 0], sizes = [1, 256], strides = [1, 1]} : vector<4x256xf32> to vector<1x256xf32>
    %703 = vector.broadcast %701 : vector<4x1xf32> to vector<4x256xf32>
    %704 = vector.broadcast %702 : vector<1x256xf32> to vector<4x256xf32>
    %705 = arith.mulf %703, %704 : vector<4x256xf32>
    %706 = arith.addf %692, %705 : vector<4x256xf32>
    %c0_244 = arith.constant 0 : index
    %c33_245 = arith.constant 33 : index
    %707 = vector.load %arg4[%c0_244, %c33_245] : memref<4x36xf32, #tpu.memory_space<vmem>>, vector<4x1xf32>
    %708 = vector.extract_strided_slice %700 {offsets = [1, 0], sizes = [1, 256], strides = [1, 1]} : vector<4x256xf32> to vector<1x256xf32>
    %709 = vector.broadcast %707 : vector<4x1xf32> to vector<4x256xf32>
    %710 = vector.broadcast %708 : vector<1x256xf32> to vector<4x256xf32>
    %711 = arith.mulf %709, %710 : vector<4x256xf32>
    %712 = arith.addf %698, %711 : vector<4x256xf32>
    %c0_246 = arith.constant 0 : index
    %c34_247 = arith.constant 34 : index
    %713 = vector.load %arg4[%c0_246, %c34_247] : memref<4x36xf32, #tpu.memory_space<vmem>>, vector<4x1xf32>
    %714 = vector.extract_strided_slice %700 {offsets = [2, 0], sizes = [1, 256], strides = [1, 1]} : vector<4x256xf32> to vector<1x256xf32>
    %715 = vector.broadcast %713 : vector<4x1xf32> to vector<4x256xf32>
    %716 = vector.broadcast %714 : vector<1x256xf32> to vector<4x256xf32>
    %717 = arith.mulf %715, %716 : vector<4x256xf32>
    %718 = arith.addf %706, %717 : vector<4x256xf32>
    %c0_248 = arith.constant 0 : index
    %c35_249 = arith.constant 35 : index
    %719 = vector.load %arg4[%c0_248, %c35_249] : memref<4x36xf32, #tpu.memory_space<vmem>>, vector<4x1xf32>
    %720 = vector.extract_strided_slice %700 {offsets = [3, 0], sizes = [1, 256], strides = [1, 1]} : vector<4x256xf32> to vector<1x256xf32>
    %721 = vector.broadcast %719 : vector<4x1xf32> to vector<4x256xf32>
    %722 = vector.broadcast %720 : vector<1x256xf32> to vector<4x256xf32>
    %723 = arith.mulf %721, %722 : vector<4x256xf32>
    %724 = arith.addf %712, %723 : vector<4x256xf32>
    %725 = arith.addf %718, %724 : vector<4x256xf32>
    %c0_250 = arith.constant 0 : index
    %c0_251 = arith.constant 0 : index
    %726 = vector.load %arg5[%c0_250, %c0_251] : memref<4x1xf32, #tpu.memory_space<vmem>>, vector<4x1xf32>
    %727 = vector.shape_cast %726 : vector<4x1xf32> to vector<4x1xf32>
    %728 = vector.broadcast %727 : vector<4x1xf32> to vector<4x256xf32>
    %cst_252 = arith.constant 0.000000e+00 : f32
    %729 = vector.broadcast %cst_252 : f32 to vector<4x256xf32>
    %c4_253 = arith.constant 4 : index
    %c111_254 = arith.constant 111 : index
    %730 = vector.load %arg8[%c4_253, %c111_254] : memref<8x512xf32, #tpu.memory_space<vmem>>, vector<4x256xf32>
    %731 = arith.mulf %730, %10 : vector<4x256xf32>
    %c0_255 = arith.constant 0 : index
    %c0_256 = arith.constant 0 : index
    %732 = vector.load %arg4[%c0_255, %c0_256] : memref<4x36xf32, #tpu.memory_space<vmem>>, vector<4x1xf32>
    %733 = vector.extract_strided_slice %731 {offsets = [0, 0], sizes = [1, 256], strides = [1, 1]} : vector<4x256xf32> to vector<1x256xf32>
    %734 = vector.broadcast %732 : vector<4x1xf32> to vector<4x256xf32>
    %735 = vector.broadcast %733 : vector<1x256xf32> to vector<4x256xf32>
    %736 = arith.mulf %734, %735 : vector<4x256xf32>
    %737 = arith.addf %728, %736 : vector<4x256xf32>
    %c0_257 = arith.constant 0 : index
    %c1_258 = arith.constant 1 : index
    %738 = vector.load %arg4[%c0_257, %c1_258] : memref<4x36xf32, #tpu.memory_space<vmem>>, vector<4x1xf32>
    %739 = vector.extract_strided_slice %731 {offsets = [1, 0], sizes = [1, 256], strides = [1, 1]} : vector<4x256xf32> to vector<1x256xf32>
    %740 = vector.broadcast %738 : vector<4x1xf32> to vector<4x256xf32>
    %741 = vector.broadcast %739 : vector<1x256xf32> to vector<4x256xf32>
    %742 = arith.mulf %740, %741 : vector<4x256xf32>
    %743 = arith.addf %729, %742 : vector<4x256xf32>
    %c0_259 = arith.constant 0 : index
    %c2_260 = arith.constant 2 : index
    %744 = vector.load %arg4[%c0_259, %c2_260] : memref<4x36xf32, #tpu.memory_space<vmem>>, vector<4x1xf32>
    %745 = vector.extract_strided_slice %731 {offsets = [2, 0], sizes = [1, 256], strides = [1, 1]} : vector<4x256xf32> to vector<1x256xf32>
    %746 = vector.broadcast %744 : vector<4x1xf32> to vector<4x256xf32>
    %747 = vector.broadcast %745 : vector<1x256xf32> to vector<4x256xf32>
    %748 = arith.mulf %746, %747 : vector<4x256xf32>
    %749 = arith.addf %737, %748 : vector<4x256xf32>
    %c0_261 = arith.constant 0 : index
    %c3_262 = arith.constant 3 : index
    %750 = vector.load %arg4[%c0_261, %c3_262] : memref<4x36xf32, #tpu.memory_space<vmem>>, vector<4x1xf32>
    %751 = vector.extract_strided_slice %731 {offsets = [3, 0], sizes = [1, 256], strides = [1, 1]} : vector<4x256xf32> to vector<1x256xf32>
    %752 = vector.broadcast %750 : vector<4x1xf32> to vector<4x256xf32>
    %753 = vector.broadcast %751 : vector<1x256xf32> to vector<4x256xf32>
    %754 = arith.mulf %752, %753 : vector<4x256xf32>
    %755 = arith.addf %743, %754 : vector<4x256xf32>
    %c4_263 = arith.constant 4 : index
    %c112_264 = arith.constant 112 : index
    %756 = vector.load %arg8[%c4_263, %c112_264] : memref<8x512xf32, #tpu.memory_space<vmem>>, vector<4x256xf32>
    %c0_265 = arith.constant 0 : index
    %c4_266 = arith.constant 4 : index
    %757 = vector.load %arg4[%c0_265, %c4_266] : memref<4x36xf32, #tpu.memory_space<vmem>>, vector<4x1xf32>
    %758 = vector.extract_strided_slice %756 {offsets = [0, 0], sizes = [1, 256], strides = [1, 1]} : vector<4x256xf32> to vector<1x256xf32>
    %759 = vector.broadcast %757 : vector<4x1xf32> to vector<4x256xf32>
    %760 = vector.broadcast %758 : vector<1x256xf32> to vector<4x256xf32>
    %761 = arith.mulf %759, %760 : vector<4x256xf32>
    %762 = arith.addf %749, %761 : vector<4x256xf32>
    %c0_267 = arith.constant 0 : index
    %c5_268 = arith.constant 5 : index
    %763 = vector.load %arg4[%c0_267, %c5_268] : memref<4x36xf32, #tpu.memory_space<vmem>>, vector<4x1xf32>
    %764 = vector.extract_strided_slice %756 {offsets = [1, 0], sizes = [1, 256], strides = [1, 1]} : vector<4x256xf32> to vector<1x256xf32>
    %765 = vector.broadcast %763 : vector<4x1xf32> to vector<4x256xf32>
    %766 = vector.broadcast %764 : vector<1x256xf32> to vector<4x256xf32>
    %767 = arith.mulf %765, %766 : vector<4x256xf32>
    %768 = arith.addf %755, %767 : vector<4x256xf32>
    %c0_269 = arith.constant 0 : index
    %c6_270 = arith.constant 6 : index
    %769 = vector.load %arg4[%c0_269, %c6_270] : memref<4x36xf32, #tpu.memory_space<vmem>>, vector<4x1xf32>
    %770 = vector.extract_strided_slice %756 {offsets = [2, 0], sizes = [1, 256], strides = [1, 1]} : vector<4x256xf32> to vector<1x256xf32>
    %771 = vector.broadcast %769 : vector<4x1xf32> to vector<4x256xf32>
    %772 = vector.broadcast %770 : vector<1x256xf32> to vector<4x256xf32>
    %773 = arith.mulf %771, %772 : vector<4x256xf32>
    %774 = arith.addf %762, %773 : vector<4x256xf32>
    %c0_271 = arith.constant 0 : index
    %c7_272 = arith.constant 7 : index
    %775 = vector.load %arg4[%c0_271, %c7_272] : memref<4x36xf32, #tpu.memory_space<vmem>>, vector<4x1xf32>
    %776 = vector.extract_strided_slice %756 {offsets = [3, 0], sizes = [1, 256], strides = [1, 1]} : vector<4x256xf32> to vector<1x256xf32>
    %777 = vector.broadcast %775 : vector<4x1xf32> to vector<4x256xf32>
    %778 = vector.broadcast %776 : vector<1x256xf32> to vector<4x256xf32>
    %779 = arith.mulf %777, %778 : vector<4x256xf32>
    %780 = arith.addf %768, %779 : vector<4x256xf32>
    %c4_273 = arith.constant 4 : index
    %c113_274 = arith.constant 113 : index
    %781 = vector.load %arg8[%c4_273, %c113_274] : memref<8x512xf32, #tpu.memory_space<vmem>>, vector<4x256xf32>
    %782 = arith.mulf %781, %13 : vector<4x256xf32>
    %c0_275 = arith.constant 0 : index
    %c8_276 = arith.constant 8 : index
    %783 = vector.load %arg4[%c0_275, %c8_276] : memref<4x36xf32, #tpu.memory_space<vmem>>, vector<4x1xf32>
    %784 = vector.extract_strided_slice %782 {offsets = [0, 0], sizes = [1, 256], strides = [1, 1]} : vector<4x256xf32> to vector<1x256xf32>
    %785 = vector.broadcast %783 : vector<4x1xf32> to vector<4x256xf32>
    %786 = vector.broadcast %784 : vector<1x256xf32> to vector<4x256xf32>
    %787 = arith.mulf %785, %786 : vector<4x256xf32>
    %788 = arith.addf %774, %787 : vector<4x256xf32>
    %c0_277 = arith.constant 0 : index
    %c9_278 = arith.constant 9 : index
    %789 = vector.load %arg4[%c0_277, %c9_278] : memref<4x36xf32, #tpu.memory_space<vmem>>, vector<4x1xf32>
    %790 = vector.extract_strided_slice %782 {offsets = [1, 0], sizes = [1, 256], strides = [1, 1]} : vector<4x256xf32> to vector<1x256xf32>
    %791 = vector.broadcast %789 : vector<4x1xf32> to vector<4x256xf32>
    %792 = vector.broadcast %790 : vector<1x256xf32> to vector<4x256xf32>
    %793 = arith.mulf %791, %792 : vector<4x256xf32>
    %794 = arith.addf %780, %793 : vector<4x256xf32>
    %c0_279 = arith.constant 0 : index
    %c10_280 = arith.constant 10 : index
    %795 = vector.load %arg4[%c0_279, %c10_280] : memref<4x36xf32, #tpu.memory_space<vmem>>, vector<4x1xf32>
    %796 = vector.extract_strided_slice %782 {offsets = [2, 0], sizes = [1, 256], strides = [1, 1]} : vector<4x256xf32> to vector<1x256xf32>
    %797 = vector.broadcast %795 : vector<4x1xf32> to vector<4x256xf32>
    %798 = vector.broadcast %796 : vector<1x256xf32> to vector<4x256xf32>
    %799 = arith.mulf %797, %798 : vector<4x256xf32>
    %800 = arith.addf %788, %799 : vector<4x256xf32>
    %c0_281 = arith.constant 0 : index
    %c11_282 = arith.constant 11 : index
    %801 = vector.load %arg4[%c0_281, %c11_282] : memref<4x36xf32, #tpu.memory_space<vmem>>, vector<4x1xf32>
    %802 = vector.extract_strided_slice %782 {offsets = [3, 0], sizes = [1, 256], strides = [1, 1]} : vector<4x256xf32> to vector<1x256xf32>
    %803 = vector.broadcast %801 : vector<4x1xf32> to vector<4x256xf32>
    %804 = vector.broadcast %802 : vector<1x256xf32> to vector<4x256xf32>
    %805 = arith.mulf %803, %804 : vector<4x256xf32>
    %806 = arith.addf %794, %805 : vector<4x256xf32>
    %c4_283 = arith.constant 4 : index
    %c127_284 = arith.constant 127 : index
    %807 = vector.load %arg8[%c4_283, %c127_284] : memref<8x512xf32, #tpu.memory_space<vmem>>, vector<4x256xf32>
    %808 = arith.mulf %807, %10 : vector<4x256xf32>
    %c0_285 = arith.constant 0 : index
    %c12_286 = arith.constant 12 : index
    %809 = vector.load %arg4[%c0_285, %c12_286] : memref<4x36xf32, #tpu.memory_space<vmem>>, vector<4x1xf32>
    %810 = vector.extract_strided_slice %808 {offsets = [0, 0], sizes = [1, 256], strides = [1, 1]} : vector<4x256xf32> to vector<1x256xf32>
    %811 = vector.broadcast %809 : vector<4x1xf32> to vector<4x256xf32>
    %812 = vector.broadcast %810 : vector<1x256xf32> to vector<4x256xf32>
    %813 = arith.mulf %811, %812 : vector<4x256xf32>
    %814 = arith.addf %800, %813 : vector<4x256xf32>
    %c0_287 = arith.constant 0 : index
    %c13_288 = arith.constant 13 : index
    %815 = vector.load %arg4[%c0_287, %c13_288] : memref<4x36xf32, #tpu.memory_space<vmem>>, vector<4x1xf32>
    %816 = vector.extract_strided_slice %808 {offsets = [1, 0], sizes = [1, 256], strides = [1, 1]} : vector<4x256xf32> to vector<1x256xf32>
    %817 = vector.broadcast %815 : vector<4x1xf32> to vector<4x256xf32>
    %818 = vector.broadcast %816 : vector<1x256xf32> to vector<4x256xf32>
    %819 = arith.mulf %817, %818 : vector<4x256xf32>
    %820 = arith.addf %806, %819 : vector<4x256xf32>
    %c0_289 = arith.constant 0 : index
    %c14_290 = arith.constant 14 : index
    %821 = vector.load %arg4[%c0_289, %c14_290] : memref<4x36xf32, #tpu.memory_space<vmem>>, vector<4x1xf32>
    %822 = vector.extract_strided_slice %808 {offsets = [2, 0], sizes = [1, 256], strides = [1, 1]} : vector<4x256xf32> to vector<1x256xf32>
    %823 = vector.broadcast %821 : vector<4x1xf32> to vector<4x256xf32>
    %824 = vector.broadcast %822 : vector<1x256xf32> to vector<4x256xf32>
    %825 = arith.mulf %823, %824 : vector<4x256xf32>
    %826 = arith.addf %814, %825 : vector<4x256xf32>
    %c0_291 = arith.constant 0 : index
    %c15_292 = arith.constant 15 : index
    %827 = vector.load %arg4[%c0_291, %c15_292] : memref<4x36xf32, #tpu.memory_space<vmem>>, vector<4x1xf32>
    %828 = vector.extract_strided_slice %808 {offsets = [3, 0], sizes = [1, 256], strides = [1, 1]} : vector<4x256xf32> to vector<1x256xf32>
    %829 = vector.broadcast %827 : vector<4x1xf32> to vector<4x256xf32>
    %830 = vector.broadcast %828 : vector<1x256xf32> to vector<4x256xf32>
    %831 = arith.mulf %829, %830 : vector<4x256xf32>
    %832 = arith.addf %820, %831 : vector<4x256xf32>
    %c4_293 = arith.constant 4 : index
    %c128_294 = arith.constant 128 : index
    %833 = vector.load %arg8[%c4_293, %c128_294] : memref<8x512xf32, #tpu.memory_space<vmem>>, vector<4x256xf32>
    %c0_295 = arith.constant 0 : index
    %c16_296 = arith.constant 16 : index
    %834 = vector.load %arg4[%c0_295, %c16_296] : memref<4x36xf32, #tpu.memory_space<vmem>>, vector<4x1xf32>
    %835 = vector.extract_strided_slice %833 {offsets = [0, 0], sizes = [1, 256], strides = [1, 1]} : vector<4x256xf32> to vector<1x256xf32>
    %836 = vector.broadcast %834 : vector<4x1xf32> to vector<4x256xf32>
    %837 = vector.broadcast %835 : vector<1x256xf32> to vector<4x256xf32>
    %838 = arith.mulf %836, %837 : vector<4x256xf32>
    %839 = arith.addf %826, %838 : vector<4x256xf32>
    %c0_297 = arith.constant 0 : index
    %c17_298 = arith.constant 17 : index
    %840 = vector.load %arg4[%c0_297, %c17_298] : memref<4x36xf32, #tpu.memory_space<vmem>>, vector<4x1xf32>
    %841 = vector.extract_strided_slice %833 {offsets = [1, 0], sizes = [1, 256], strides = [1, 1]} : vector<4x256xf32> to vector<1x256xf32>
    %842 = vector.broadcast %840 : vector<4x1xf32> to vector<4x256xf32>
    %843 = vector.broadcast %841 : vector<1x256xf32> to vector<4x256xf32>
    %844 = arith.mulf %842, %843 : vector<4x256xf32>
    %845 = arith.addf %832, %844 : vector<4x256xf32>
    %c0_299 = arith.constant 0 : index
    %c18_300 = arith.constant 18 : index
    %846 = vector.load %arg4[%c0_299, %c18_300] : memref<4x36xf32, #tpu.memory_space<vmem>>, vector<4x1xf32>
    %847 = vector.extract_strided_slice %833 {offsets = [2, 0], sizes = [1, 256], strides = [1, 1]} : vector<4x256xf32> to vector<1x256xf32>
    %848 = vector.broadcast %846 : vector<4x1xf32> to vector<4x256xf32>
    %849 = vector.broadcast %847 : vector<1x256xf32> to vector<4x256xf32>
    %850 = arith.mulf %848, %849 : vector<4x256xf32>
    %851 = arith.addf %839, %850 : vector<4x256xf32>
    %c0_301 = arith.constant 0 : index
    %c19_302 = arith.constant 19 : index
    %852 = vector.load %arg4[%c0_301, %c19_302] : memref<4x36xf32, #tpu.memory_space<vmem>>, vector<4x1xf32>
    %853 = vector.extract_strided_slice %833 {offsets = [3, 0], sizes = [1, 256], strides = [1, 1]} : vector<4x256xf32> to vector<1x256xf32>
    %854 = vector.broadcast %852 : vector<4x1xf32> to vector<4x256xf32>
    %855 = vector.broadcast %853 : vector<1x256xf32> to vector<4x256xf32>
    %856 = arith.mulf %854, %855 : vector<4x256xf32>
    %857 = arith.addf %845, %856 : vector<4x256xf32>
    %c4_303 = arith.constant 4 : index
    %c129_304 = arith.constant 129 : index
    %858 = vector.load %arg8[%c4_303, %c129_304] : memref<8x512xf32, #tpu.memory_space<vmem>>, vector<4x256xf32>
    %859 = arith.mulf %858, %13 : vector<4x256xf32>
    %c0_305 = arith.constant 0 : index
    %c20_306 = arith.constant 20 : index
    %860 = vector.load %arg4[%c0_305, %c20_306] : memref<4x36xf32, #tpu.memory_space<vmem>>, vector<4x1xf32>
    %861 = vector.extract_strided_slice %859 {offsets = [0, 0], sizes = [1, 256], strides = [1, 1]} : vector<4x256xf32> to vector<1x256xf32>
    %862 = vector.broadcast %860 : vector<4x1xf32> to vector<4x256xf32>
    %863 = vector.broadcast %861 : vector<1x256xf32> to vector<4x256xf32>
    %864 = arith.mulf %862, %863 : vector<4x256xf32>
    %865 = arith.addf %851, %864 : vector<4x256xf32>
    %c0_307 = arith.constant 0 : index
    %c21_308 = arith.constant 21 : index
    %866 = vector.load %arg4[%c0_307, %c21_308] : memref<4x36xf32, #tpu.memory_space<vmem>>, vector<4x1xf32>
    %867 = vector.extract_strided_slice %859 {offsets = [1, 0], sizes = [1, 256], strides = [1, 1]} : vector<4x256xf32> to vector<1x256xf32>
    %868 = vector.broadcast %866 : vector<4x1xf32> to vector<4x256xf32>
    %869 = vector.broadcast %867 : vector<1x256xf32> to vector<4x256xf32>
    %870 = arith.mulf %868, %869 : vector<4x256xf32>
    %871 = arith.addf %857, %870 : vector<4x256xf32>
    %c0_309 = arith.constant 0 : index
    %c22_310 = arith.constant 22 : index
    %872 = vector.load %arg4[%c0_309, %c22_310] : memref<4x36xf32, #tpu.memory_space<vmem>>, vector<4x1xf32>
    %873 = vector.extract_strided_slice %859 {offsets = [2, 0], sizes = [1, 256], strides = [1, 1]} : vector<4x256xf32> to vector<1x256xf32>
    %874 = vector.broadcast %872 : vector<4x1xf32> to vector<4x256xf32>
    %875 = vector.broadcast %873 : vector<1x256xf32> to vector<4x256xf32>
    %876 = arith.mulf %874, %875 : vector<4x256xf32>
    %877 = arith.addf %865, %876 : vector<4x256xf32>
    %c0_311 = arith.constant 0 : index
    %c23_312 = arith.constant 23 : index
    %878 = vector.load %arg4[%c0_311, %c23_312] : memref<4x36xf32, #tpu.memory_space<vmem>>, vector<4x1xf32>
    %879 = vector.extract_strided_slice %859 {offsets = [3, 0], sizes = [1, 256], strides = [1, 1]} : vector<4x256xf32> to vector<1x256xf32>
    %880 = vector.broadcast %878 : vector<4x1xf32> to vector<4x256xf32>
    %881 = vector.broadcast %879 : vector<1x256xf32> to vector<4x256xf32>
    %882 = arith.mulf %880, %881 : vector<4x256xf32>
    %883 = arith.addf %871, %882 : vector<4x256xf32>
    %c4_313 = arith.constant 4 : index
    %c143_314 = arith.constant 143 : index
    %884 = vector.load %arg8[%c4_313, %c143_314] : memref<8x512xf32, #tpu.memory_space<vmem>>, vector<4x256xf32>
    %885 = arith.mulf %884, %10 : vector<4x256xf32>
    %c0_315 = arith.constant 0 : index
    %c24_316 = arith.constant 24 : index
    %886 = vector.load %arg4[%c0_315, %c24_316] : memref<4x36xf32, #tpu.memory_space<vmem>>, vector<4x1xf32>
    %887 = vector.extract_strided_slice %885 {offsets = [0, 0], sizes = [1, 256], strides = [1, 1]} : vector<4x256xf32> to vector<1x256xf32>
    %888 = vector.broadcast %886 : vector<4x1xf32> to vector<4x256xf32>
    %889 = vector.broadcast %887 : vector<1x256xf32> to vector<4x256xf32>
    %890 = arith.mulf %888, %889 : vector<4x256xf32>
    %891 = arith.addf %877, %890 : vector<4x256xf32>
    %c0_317 = arith.constant 0 : index
    %c25_318 = arith.constant 25 : index
    %892 = vector.load %arg4[%c0_317, %c25_318] : memref<4x36xf32, #tpu.memory_space<vmem>>, vector<4x1xf32>
    %893 = vector.extract_strided_slice %885 {offsets = [1, 0], sizes = [1, 256], strides = [1, 1]} : vector<4x256xf32> to vector<1x256xf32>
    %894 = vector.broadcast %892 : vector<4x1xf32> to vector<4x256xf32>
    %895 = vector.broadcast %893 : vector<1x256xf32> to vector<4x256xf32>
    %896 = arith.mulf %894, %895 : vector<4x256xf32>
    %897 = arith.addf %883, %896 : vector<4x256xf32>
    %c0_319 = arith.constant 0 : index
    %c26_320 = arith.constant 26 : index
    %898 = vector.load %arg4[%c0_319, %c26_320] : memref<4x36xf32, #tpu.memory_space<vmem>>, vector<4x1xf32>
    %899 = vector.extract_strided_slice %885 {offsets = [2, 0], sizes = [1, 256], strides = [1, 1]} : vector<4x256xf32> to vector<1x256xf32>
    %900 = vector.broadcast %898 : vector<4x1xf32> to vector<4x256xf32>
    %901 = vector.broadcast %899 : vector<1x256xf32> to vector<4x256xf32>
    %902 = arith.mulf %900, %901 : vector<4x256xf32>
    %903 = arith.addf %891, %902 : vector<4x256xf32>
    %c0_321 = arith.constant 0 : index
    %c27_322 = arith.constant 27 : index
    %904 = vector.load %arg4[%c0_321, %c27_322] : memref<4x36xf32, #tpu.memory_space<vmem>>, vector<4x1xf32>
    %905 = vector.extract_strided_slice %885 {offsets = [3, 0], sizes = [1, 256], strides = [1, 1]} : vector<4x256xf32> to vector<1x256xf32>
    %906 = vector.broadcast %904 : vector<4x1xf32> to vector<4x256xf32>
    %907 = vector.broadcast %905 : vector<1x256xf32> to vector<4x256xf32>
    %908 = arith.mulf %906, %907 : vector<4x256xf32>
    %909 = arith.addf %897, %908 : vector<4x256xf32>
    %c4_323 = arith.constant 4 : index
    %c144_324 = arith.constant 144 : index
    %910 = vector.load %arg8[%c4_323, %c144_324] : memref<8x512xf32, #tpu.memory_space<vmem>>, vector<4x256xf32>
    %c0_325 = arith.constant 0 : index
    %c28_326 = arith.constant 28 : index
    %911 = vector.load %arg4[%c0_325, %c28_326] : memref<4x36xf32, #tpu.memory_space<vmem>>, vector<4x1xf32>
    %912 = vector.extract_strided_slice %910 {offsets = [0, 0], sizes = [1, 256], strides = [1, 1]} : vector<4x256xf32> to vector<1x256xf32>
    %913 = vector.broadcast %911 : vector<4x1xf32> to vector<4x256xf32>
    %914 = vector.broadcast %912 : vector<1x256xf32> to vector<4x256xf32>
    %915 = arith.mulf %913, %914 : vector<4x256xf32>
    %916 = arith.addf %903, %915 : vector<4x256xf32>
    %c0_327 = arith.constant 0 : index
    %c29_328 = arith.constant 29 : index
    %917 = vector.load %arg4[%c0_327, %c29_328] : memref<4x36xf32, #tpu.memory_space<vmem>>, vector<4x1xf32>
    %918 = vector.extract_strided_slice %910 {offsets = [1, 0], sizes = [1, 256], strides = [1, 1]} : vector<4x256xf32> to vector<1x256xf32>
    %919 = vector.broadcast %917 : vector<4x1xf32> to vector<4x256xf32>
    %920 = vector.broadcast %918 : vector<1x256xf32> to vector<4x256xf32>
    %921 = arith.mulf %919, %920 : vector<4x256xf32>
    %922 = arith.addf %909, %921 : vector<4x256xf32>
    %c0_329 = arith.constant 0 : index
    %c30_330 = arith.constant 30 : index
    %923 = vector.load %arg4[%c0_329, %c30_330] : memref<4x36xf32, #tpu.memory_space<vmem>>, vector<4x1xf32>
    %924 = vector.extract_strided_slice %910 {offsets = [2, 0], sizes = [1, 256], strides = [1, 1]} : vector<4x256xf32> to vector<1x256xf32>
    %925 = vector.broadcast %923 : vector<4x1xf32> to vector<4x256xf32>
    %926 = vector.broadcast %924 : vector<1x256xf32> to vector<4x256xf32>
    %927 = arith.mulf %925, %926 : vector<4x256xf32>
    %928 = arith.addf %916, %927 : vector<4x256xf32>
    %c0_331 = arith.constant 0 : index
    %c31_332 = arith.constant 31 : index
    %929 = vector.load %arg4[%c0_331, %c31_332] : memref<4x36xf32, #tpu.memory_space<vmem>>, vector<4x1xf32>
    %930 = vector.extract_strided_slice %910 {offsets = [3, 0], sizes = [1, 256], strides = [1, 1]} : vector<4x256xf32> to vector<1x256xf32>
    %931 = vector.broadcast %929 : vector<4x1xf32> to vector<4x256xf32>
    %932 = vector.broadcast %930 : vector<1x256xf32> to vector<4x256xf32>
    %933 = arith.mulf %931, %932 : vector<4x256xf32>
    %934 = arith.addf %922, %933 : vector<4x256xf32>
    %c4_333 = arith.constant 4 : index
    %c145_334 = arith.constant 145 : index
    %935 = vector.load %arg8[%c4_333, %c145_334] : memref<8x512xf32, #tpu.memory_space<vmem>>, vector<4x256xf32>
    %936 = arith.mulf %935, %13 : vector<4x256xf32>
    %c0_335 = arith.constant 0 : index
    %c32_336 = arith.constant 32 : index
    %937 = vector.load %arg4[%c0_335, %c32_336] : memref<4x36xf32, #tpu.memory_space<vmem>>, vector<4x1xf32>
    %938 = vector.extract_strided_slice %936 {offsets = [0, 0], sizes = [1, 256], strides = [1, 1]} : vector<4x256xf32> to vector<1x256xf32>
    %939 = vector.broadcast %937 : vector<4x1xf32> to vector<4x256xf32>
    %940 = vector.broadcast %938 : vector<1x256xf32> to vector<4x256xf32>
    %941 = arith.mulf %939, %940 : vector<4x256xf32>
    %942 = arith.addf %928, %941 : vector<4x256xf32>
    %c0_337 = arith.constant 0 : index
    %c33_338 = arith.constant 33 : index
    %943 = vector.load %arg4[%c0_337, %c33_338] : memref<4x36xf32, #tpu.memory_space<vmem>>, vector<4x1xf32>
    %944 = vector.extract_strided_slice %936 {offsets = [1, 0], sizes = [1, 256], strides = [1, 1]} : vector<4x256xf32> to vector<1x256xf32>
    %945 = vector.broadcast %943 : vector<4x1xf32> to vector<4x256xf32>
    %946 = vector.broadcast %944 : vector<1x256xf32> to vector<4x256xf32>
    %947 = arith.mulf %945, %946 : vector<4x256xf32>
    %948 = arith.addf %934, %947 : vector<4x256xf32>
    %c0_339 = arith.constant 0 : index
    %c34_340 = arith.constant 34 : index
    %949 = vector.load %arg4[%c0_339, %c34_340] : memref<4x36xf32, #tpu.memory_space<vmem>>, vector<4x1xf32>
    %950 = vector.extract_strided_slice %936 {offsets = [2, 0], sizes = [1, 256], strides = [1, 1]} : vector<4x256xf32> to vector<1x256xf32>
    %951 = vector.broadcast %949 : vector<4x1xf32> to vector<4x256xf32>
    %952 = vector.broadcast %950 : vector<1x256xf32> to vector<4x256xf32>
    %953 = arith.mulf %951, %952 : vector<4x256xf32>
    %954 = arith.addf %942, %953 : vector<4x256xf32>
    %c0_341 = arith.constant 0 : index
    %c35_342 = arith.constant 35 : index
    %955 = vector.load %arg4[%c0_341, %c35_342] : memref<4x36xf32, #tpu.memory_space<vmem>>, vector<4x1xf32>
    %956 = vector.extract_strided_slice %936 {offsets = [3, 0], sizes = [1, 256], strides = [1, 1]} : vector<4x256xf32> to vector<1x256xf32>
    %957 = vector.broadcast %955 : vector<4x1xf32> to vector<4x256xf32>
    %958 = vector.broadcast %956 : vector<1x256xf32> to vector<4x256xf32>
    %959 = arith.mulf %957, %958 : vector<4x256xf32>
    %960 = arith.addf %948, %959 : vector<4x256xf32>
    %961 = arith.addf %954, %960 : vector<4x256xf32>
    %962 = tpu.concatenate %725, %961 in 0 : vector<4x256xf32>, vector<4x256xf32> -> vector<8x256xf32>
    %963 = arith.addf %4, %962 : vector<8x256xf32>
    %c0_343 = arith.constant 0 : index
    %c0_344 = arith.constant 0 : index
    %964 = vector.load %arg7[%c0_343, %c0_344] : memref<8x256xf32, #tpu.memory_space<vmem>>, vector<8x256xf32>
    tpu.vector_store %arg7[%c0_343, %c0_344], %963 {strides = array<i32>} : memref<8x256xf32, #tpu.memory_space<vmem>>, vector<8x256xf32>,
    return
  }
  func.func @transform_0(%arg0: i32) -> (i32, i32) {
    %c0_i32 = arith.constant 0 : i32
    %c0_i32_0 = arith.constant 0 : i32
    return %arg0, %c0_i32 : i32, i32
  }
  func.func @transform_1(%arg0: i32) -> (i32, i32) {
    %c0_i32 = arith.constant 0 : i32
    %c0_i32_0 = arith.constant 0 : i32
    %c0_i32_1 = arith.constant 0 : i32
    return %c0_i32, %c0_i32_0 : i32, i32
  }
  func.func @transform_2(%arg0: i32) -> (i32, i32) {
    %c0_i32 = arith.constant 0 : i32
    %c0_i32_0 = arith.constant 0 : i32
    %c0_i32_1 = arith.constant 0 : i32
    return %c0_i32, %c0_i32_0 : i32, i32
  }
  func.func @transform_3(%arg0: i32) -> (i32, i32) {
    %c0_i32 = arith.constant 0 : i32
    %c0_i32_0 = arith.constant 0 : i32
    %c0_i32_1 = arith.constant 0 : i32
    return %c0_i32, %c0_i32_0 : i32, i32
  }
  func.func @transform_4(%arg0: i32) -> (i32, i32) {
    %c0_i32 = arith.constant 0 : i32
    %c0_i32_0 = arith.constant 0 : i32
    %c0_i32_1 = arith.constant 0 : i32
    return %c0_i32, %c0_i32_0 : i32, i32
  }
  func.func @transform_5(%arg0: i32) -> (i32, i32) {
    %c0_i32 = arith.constant 0 : i32
    %c0_i32_0 = arith.constant 0 : i32
    %c0_i32_1 = arith.constant 0 : i32
    return %c0_i32, %c0_i32_0 : i32, i32
  }
  func.func @transform_6(%arg0: i32) -> (i32, i32) {
    %c0_i32 = arith.constant 0 : i32
    %c0_i32_0 = arith.constant 0 : i32
    return %arg0, %c0_i32 : i32, i32
  }
}

</mosaic_0001>

<llo_original>
// kernel: resblock_forward.1
$region0: #{resblock_forward.1}
  #allocation0 [shape = 'u32[]', space=smem, size = 0x4, offset = 0x4, fixed_abs, tag = 'smem constant byte address 0x4 - core index']
  #allocation1 [shape = 'u32[144,128]{1,0:T(1,128)}', space=vmem, size = 0x12000, scoped, tag = 'internal scratch']
  #allocation2 [shape = 'f32[8,512]{1,0:T(8,128)}', space=vmem, size = 0x4000, scoped, tag = 'scratch operand']
  %s0 = inlined_call_operand.vmem [shape: f32[8,256], index: 0, kind: input, shape index: {}]
  %s1 = inlined_call_operand.vmem [shape: f32[4,36], index: 1, kind: input, shape index: {}]
  %s2 = inlined_call_operand.vmem [shape: f32[4,1], index: 2, kind: input, shape index: {}]
  %s3 = inlined_call_operand.vmem [shape: f32[4,36], index: 3, kind: input, shape index: {}]
  %s4 = inlined_call_operand.vmem [shape: f32[4,1], index: 4, kind: input, shape index: {}]
  %s5 = inlined_call_operand.vmem [shape: f32[2,256], index: 5, kind: input, shape index: {}]
  %s6 = inlined_call_operand.vmem [shape: f32[8,256], index: 6, kind: output, shape index: {}]
  %s7 = sld [smem:[#allocation0]]
  $region34: #{resblock_forward.1} parent=0
    _
  %s9 = ssub.s32 1, %s7
  %s10 = scalar_select 0, %s9, %s7
  // Predicated region
  $region2: #{resblock_forward.1} parent=0 // pred_check
    _
  $region3: #{resblock_forward.1} parent=0 // pred_check_branch
    %12 = sbr.rel (0) target = $region5
  $region4: #{resblock_forward.1} parent=0 // pred_region
    _
  $region5: #{resblock_forward.1} parent=0 // pred_fallthru
    _
  // Predicated region
  $region6: #{resblock_forward.1} parent=0 // pred_check
    _
  $region7: #{resblock_forward.1} parent=0 // pred_check_branch
    %14 = sbr.rel (0) target = $region9
  $region8: #{resblock_forward.1} parent=0 // pred_region
    _
  $region9: #{resblock_forward.1} parent=0 // pred_fallthru
    _
  // Predicated region
  $region10: #{resblock_forward.1} parent=0 // pred_check
    _
  $region11: #{resblock_forward.1} parent=0 // pred_check_branch
    %16 = sbr.rel (0) target = $region13
  $region12: #{resblock_forward.1} parent=0 // pred_region
    _
  $region13: #{resblock_forward.1} parent=0 // pred_fallthru
    _
  // Predicated region
  $region14: #{resblock_forward.1} parent=0 // pred_check
    _
  $region15: #{resblock_forward.1} parent=0 // pred_check_branch
    %18 = sbr.rel (0) target = $region17
  $region16: #{resblock_forward.1} parent=0 // pred_region
    _
  $region17: #{resblock_forward.1} parent=0 // pred_fallthru
    _
  // Predicated region
  $region18: #{resblock_forward.1} parent=0 // pred_check
    _
  $region19: #{resblock_forward.1} parent=0 // pred_check_branch
    %20 = sbr.rel (0) target = $region21
  $region20: #{resblock_forward.1} parent=0 // pred_region
    _
  $region21: #{resblock_forward.1} parent=0 // pred_fallthru
    _
  // Predicated region
  $region22: #{resblock_forward.1} parent=0 // pred_check
    _
  $region23: #{resblock_forward.1} parent=0 // pred_check_branch
    %22 = sbr.rel (0) target = $region25
  $region24: #{resblock_forward.1} parent=0 // pred_region
    _
  $region25: #{resblock_forward.1} parent=0 // pred_fallthru
    _
  %23 = vst [vmem:[#allocation2] sm:$0xff] 0.0
  %24 = vst [vmem:[#allocation2 + $0x18] sm:$0xff] 0.0
  %v25 = vld [vmem:[%s0] sm:$0xff]
  %v26 = vld [vmem:[%s0 + $0x8] sm:$0xff]
  %v27 = vmax.f32 %v25, 0.0
  %v28 = vmax.f32 %v26, 0.0
  %29 = vst [vmem:[#allocation2 + $0x8] sm:$0xff] %v27
  %30 = vst [vmem:[#allocation2 + $0x10] sm:$0xff] %v28
  %v31 = vld [vmem:[%s5] ss:$2 sm:$0x3]
  %v33 = vlaneseq
  %v34 = vshrl.u32 %v33, 7
  %v35 = vsub.s32 0, %v34
  %v36 = vrot.slane %v31, %v35
  %v37 = vlaneseq
  %v38 = vshrl.u32 %v37, 7
  %v39 = vsub.s32 1, %v38
  %v40 = vrot.slane %v31, %v39
  %s41 = scalar_lea.vmem %s5, 1
  %v42 = vld [vmem:[%s41] ss:$2 sm:$0x3]
  %v44 = vlaneseq
  %v45 = vshrl.u32 %v44, 7
  %v46 = vsub.s32 0, %v45
  %v47 = vrot.slane %v42, %v46
  %v48 = vlaneseq
  %v49 = vshrl.u32 %v48, 7
  %v50 = vsub.s32 1, %v49
  %v51 = vrot.slane %v42, %v50
  %v52 = vld [vmem:[%s2] sm:$0xf]
  %54 = vset.pattern.permute.xlu0 0
  %55 = vperm.xlu0 %54, %v52
  %v56 = vpop.permute.xlu0 %55
  %v58 = vld [vmem:[#allocation2] sm:$0xf]
  %v59 = vld [vmem:[#allocation2 + $0x8] sm:$0xf]
  %v60 = vld [vmem:[#allocation2 + $0x10] sm:$0xf]
  %61 = vrot.lane.b32.xlu0 %v36, 111
  %v62 = vpop.permute.xlu0 %61
  %63 = vrot.lane.b32.xlu0 %v40, 111
  %v64 = vpop.permute.xlu0 %63
  %vm65 = vcmask 908288
  %v66 = vsel %vm65, %v62, %v64
  %v70 = vmul.f32 %v58, %v62
  %v71 = vmul.f32 %v59, %v66
  %v72 = vmul.f32 %v60, %v64
  %v73 = vld [vmem:[%s1] sm:$0xf]
  %75 = vset.pattern.permute.xlu0 0
  %76 = vperm.xlu0 %75, %v73
  %v77 = vpop.permute.xlu0 %76
  %v79 = vlaneseq
  %v80 = vshrl.u32 %v79, 7
  %v81 = vsub.s32 0, %v80
  %v82 = vrot.slane %v70, %v81
  %v83 = vlaneseq
  %v84 = vshrl.u32 %v83, 7
  %v85 = vsub.s32 0, %v84
  %v86 = vrot.slane %v71, %v85
  %v87 = vlaneseq
  %v88 = vshrl.u32 %v87, 7
  %v89 = vsub.s32 0, %v88
  %v90 = vrot.slane %v72, %v89
  %v91 = vmul.f32 %v77, %v82
  %v92 = vmul.f32 %v77, %v86
  %v93 = vmul.f32 %v77, %v90
  %v94 = vadd.f32 %v56, %v91
  %v95 = vadd.f32 %v56, %v92
  %v96 = vadd.f32 %v56, %v93
  %97 = vset.pattern.permute.xlu0 1
  %98 = vperm.xlu0 %97, %v73
  %v99 = vpop.permute.xlu0 %98
  %v101 = vlaneseq
  %v102 = vshrl.u32 %v101, 7
  %v103 = vsub.s32 1, %v102
  %v104 = vrot.slane %v70, %v103
  %v105 = vlaneseq
  %v106 = vshrl.u32 %v105, 7
  %v107 = vsub.s32 1, %v106
  %v108 = vrot.slane %v71, %v107
  %v109 = vlaneseq
  %v110 = vshrl.u32 %v109, 7
  %v111 = vsub.s32 1, %v110
  %v112 = vrot.slane %v72, %v111
  %v113 = vmul.f32 %v99, %v104
  %v114 = vmul.f32 %v99, %v108
  %v115 = vmul.f32 %v99, %v112
  %v116 = vadd.f32 %v113, 0.0
  %v117 = vadd.f32 %v114, 0.0
  %v118 = vadd.f32 %v115, 0.0
  %119 = vset.pattern.permute.xlu0 2
  %120 = vperm.xlu0 %119, %v73
  %v121 = vpop.permute.xlu0 %120
  %v123 = vlaneseq
  %v124 = vshrl.u32 %v123, 7
  %v125 = vsub.s32 2, %v124
  %v126 = vrot.slane %v70, %v125
  %v127 = vlaneseq
  %v128 = vshrl.u32 %v127, 7
  %v129 = vsub.s32 2, %v128
  %v130 = vrot.slane %v71, %v129
  %v131 = vlaneseq
  %v132 = vshrl.u32 %v131, 7
  %v133 = vsub.s32 2, %v132
  %v134 = vrot.slane %v72, %v133
  %v135 = vmul.f32 %v121, %v126
  %v136 = vmul.f32 %v121, %v130
  %v137 = vmul.f32 %v121, %v134
  %v138 = vadd.f32 %v94, %v135
  %v139 = vadd.f32 %v95, %v136
  %v140 = vadd.f32 %v96, %v137
  %141 = vset.pattern.permute.xlu0 3
  %142 = vperm.xlu0 %141, %v73
  %v143 = vpop.permute.xlu0 %142
  %v145 = vlaneseq
  %v146 = vshrl.u32 %v145, 7
  %v147 = vsub.s32 3, %v146
  %v148 = vrot.slane %v70, %v147
  %v149 = vlaneseq
  %v150 = vshrl.u32 %v149, 7
  %v151 = vsub.s32 3, %v150
  %v152 = vrot.slane %v71, %v151
  %v153 = vlaneseq
  %v154 = vshrl.u32 %v153, 7
  %v155 = vsub.s32 3, %v154
  %v156 = vrot.slane %v72, %v155
  %v157 = vmul.f32 %v143, %v148
  %v158 = vmul.f32 %v143, %v152
  %v159 = vmul.f32 %v143, %v156
  %v160 = vadd.f32 %v116, %v157
  %v161 = vadd.f32 %v117, %v158
  %v162 = vadd.f32 %v118, %v159
  %163 = vset.pattern.permute.xlu0 4
  %164 = vperm.xlu0 %163, %v73
  %v165 = vpop.permute.xlu0 %164
  %v167 = vlaneseq
  %v168 = vshrl.u32 %v167, 7
  %v169 = vsub.s32 0, %v168
  %v170 = vrot.slane %v58, %v169
  %v171 = vlaneseq
  %v172 = vshrl.u32 %v171, 7
  %v173 = vsub.s32 0, %v172
  %v174 = vrot.slane %v59, %v173
  %v175 = vlaneseq
  %v176 = vshrl.u32 %v175, 7
  %v177 = vsub.s32 0, %v176
  %v178 = vrot.slane %v60, %v177
  %v179 = vmul.f32 %v165, %v170
  %v180 = vmul.f32 %v165, %v174
  %v181 = vmul.f32 %v165, %v178
  %185 = vrot.lane.b32.xlu0 %v179, 127
  %v186 = vpop.permute.xlu0 %185
  %187 = vrot.lane.b32.xlu0 %v180, 127
  %v188 = vpop.permute.xlu0 %187
  %189 = vrot.lane.b32.xlu0 %v181, 127
  %v190 = vpop.permute.xlu0 %189
  %vm191 = vcmask 1039360
  %v192 = vsel %vm191, %v186, %v188
  %v193 = vsel %vm191, %v188, %v190
  %v197 = vadd.f32 %v138, %v192
  %v198 = vadd.f32 %v139, %v193
  %v199 = vadd.f32 %v140, %v190
  %200 = vset.pattern.permute.xlu0 5
  %201 = vperm.xlu0 %200, %v73
  %v202 = vpop.permute.xlu0 %201
  %v204 = vlaneseq
  %v205 = vshrl.u32 %v204, 7
  %v206 = vsub.s32 1, %v205
  %v207 = vrot.slane %v58, %v206
  %v208 = vlaneseq
  %v209 = vshrl.u32 %v208, 7
  %v210 = vsub.s32 1, %v209
  %v211 = vrot.slane %v59, %v210
  %v212 = vlaneseq
  %v213 = vshrl.u32 %v212, 7
  %v214 = vsub.s32 1, %v213
  %v215 = vrot.slane %v60, %v214
  %v216 = vmul.f32 %v202, %v207
  %v217 = vmul.f32 %v202, %v211
  %v218 = vmul.f32 %v202, %v215
  %222 = vrot.lane.b32.xlu0 %v216, 127
  %v223 = vpop.permute.xlu0 %222
  %224 = vrot.lane.b32.xlu0 %v217, 127
  %v225 = vpop.permute.xlu0 %224
  %226 = vrot.lane.b32.xlu0 %v218, 127
  %v227 = vpop.permute.xlu0 %226
  %v228 = vsel %vm191, %v223, %v225
  %v229 = vsel %vm191, %v225, %v227
  %v233 = vadd.f32 %v160, %v228
  %v234 = vadd.f32 %v161, %v229
  %v235 = vadd.f32 %v162, %v227
  %236 = vset.pattern.permute.xlu0 6
  %237 = vperm.xlu0 %236, %v73
  %v238 = vpop.permute.xlu0 %237
  %v240 = vlaneseq
  %v241 = vshrl.u32 %v240, 7
  %v242 = vsub.s32 2, %v241
  %v243 = vrot.slane %v58, %v242
  %v244 = vlaneseq
  %v245 = vshrl.u32 %v244, 7
  %v246 = vsub.s32 2, %v245
  %v247 = vrot.slane %v59, %v246
  %v248 = vlaneseq
  %v249 = vshrl.u32 %v248, 7
  %v250 = vsub.s32 2, %v249
  %v251 = vrot.slane %v60, %v250
  %v252 = vmul.f32 %v238, %v243
  %v253 = vmul.f32 %v238, %v247
  %v254 = vmul.f32 %v238, %v251
  %258 = vrot.lane.b32.xlu0 %v252, 127
  %v259 = vpop.permute.xlu0 %258
  %260 = vrot.lane.b32.xlu0 %v253, 127
  %v261 = vpop.permute.xlu0 %260
  %262 = vrot.lane.b32.xlu0 %v254, 127
  %v263 = vpop.permute.xlu0 %262
  %v264 = vsel %vm191, %v259, %v261
  %v265 = vsel %vm191, %v261, %v263
  %v269 = vadd.f32 %v197, %v264
  %v270 = vadd.f32 %v198, %v265
  %v271 = vadd.f32 %v199, %v263
  %272 = vset.pattern.permute.xlu0 7
  %273 = vperm.xlu0 %272, %v73
  %v274 = vpop.permute.xlu0 %273
  %v276 = vlaneseq
  %v277 = vshrl.u32 %v276, 7
  %v278 = vsub.s32 3, %v277
  %v279 = vrot.slane %v58, %v278
  %v280 = vlaneseq
  %v281 = vshrl.u32 %v280, 7
  %v282 = vsub.s32 3, %v281
  %v283 = vrot.slane %v59, %v282
  %v284 = vlaneseq
  %v285 = vshrl.u32 %v284, 7
  %v286 = vsub.s32 3, %v285
  %v287 = vrot.slane %v60, %v286
  %v288 = vmul.f32 %v274, %v279
  %v289 = vmul.f32 %v274, %v283
  %v290 = vmul.f32 %v274, %v287
  %294 = vrot.lane.b32.xlu0 %v288, 127
  %v295 = vpop.permute.xlu0 %294
  %296 = vrot.lane.b32.xlu0 %v289, 127
  %v297 = vpop.permute.xlu0 %296
  %298 = vrot.lane.b32.xlu0 %v290, 127
  %v299 = vpop.permute.xlu0 %298
  %v300 = vsel %vm191, %v295, %v297
  %v301 = vsel %vm191, %v297, %v299
  %v305 = vadd.f32 %v233, %v300
  %v306 = vadd.f32 %v234, %v301
  %v307 = vadd.f32 %v235, %v299
  %308 = vrot.lane.b32.xlu0 %v47, 113
  %v309 = vpop.permute.xlu0 %308
  %310 = vrot.lane.b32.xlu0 %v51, 113
  %v311 = vpop.permute.xlu0 %310
  %vm312 = vcmask 924672
  %v313 = vsel %vm312, %v309, %v311
  %v317 = vmul.f32 %v58, %v309
  %v318 = vmul.f32 %v59, %v313
  %v319 = vmul.f32 %v60, %v311
  %320 = vset.pattern.permute.xlu0 8
  %321 = vperm.xlu0 %320, %v73
  %v322 = vpop.permute.xlu0 %321
  %v324 = vlaneseq
  %v325 = vshrl.u32 %v324, 7
  %v326 = vsub.s32 0, %v325
  %v327 = vrot.slane %v317, %v326
  %v328 = vlaneseq
  %v329 = vshrl.u32 %v328, 7
  %v330 = vsub.s32 0, %v329
  %v331 = vrot.slane %v318, %v330
  %v332 = vlaneseq
  %v333 = vshrl.u32 %v332, 7
  %v334 = vsub.s32 0, %v333
  %v335 = vrot.slane %v319, %v334
  %v336 = vmul.f32 %v322, %v327
  %v337 = vmul.f32 %v322, %v331
  %v338 = vmul.f32 %v322, %v335
  %342 = vrot.lane.b32.xlu0 %v336, 126
  %v343 = vpop.permute.xlu0 %342
  %344 = vrot.lane.b32.xlu0 %v337, 126
  %v345 = vpop.permute.xlu0 %344
  %346 = vrot.lane.b32.xlu0 %v338, 126
  %v347 = vpop.permute.xlu0 %346
  %vm348 = vcmask 1031168
  %v349 = vsel %vm348, %v343, %v345
  %v350 = vsel %vm348, %v345, %v347
  %v354 = vadd.f32 %v269, %v349
  %v355 = vadd.f32 %v270, %v350
  %v356 = vadd.f32 %v271, %v347
  %357 = vset.pattern.permute.xlu0 9
  %358 = vperm.xlu0 %357, %v73
  %v359 = vpop.permute.xlu0 %358
  %v361 = vlaneseq
  %v362 = vshrl.u32 %v361, 7
  %v363 = vsub.s32 1, %v362
  %v364 = vrot.slane %v317, %v363
  %v365 = vlaneseq
  %v366 = vshrl.u32 %v365, 7
  %v367 = vsub.s32 1, %v366
  %v368 = vrot.slane %v318, %v367
  %v369 = vlaneseq
  %v370 = vshrl.u32 %v369, 7
  %v371 = vsub.s32 1, %v370
  %v372 = vrot.slane %v319, %v371
  %v373 = vmul.f32 %v359, %v364
  %v374 = vmul.f32 %v359, %v368
  %v375 = vmul.f32 %v359, %v372
  %379 = vrot.lane.b32.xlu0 %v373, 126
  %v380 = vpop.permute.xlu0 %379
  %381 = vrot.lane.b32.xlu0 %v374, 126
  %v382 = vpop.permute.xlu0 %381
  %383 = vrot.lane.b32.xlu0 %v375, 126
  %v384 = vpop.permute.xlu0 %383
  %v385 = vsel %vm348, %v380, %v382
  %v386 = vsel %vm348, %v382, %v384
  %v390 = vadd.f32 %v305, %v385
  %v391 = vadd.f32 %v306, %v386
  %v392 = vadd.f32 %v307, %v384
  %393 = vset.pattern.permute.xlu0 10
  %394 = vperm.xlu0 %393, %v73
  %v395 = vpop.permute.xlu0 %394
  %v397 = vlaneseq
  %v398 = vshrl.u32 %v397, 7
  %v399 = vsub.s32 2, %v398
  %v400 = vrot.slane %v317, %v399
  %v401 = vlaneseq
  %v402 = vshrl.u32 %v401, 7
  %v403 = vsub.s32 2, %v402
  %v404 = vrot.slane %v318, %v403
  %v405 = vlaneseq
  %v406 = vshrl.u32 %v405, 7
  %v407 = vsub.s32 2, %v406
  %v408 = vrot.slane %v319, %v407
  %v409 = vmul.f32 %v395, %v400
  %v410 = vmul.f32 %v395, %v404
  %v411 = vmul.f32 %v395, %v408
  %415 = vrot.lane.b32.xlu0 %v409, 126
  %v416 = vpop.permute.xlu0 %415
  %417 = vrot.lane.b32.xlu0 %v410, 126
  %v418 = vpop.permute.xlu0 %417
  %419 = vrot.lane.b32.xlu0 %v411, 126
  %v420 = vpop.permute.xlu0 %419
  %v421 = vsel %vm348, %v416, %v418
  %v422 = vsel %vm348, %v418, %v420
  %v426 = vadd.f32 %v354, %v421
  %v427 = vadd.f32 %v355, %v422
  %v428 = vadd.f32 %v356, %v420
  %429 = vset.pattern.permute.xlu0 11
  %430 = vperm.xlu0 %429, %v73
  %v431 = vpop.permute.xlu0 %430
  %v433 = vlaneseq
  %v434 = vshrl.u32 %v433, 7
  %v435 = vsub.s32 3, %v434
  %v436 = vrot.slane %v317, %v435
  %v437 = vlaneseq
  %v438 = vshrl.u32 %v437, 7
  %v439 = vsub.s32 3, %v438
  %v440 = vrot.slane %v318, %v439
  %v441 = vlaneseq
  %v442 = vshrl.u32 %v441, 7
  %v443 = vsub.s32 3, %v442
  %v444 = vrot.slane %v319, %v443
  %v445 = vmul.f32 %v431, %v436
  %v446 = vmul.f32 %v431, %v440
  %v447 = vmul.f32 %v431, %v444
  %451 = vrot.lane.b32.xlu0 %v445, 126
  %v452 = vpop.permute.xlu0 %451
  %453 = vrot.lane.b32.xlu0 %v446, 126
  %v454 = vpop.permute.xlu0 %453
  %455 = vrot.lane.b32.xlu0 %v447, 126
  %v456 = vpop.permute.xlu0 %455
  %v457 = vsel %vm348, %v452, %v454
  %v458 = vsel %vm348, %v454, %v456
  %v462 = vadd.f32 %v390, %v457
  %v463 = vadd.f32 %v391, %v458
  %v464 = vadd.f32 %v392, %v456
  %465 = vrot.lane.b32.xlu0 %v36, 127
  %v466 = vpop.permute.xlu0 %465
  %467 = vrot.lane.b32.xlu0 %v40, 127
  %v468 = vpop.permute.xlu0 %467
  %v469 = vsel %vm191, %v466, %v468
  %v473 = vmul.f32 %v58, %v466
  %v474 = vmul.f32 %v59, %v469
  %v475 = vmul.f32 %v60, %v468
  %476 = vset.pattern.permute.xlu0 12
  %477 = vperm.xlu0 %476, %v73
  %v478 = vpop.permute.xlu0 %477
  %v480 = vlaneseq
  %v481 = vshrl.u32 %v480, 7
  %v482 = vsub.s32 0, %v481
  %v483 = vrot.slane %v473, %v482
  %v484 = vlaneseq
  %v485 = vshrl.u32 %v484, 7
  %v486 = vsub.s32 0, %v485
  %v487 = vrot.slane %v474, %v486
  %v488 = vlaneseq
  %v489 = vshrl.u32 %v488, 7
  %v490 = vsub.s32 0, %v489
  %v491 = vrot.slane %v475, %v490
  %v492 = vmul.f32 %v478, %v483
  %v493 = vmul.f32 %v478, %v487
  %v494 = vmul.f32 %v478, %v491
  %498 = vrot.lane.b32.xlu0 %v492, 112
  %v499 = vpop.permute.xlu0 %498
  %500 = vrot.lane.b32.xlu0 %v493, 112
  %v501 = vpop.permute.xlu0 %500
  %502 = vrot.lane.b32.xlu0 %v494, 112
  %v503 = vpop.permute.xlu0 %502
  %vm504 = vcmask 916480
  %v505 = vsel %vm504, %v499, %v501
  %v506 = vsel %vm504, %v501, %v503
  %v510 = vadd.f32 %v426, %v505
  %v511 = vadd.f32 %v427, %v506
  %v512 = vadd.f32 %v428, %v503
  %513 = vset.pattern.permute.xlu0 13
  %514 = vperm.xlu0 %513, %v73
  %v515 = vpop.permute.xlu0 %514
  %v517 = vlaneseq
  %v518 = vshrl.u32 %v517, 7
  %v519 = vsub.s32 1, %v518
  %v520 = vrot.slane %v473, %v519
  %v521 = vlaneseq
  %v522 = vshrl.u32 %v521, 7
  %v523 = vsub.s32 1, %v522
  %v524 = vrot.slane %v474, %v523
  %v525 = vlaneseq
  %v526 = vshrl.u32 %v525, 7
  %v527 = vsub.s32 1, %v526
  %v528 = vrot.slane %v475, %v527
  %v529 = vmul.f32 %v515, %v520
  %v530 = vmul.f32 %v515, %v524
  %v531 = vmul.f32 %v515, %v528
  %535 = vrot.lane.b32.xlu0 %v529, 112
  %v536 = vpop.permute.xlu0 %535
  %537 = vrot.lane.b32.xlu0 %v530, 112
  %v538 = vpop.permute.xlu0 %537
  %539 = vrot.lane.b32.xlu0 %v531, 112
  %v540 = vpop.permute.xlu0 %539
  %v541 = vsel %vm504, %v536, %v538
  %v542 = vsel %vm504, %v538, %v540
  %v546 = vadd.f32 %v462, %v541
  %v547 = vadd.f32 %v463, %v542
  %v548 = vadd.f32 %v464, %v540
  %549 = vset.pattern.permute.xlu0 14
  %550 = vperm.xlu0 %549, %v73
  %v551 = vpop.permute.xlu0 %550
  %v553 = vlaneseq
  %v554 = vshrl.u32 %v553, 7
  %v555 = vsub.s32 2, %v554
  %v556 = vrot.slane %v473, %v555
  %v557 = vlaneseq
  %v558 = vshrl.u32 %v557, 7
  %v559 = vsub.s32 2, %v558
  %v560 = vrot.slane %v474, %v559
  %v561 = vlaneseq
  %v562 = vshrl.u32 %v561, 7
  %v563 = vsub.s32 2, %v562
  %v564 = vrot.slane %v475, %v563
  %v565 = vmul.f32 %v551, %v556
  %v566 = vmul.f32 %v551, %v560
  %v567 = vmul.f32 %v551, %v564
  %571 = vrot.lane.b32.xlu0 %v565, 112
  %v572 = vpop.permute.xlu0 %571
  %573 = vrot.lane.b32.xlu0 %v566, 112
  %v574 = vpop.permute.xlu0 %573
  %575 = vrot.lane.b32.xlu0 %v567, 112
  %v576 = vpop.permute.xlu0 %575
  %v577 = vsel %vm504, %v572, %v574
  %v578 = vsel %vm504, %v574, %v576
  %v582 = vadd.f32 %v510, %v577
  %v583 = vadd.f32 %v511, %v578
  %v584 = vadd.f32 %v512, %v576
  %585 = vset.pattern.permute.xlu0 15
  %586 = vperm.xlu0 %585, %v73
  %v587 = vpop.permute.xlu0 %586
  %v589 = vlaneseq
  %v590 = vshrl.u32 %v589, 7
  %v591 = vsub.s32 3, %v590
  %v592 = vrot.slane %v473, %v591
  %v593 = vlaneseq
  %v594 = vshrl.u32 %v593, 7
  %v595 = vsub.s32 3, %v594
  %v596 = vrot.slane %v474, %v595
  %v597 = vlaneseq
  %v598 = vshrl.u32 %v597, 7
  %v599 = vsub.s32 3, %v598
  %v600 = vrot.slane %v475, %v599
  %v601 = vmul.f32 %v587, %v592
  %v602 = vmul.f32 %v587, %v596
  %v603 = vmul.f32 %v587, %v600
  %607 = vrot.lane.b32.xlu0 %v601, 112
  %v608 = vpop.permute.xlu0 %607
  %609 = vrot.lane.b32.xlu0 %v602, 112
  %v610 = vpop.permute.xlu0 %609
  %611 = vrot.lane.b32.xlu0 %v603, 112
  %v612 = vpop.permute.xlu0 %611
  %v613 = vsel %vm504, %v608, %v610
  %v614 = vsel %vm504, %v610, %v612
  %v618 = vadd.f32 %v546, %v613
  %v619 = vadd.f32 %v547, %v614
  %v620 = vadd.f32 %v548, %v612
  %621 = vset.pattern.permute.xlu0 16
  %622 = vperm.xlu0 %621, %v73
  %v623 = vpop.permute.xlu0 %622
  %v625 = vmul.f32 %v623, %v174
  %v626 = vmul.f32 %v623, %v178
  %629 = vrot.lane.b32.xlu0 %v625, 111
  %v630 = vpop.permute.xlu0 %629
  %631 = vrot.lane.b32.xlu0 %v626, 111
  %v632 = vpop.permute.xlu0 %631
  %v633 = vsel %vm65, %v630, %v632
  %v637 = vadd.f32 %v582, %v630
  %v638 = vadd.f32 %v583, %v633
  %v639 = vadd.f32 %v584, %v632
  %640 = vset.pattern.permute.xlu0 17
  %641 = vperm.xlu0 %640, %v73
  %v642 = vpop.permute.xlu0 %641
  %v644 = vmul.f32 %v642, %v211
  %v645 = vmul.f32 %v642, %v215
  %648 = vrot.lane.b32.xlu0 %v644, 111
  %v649 = vpop.permute.xlu0 %648
  %650 = vrot.lane.b32.xlu0 %v645, 111
  %v651 = vpop.permute.xlu0 %650
  %v652 = vsel %vm65, %v649, %v651
  %v656 = vadd.f32 %v618, %v649
  %v657 = vadd.f32 %v619, %v652
  %v658 = vadd.f32 %v620, %v651
  %659 = vset.pattern.permute.xlu0 18
  %660 = vperm.xlu0 %659, %v73
  %v661 = vpop.permute.xlu0 %660
  %v663 = vmul.f32 %v661, %v247
  %v664 = vmul.f32 %v661, %v251
  %667 = vrot.lane.b32.xlu0 %v663, 111
  %v668 = vpop.permute.xlu0 %667
  %669 = vrot.lane.b32.xlu0 %v664, 111
  %v670 = vpop.permute.xlu0 %669
  %v671 = vsel %vm65, %v668, %v670
  %v675 = vadd.f32 %v637, %v668
  %v676 = vadd.f32 %v638, %v671
  %v677 = vadd.f32 %v639, %v670
  %678 = vset.pattern.permute.xlu0 19
  %679 = vperm.xlu0 %678, %v73
  %v680 = vpop.permute.xlu0 %679
  %v682 = vmul.f32 %v680, %v283
  %v683 = vmul.f32 %v680, %v287
  %686 = vrot.lane.b32.xlu0 %v682, 111
  %v687 = vpop.permute.xlu0 %686
  %688 = vrot.lane.b32.xlu0 %v683, 111
  %v689 = vpop.permute.xlu0 %688
  %v690 = vsel %vm65, %v687, %v689
  %v694 = vadd.f32 %v656, %v687
  %v695 = vadd.f32 %v657, %v690
  %v696 = vadd.f32 %v658, %v689
  %v697 = vld [vmem:[#allocation2 + $0x8] sm:$0xf]
  %v698 = vld [vmem:[#allocation2 + $0x10] sm:$0xf]
  %v699 = vld [vmem:[#allocation2 + $0x18] sm:$0xf]
  %700 = vrot.lane.b32.xlu0 %v47, 1
  %v701 = vpop.permute.xlu0 %700
  %702 = vrot.lane.b32.xlu0 %v51, 1
  %v703 = vpop.permute.xlu0 %702
  %vm704 = vcmask 7168
  %v705 = vsel %vm704, %v701, %v703
  %v709 = vmul.f32 %v697, %v701
  %v710 = vmul.f32 %v698, %v705
  %v711 = vmul.f32 %v699, %v703
  %712 = vset.pattern.permute.xlu0 20
  %713 = vperm.xlu0 %712, %v73
  %v714 = vpop.permute.xlu0 %713
  %v716 = vlaneseq
  %v717 = vshrl.u32 %v716, 7
  %v718 = vsub.s32 0, %v717
  %v719 = vrot.slane %v709, %v718
  %v720 = vlaneseq
  %v721 = vshrl.u32 %v720, 7
  %v722 = vsub.s32 0, %v721
  %v723 = vrot.slane %v710, %v722
  %v724 = vlaneseq
  %v725 = vshrl.u32 %v724, 7
  %v726 = vsub.s32 0, %v725
  %v727 = vrot.slane %v711, %v726
  %v728 = vmul.f32 %v714, %v719
  %v729 = vmul.f32 %v714, %v723
  %v730 = vmul.f32 %v714, %v727
  %734 = vrot.lane.b32.xlu0 %v728, 110
  %v735 = vpop.permute.xlu0 %734
  %736 = vrot.lane.b32.xlu0 %v729, 110
  %v737 = vpop.permute.xlu0 %736
  %738 = vrot.lane.b32.xlu0 %v730, 110
  %v739 = vpop.permute.xlu0 %738
  %vm740 = vcmask 900096
  %v741 = vsel %vm740, %v735, %v737
  %v742 = vsel %vm740, %v737, %v739
  %v746 = vadd.f32 %v675, %v735
  %v747 = vadd.f32 %v676, %v741
  %v748 = vadd.f32 %v677, %v742
  %749 = vset.pattern.permute.xlu0 21
  %750 = vperm.xlu0 %749, %v73
  %v751 = vpop.permute.xlu0 %750
  %v753 = vlaneseq
  %v754 = vshrl.u32 %v753, 7
  %v755 = vsub.s32 1, %v754
  %v756 = vrot.slane %v709, %v755
  %v757 = vlaneseq
  %v758 = vshrl.u32 %v757, 7
  %v759 = vsub.s32 1, %v758
  %v760 = vrot.slane %v710, %v759
  %v761 = vlaneseq
  %v762 = vshrl.u32 %v761, 7
  %v763 = vsub.s32 1, %v762
  %v764 = vrot.slane %v711, %v763
  %v765 = vmul.f32 %v751, %v756
  %v766 = vmul.f32 %v751, %v760
  %v767 = vmul.f32 %v751, %v764
  %771 = vrot.lane.b32.xlu0 %v765, 110
  %v772 = vpop.permute.xlu0 %771
  %773 = vrot.lane.b32.xlu0 %v766, 110
  %v774 = vpop.permute.xlu0 %773
  %775 = vrot.lane.b32.xlu0 %v767, 110
  %v776 = vpop.permute.xlu0 %775
  %v777 = vsel %vm740, %v772, %v774
  %v778 = vsel %vm740, %v774, %v776
  %v782 = vadd.f32 %v694, %v772
  %v783 = vadd.f32 %v695, %v777
  %v784 = vadd.f32 %v696, %v778
  %785 = vset.pattern.permute.xlu0 22
  %786 = vperm.xlu0 %785, %v73
  %v787 = vpop.permute.xlu0 %786
  %v789 = vlaneseq
  %v790 = vshrl.u32 %v789, 7
  %v791 = vsub.s32 2, %v790
  %v792 = vrot.slane %v709, %v791
  %v793 = vlaneseq
  %v794 = vshrl.u32 %v793, 7
  %v795 = vsub.s32 2, %v794
  %v796 = vrot.slane %v710, %v795
  %v797 = vlaneseq
  %v798 = vshrl.u32 %v797, 7
  %v799 = vsub.s32 2, %v798
  %v800 = vrot.slane %v711, %v799
  %v801 = vmul.f32 %v787, %v792
  %v802 = vmul.f32 %v787, %v796
  %v803 = vmul.f32 %v787, %v800
  %807 = vrot.lane.b32.xlu0 %v801, 110
  %v808 = vpop.permute.xlu0 %807
  %809 = vrot.lane.b32.xlu0 %v802, 110
  %v810 = vpop.permute.xlu0 %809
  %811 = vrot.lane.b32.xlu0 %v803, 110
  %v812 = vpop.permute.xlu0 %811
  %v813 = vsel %vm740, %v808, %v810
  %v814 = vsel %vm740, %v810, %v812
  %v818 = vadd.f32 %v746, %v808
  %v819 = vadd.f32 %v747, %v813
  %v820 = vadd.f32 %v748, %v814
  %821 = vset.pattern.permute.xlu0 23
  %822 = vperm.xlu0 %821, %v73
  %v823 = vpop.permute.xlu0 %822
  %v825 = vlaneseq
  %v826 = vshrl.u32 %v825, 7
  %v827 = vsub.s32 3, %v826
  %v828 = vrot.slane %v709, %v827
  %v829 = vlaneseq
  %v830 = vshrl.u32 %v829, 7
  %v831 = vsub.s32 3, %v830
  %v832 = vrot.slane %v710, %v831
  %v833 = vlaneseq
  %v834 = vshrl.u32 %v833, 7
  %v835 = vsub.s32 3, %v834
  %v836 = vrot.slane %v711, %v835
  %v837 = vmul.f32 %v823, %v828
  %v838 = vmul.f32 %v823, %v832
  %v839 = vmul.f32 %v823, %v836
  %843 = vrot.lane.b32.xlu0 %v837, 110
  %v844 = vpop.permute.xlu0 %843
  %845 = vrot.lane.b32.xlu0 %v838, 110
  %v846 = vpop.permute.xlu0 %845
  %847 = vrot.lane.b32.xlu0 %v839, 110
  %v848 = vpop.permute.xlu0 %847
  %v849 = vsel %vm740, %v844, %v846
  %v850 = vsel %vm740, %v846, %v848
  %v854 = vadd.f32 %v782, %v844
  %v855 = vadd.f32 %v783, %v849
  %v856 = vadd.f32 %v784, %v850
  %857 = vrot.lane.b32.xlu0 %v36, 15
  %v858 = vpop.permute.xlu0 %857
  %859 = vrot.lane.b32.xlu0 %v40, 15
  %v860 = vpop.permute.xlu0 %859
  %vm861 = vcmask 121856
  %v862 = vsel %vm861, %v858, %v860
  %v866 = vmul.f32 %v697, %v858
  %v867 = vmul.f32 %v698, %v862
  %v868 = vmul.f32 %v699, %v860
  %869 = vset.pattern.permute.xlu0 24
  %870 = vperm.xlu0 %869, %v73
  %v871 = vpop.permute.xlu0 %870
  %v873 = vlaneseq
  %v874 = vshrl.u32 %v873, 7
  %v875 = vsub.s32 0, %v874
  %v876 = vrot.slane %v866, %v875
  %v877 = vlaneseq
  %v878 = vshrl.u32 %v877, 7
  %v879 = vsub.s32 0, %v878
  %v880 = vrot.slane %v867, %v879
  %v881 = vlaneseq
  %v882 = vshrl.u32 %v881, 7
  %v883 = vsub.s32 0, %v882
  %v884 = vrot.slane %v868, %v883
  %v885 = vmul.f32 %v871, %v876
  %v886 = vmul.f32 %v871, %v880
  %v887 = vmul.f32 %v871, %v884
  %891 = vrot.lane.b32.xlu0 %v885, 96
  %v892 = vpop.permute.xlu0 %891
  %893 = vrot.lane.b32.xlu0 %v886, 96
  %v894 = vpop.permute.xlu0 %893
  %895 = vrot.lane.b32.xlu0 %v887, 96
  %v896 = vpop.permute.xlu0 %895
  %vm897 = vcmask 785408
  %v898 = vsel %vm897, %v892, %v894
  %v899 = vsel %vm897, %v894, %v896
  %v903 = vadd.f32 %v818, %v892
  %v904 = vadd.f32 %v819, %v898
  %v905 = vadd.f32 %v820, %v899
  %906 = vset.pattern.permute.xlu0 25
  %907 = vperm.xlu0 %906, %v73
  %v908 = vpop.permute.xlu0 %907
  %v910 = vlaneseq
  %v911 = vshrl.u32 %v910, 7
  %v912 = vsub.s32 1, %v911
  %v913 = vrot.slane %v866, %v912
  %v914 = vlaneseq
  %v915 = vshrl.u32 %v914, 7
  %v916 = vsub.s32 1, %v915
  %v917 = vrot.slane %v867, %v916
  %v918 = vlaneseq
  %v919 = vshrl.u32 %v918, 7
  %v920 = vsub.s32 1, %v919
  %v921 = vrot.slane %v868, %v920
  %v922 = vmul.f32 %v908, %v913
  %v923 = vmul.f32 %v908, %v917
  %v924 = vmul.f32 %v908, %v921
  %928 = vrot.lane.b32.xlu0 %v922, 96
  %v929 = vpop.permute.xlu0 %928
  %930 = vrot.lane.b32.xlu0 %v923, 96
  %v931 = vpop.permute.xlu0 %930
  %932 = vrot.lane.b32.xlu0 %v924, 96
  %v933 = vpop.permute.xlu0 %932
  %v934 = vsel %vm897, %v929, %v931
  %v935 = vsel %vm897, %v931, %v933
  %v939 = vadd.f32 %v854, %v929
  %v940 = vadd.f32 %v855, %v934
  %v941 = vadd.f32 %v856, %v935
  %942 = vset.pattern.permute.xlu0 26
  %943 = vperm.xlu0 %942, %v73
  %v944 = vpop.permute.xlu0 %943
  %v946 = vlaneseq
  %v947 = vshrl.u32 %v946, 7
  %v948 = vsub.s32 2, %v947
  %v949 = vrot.slane %v866, %v948
  %v950 = vlaneseq
  %v951 = vshrl.u32 %v950, 7
  %v952 = vsub.s32 2, %v951
  %v953 = vrot.slane %v867, %v952
  %v954 = vlaneseq
  %v955 = vshrl.u32 %v954, 7
  %v956 = vsub.s32 2, %v955
  %v957 = vrot.slane %v868, %v956
  %v958 = vmul.f32 %v944, %v949
  %v959 = vmul.f32 %v944, %v953
  %v960 = vmul.f32 %v944, %v957
  %964 = vrot.lane.b32.xlu0 %v958, 96
  %v965 = vpop.permute.xlu0 %964
  %966 = vrot.lane.b32.xlu0 %v959, 96
  %v967 = vpop.permute.xlu0 %966
  %968 = vrot.lane.b32.xlu0 %v960, 96
  %v969 = vpop.permute.xlu0 %968
  %v970 = vsel %vm897, %v965, %v967
  %v971 = vsel %vm897, %v967, %v969
  %v975 = vadd.f32 %v903, %v965
  %v976 = vadd.f32 %v904, %v970
  %v977 = vadd.f32 %v905, %v971
  %978 = vset.pattern.permute.xlu0 27
  %979 = vperm.xlu0 %978, %v73
  %v980 = vpop.permute.xlu0 %979
  %v982 = vlaneseq
  %v983 = vshrl.u32 %v982, 7
  %v984 = vsub.s32 3, %v983
  %v985 = vrot.slane %v866, %v984
  %v986 = vlaneseq
  %v987 = vshrl.u32 %v986, 7
  %v988 = vsub.s32 3, %v987
  %v989 = vrot.slane %v867, %v988
  %v990 = vlaneseq
  %v991 = vshrl.u32 %v990, 7
  %v992 = vsub.s32 3, %v991
  %v993 = vrot.slane %v868, %v992
  %v994 = vmul.f32 %v980, %v985
  %v995 = vmul.f32 %v980, %v989
  %v996 = vmul.f32 %v980, %v993
  %1000 = vrot.lane.b32.xlu0 %v994, 96
  %v1001 = vpop.permute.xlu0 %1000
  %1002 = vrot.lane.b32.xlu0 %v995, 96
  %v1003 = vpop.permute.xlu0 %1002
  %1004 = vrot.lane.b32.xlu0 %v996, 96
  %v1005 = vpop.permute.xlu0 %1004
  %v1006 = vsel %vm897, %v1001, %v1003
  %v1007 = vsel %vm897, %v1003, %v1005
  %v1011 = vadd.f32 %v939, %v1001
  %v1012 = vadd.f32 %v940, %v1006
  %v1013 = vadd.f32 %v941, %v1007
  %1014 = vset.pattern.permute.xlu0 28
  %1015 = vperm.xlu0 %1014, %v73
  %v1016 = vpop.permute.xlu0 %1015
  %v1018 = vlaneseq
  %v1019 = vshrl.u32 %v1018, 7
  %v1020 = vsub.s32 0, %v1019
  %v1021 = vrot.slane %v697, %v1020
  %v1022 = vlaneseq
  %v1023 = vshrl.u32 %v1022, 7
  %v1024 = vsub.s32 0, %v1023
  %v1025 = vrot.slane %v698, %v1024
  %v1026 = vlaneseq
  %v1027 = vshrl.u32 %v1026, 7
  %v1028 = vsub.s32 0, %v1027
  %v1029 = vrot.slane %v699, %v1028
  %v1030 = vmul.f32 %v1016, %v1021
  %v1031 = vmul.f32 %v1016, %v1025
  %v1032 = vmul.f32 %v1016, %v1029
  %1036 = vrot.lane.b32.xlu0 %v1030, 95
  %v1037 = vpop.permute.xlu0 %1036
  %1038 = vrot.lane.b32.xlu0 %v1031, 95
  %v1039 = vpop.permute.xlu0 %1038
  %1040 = vrot.lane.b32.xlu0 %v1032, 95
  %v1041 = vpop.permute.xlu0 %1040
  %vm1042 = vcmask 777216
  %v1043 = vsel %vm1042, %v1037, %v1039
  %v1044 = vsel %vm1042, %v1039, %v1041
  %v1048 = vadd.f32 %v975, %v1037
  %v1049 = vadd.f32 %v976, %v1043
  %v1050 = vadd.f32 %v977, %v1044
  %1051 = vset.pattern.permute.xlu0 29
  %1052 = vperm.xlu0 %1051, %v73
  %v1053 = vpop.permute.xlu0 %1052
  %v1055 = vlaneseq
  %v1056 = vshrl.u32 %v1055, 7
  %v1057 = vsub.s32 1, %v1056
  %v1058 = vrot.slane %v697, %v1057
  %v1059 = vlaneseq
  %v1060 = vshrl.u32 %v1059, 7
  %v1061 = vsub.s32 1, %v1060
  %v1062 = vrot.slane %v698, %v1061
  %v1063 = vlaneseq
  %v1064 = vshrl.u32 %v1063, 7
  %v1065 = vsub.s32 1, %v1064
  %v1066 = vrot.slane %v699, %v1065
  %v1067 = vmul.f32 %v1053, %v1058
  %v1068 = vmul.f32 %v1053, %v1062
  %v1069 = vmul.f32 %v1053, %v1066
  %1073 = vrot.lane.b32.xlu0 %v1067, 95
  %v1074 = vpop.permute.xlu0 %1073
  %1075 = vrot.lane.b32.xlu0 %v1068, 95
  %v1076 = vpop.permute.xlu0 %1075
  %1077 = vrot.lane.b32.xlu0 %v1069, 95
  %v1078 = vpop.permute.xlu0 %1077
  %v1079 = vsel %vm1042, %v1074, %v1076
  %v1080 = vsel %vm1042, %v1076, %v1078
  %v1084 = vadd.f32 %v1011, %v1074
  %v1085 = vadd.f32 %v1012, %v1079
  %v1086 = vadd.f32 %v1013, %v1080
  %1087 = vset.pattern.permute.xlu0 30
  %1088 = vperm.xlu0 %1087, %v73
  %v1089 = vpop.permute.xlu0 %1088
  %v1091 = vlaneseq
  %v1092 = vshrl.u32 %v1091, 7
  %v1093 = vsub.s32 2, %v1092
  %v1094 = vrot.slane %v697, %v1093
  %v1095 = vlaneseq
  %v1096 = vshrl.u32 %v1095, 7
  %v1097 = vsub.s32 2, %v1096
  %v1098 = vrot.slane %v698, %v1097
  %v1099 = vlaneseq
  %v1100 = vshrl.u32 %v1099, 7
  %v1101 = vsub.s32 2, %v1100
  %v1102 = vrot.slane %v699, %v1101
  %v1103 = vmul.f32 %v1089, %v1094
  %v1104 = vmul.f32 %v1089, %v1098
  %v1105 = vmul.f32 %v1089, %v1102
  %1109 = vrot.lane.b32.xlu0 %v1103, 95
  %v1110 = vpop.permute.xlu0 %1109
  %1111 = vrot.lane.b32.xlu0 %v1104, 95
  %v1112 = vpop.permute.xlu0 %1111
  %1113 = vrot.lane.b32.xlu0 %v1105, 95
  %v1114 = vpop.permute.xlu0 %1113
  %v1115 = vsel %vm1042, %v1110, %v1112
  %v1116 = vsel %vm1042, %v1112, %v1114
  %v1120 = vadd.f32 %v1048, %v1110
  %v1121 = vadd.f32 %v1049, %v1115
  %v1122 = vadd.f32 %v1050, %v1116
  %1123 = vset.pattern.permute.xlu0 31
  %1124 = vperm.xlu0 %1123, %v73
  %v1125 = vpop.permute.xlu0 %1124
  %v1127 = vlaneseq
  %v1128 = vshrl.u32 %v1127, 7
  %v1129 = vsub.s32 3, %v1128
  %v1130 = vrot.slane %v697, %v1129
  %v1131 = vlaneseq
  %v1132 = vshrl.u32 %v1131, 7
  %v1133 = vsub.s32 3, %v1132
  %v1134 = vrot.slane %v698, %v1133
  %v1135 = vlaneseq
  %v1136 = vshrl.u32 %v1135, 7
  %v1137 = vsub.s32 3, %v1136
  %v1138 = vrot.slane %v699, %v1137
  %v1139 = vmul.f32 %v1125, %v1130
  %v1140 = vmul.f32 %v1125, %v1134
  %v1141 = vmul.f32 %v1125, %v1138
  %1145 = vrot.lane.b32.xlu0 %v1139, 95
  %v1146 = vpop.permute.xlu0 %1145
  %1147 = vrot.lane.b32.xlu0 %v1140, 95
  %v1148 = vpop.permute.xlu0 %1147
  %1149 = vrot.lane.b32.xlu0 %v1141, 95
  %v1150 = vpop.permute.xlu0 %1149
  %v1151 = vsel %vm1042, %v1146, %v1148
  %v1152 = vsel %vm1042, %v1148, %v1150
  %v1156 = vadd.f32 %v1084, %v1146
  %v1157 = vadd.f32 %v1085, %v1151
  %v1158 = vadd.f32 %v1086, %v1152
  %1159 = vrot.lane.b32.xlu0 %v47, 17
  %v1160 = vpop.permute.xlu0 %1159
  %1161 = vrot.lane.b32.xlu0 %v51, 17
  %v1162 = vpop.permute.xlu0 %1161
  %vm1163 = vcmask 138240
  %v1164 = vsel %vm1163, %v1160, %v1162
  %v1168 = vmul.f32 %v697, %v1160
  %v1169 = vmul.f32 %v698, %v1164
  %v1170 = vmul.f32 %v699, %v1162
  %1171 = vset.pattern.permute.xlu0 32
  %1172 = vperm.xlu0 %1171, %v73
  %v1173 = vpop.permute.xlu0 %1172
  %v1175 = vlaneseq
  %v1176 = vshrl.u32 %v1175, 7
  %v1177 = vsub.s32 0, %v1176
  %v1178 = vrot.slane %v1168, %v1177
  %v1179 = vlaneseq
  %v1180 = vshrl.u32 %v1179, 7
  %v1181 = vsub.s32 0, %v1180
  %v1182 = vrot.slane %v1169, %v1181
  %v1183 = vlaneseq
  %v1184 = vshrl.u32 %v1183, 7
  %v1185 = vsub.s32 0, %v1184
  %v1186 = vrot.slane %v1170, %v1185
  %v1187 = vmul.f32 %v1173, %v1178
  %v1188 = vmul.f32 %v1173, %v1182
  %v1189 = vmul.f32 %v1173, %v1186
  %1193 = vrot.lane.b32.xlu0 %v1187, 94
  %v1194 = vpop.permute.xlu0 %1193
  %1195 = vrot.lane.b32.xlu0 %v1188, 94
  %v1196 = vpop.permute.xlu0 %1195
  %1197 = vrot.lane.b32.xlu0 %v1189, 94
  %v1198 = vpop.permute.xlu0 %1197
  %vm1199 = vcmask 769024
  %v1200 = vsel %vm1199, %v1194, %v1196
  %v1201 = vsel %vm1199, %v1196, %v1198
  %v1205 = vadd.f32 %v1120, %v1194
  %v1206 = vadd.f32 %v1121, %v1200
  %v1207 = vadd.f32 %v1122, %v1201
  %1208 = vset.pattern.permute.xlu0 33
  %1209 = vperm.xlu0 %1208, %v73
  %v1210 = vpop.permute.xlu0 %1209
  %v1212 = vlaneseq
  %v1213 = vshrl.u32 %v1212, 7
  %v1214 = vsub.s32 1, %v1213
  %v1215 = vrot.slane %v1168, %v1214
  %v1216 = vlaneseq
  %v1217 = vshrl.u32 %v1216, 7
  %v1218 = vsub.s32 1, %v1217
  %v1219 = vrot.slane %v1169, %v1218
  %v1220 = vlaneseq
  %v1221 = vshrl.u32 %v1220, 7
  %v1222 = vsub.s32 1, %v1221
  %v1223 = vrot.slane %v1170, %v1222
  %v1224 = vmul.f32 %v1210, %v1215
  %v1225 = vmul.f32 %v1210, %v1219
  %v1226 = vmul.f32 %v1210, %v1223
  %1230 = vrot.lane.b32.xlu0 %v1224, 94
  %v1231 = vpop.permute.xlu0 %1230
  %1232 = vrot.lane.b32.xlu0 %v1225, 94
  %v1233 = vpop.permute.xlu0 %1232
  %1234 = vrot.lane.b32.xlu0 %v1226, 94
  %v1235 = vpop.permute.xlu0 %1234
  %v1236 = vsel %vm1199, %v1231, %v1233
  %v1237 = vsel %vm1199, %v1233, %v1235
  %v1241 = vadd.f32 %v1156, %v1231
  %v1242 = vadd.f32 %v1157, %v1236
  %v1243 = vadd.f32 %v1158, %v1237
  %1244 = vset.pattern.permute.xlu0 34
  %1245 = vperm.xlu0 %1244, %v73
  %v1246 = vpop.permute.xlu0 %1245
  %v1248 = vlaneseq
  %v1249 = vshrl.u32 %v1248, 7
  %v1250 = vsub.s32 2, %v1249
  %v1251 = vrot.slane %v1168, %v1250
  %v1252 = vlaneseq
  %v1253 = vshrl.u32 %v1252, 7
  %v1254 = vsub.s32 2, %v1253
  %v1255 = vrot.slane %v1169, %v1254
  %v1256 = vlaneseq
  %v1257 = vshrl.u32 %v1256, 7
  %v1258 = vsub.s32 2, %v1257
  %v1259 = vrot.slane %v1170, %v1258
  %v1260 = vmul.f32 %v1246, %v1251
  %v1261 = vmul.f32 %v1246, %v1255
  %v1262 = vmul.f32 %v1246, %v1259
  %1266 = vrot.lane.b32.xlu0 %v1260, 94
  %v1267 = vpop.permute.xlu0 %1266
  %1268 = vrot.lane.b32.xlu0 %v1261, 94
  %v1269 = vpop.permute.xlu0 %1268
  %1270 = vrot.lane.b32.xlu0 %v1262, 94
  %v1271 = vpop.permute.xlu0 %1270
  %v1272 = vsel %vm1199, %v1267, %v1269
  %v1273 = vsel %vm1199, %v1269, %v1271
  %v1277 = vadd.f32 %v1205, %v1267
  %v1278 = vadd.f32 %v1206, %v1272
  %v1279 = vadd.f32 %v1207, %v1273
  %1280 = vset.pattern.permute.xlu0 35
  %1281 = vperm.xlu0 %1280, %v73
  %v1282 = vpop.permute.xlu0 %1281
  %v1284 = vlaneseq
  %v1285 = vshrl.u32 %v1284, 7
  %v1286 = vsub.s32 3, %v1285
  %v1287 = vrot.slane %v1168, %v1286
  %v1288 = vlaneseq
  %v1289 = vshrl.u32 %v1288, 7
  %v1290 = vsub.s32 3, %v1289
  %v1291 = vrot.slane %v1169, %v1290
  %v1292 = vlaneseq
  %v1293 = vshrl.u32 %v1292, 7
  %v1294 = vsub.s32 3, %v1293
  %v1295 = vrot.slane %v1170, %v1294
  %v1296 = vmul.f32 %v1282, %v1287
  %v1297 = vmul.f32 %v1282, %v1291
  %v1298 = vmul.f32 %v1282, %v1295
  %1302 = vrot.lane.b32.xlu0 %v1296, 94
  %v1303 = vpop.permute.xlu0 %1302
  %1304 = vrot.lane.b32.xlu0 %v1297, 94
  %v1305 = vpop.permute.xlu0 %1304
  %1306 = vrot.lane.b32.xlu0 %v1298, 94
  %v1307 = vpop.permute.xlu0 %1306
  %v1308 = vsel %vm1199, %v1303, %v1305
  %v1309 = vsel %vm1199, %v1305, %v1307
  %v1313 = vadd.f32 %v1241, %v1303
  %v1314 = vadd.f32 %v1242, %v1308
  %v1315 = vadd.f32 %v1243, %v1309
  %v1316 = vadd.f32 %v1277, %v1313
  %v1317 = vadd.f32 %v1278, %v1314
  %v1318 = vadd.f32 %v1279, %v1315
  %v1319 = vld [vmem:[#allocation2] sm:$0xf0]
  %v1320 = vld [vmem:[#allocation2 + $0x8] sm:$0xf0]
  %v1321 = vld [vmem:[#allocation2 + $0x10] sm:$0xf0]
  %v1322 = vmul.f32 %v1319, %v62
  %v1323 = vmul.f32 %v1320, %v66
  %v1324 = vmul.f32 %v1321, %v64
  %v1325 = vlaneseq
  %v1326 = vshrl.u32 %v1325, 7
  %v1327 = vsub.s32 4, %v1326
  %v1328 = vrot.slane %v1322, %v1327
  %v1329 = vlaneseq
  %v1330 = vshrl.u32 %v1329, 7
  %v1331 = vsub.s32 4, %v1330
  %v1332 = vrot.slane %v1323, %v1331
  %v1333 = vlaneseq
  %v1334 = vshrl.u32 %v1333, 7
  %v1335 = vsub.s32 4, %v1334
  %v1336 = vrot.slane %v1324, %v1335
  %v1337 = vmul.f32 %v77, %v1328
  %v1338 = vmul.f32 %v77, %v1332
  %v1339 = vmul.f32 %v77, %v1336
  %v1340 = vadd.f32 %v56, %v1337
  %v1341 = vadd.f32 %v56, %v1338
  %v1342 = vadd.f32 %v56, %v1339
  %v1343 = vlaneseq
  %v1344 = vshrl.u32 %v1343, 7
  %v1345 = vsub.s32 5, %v1344
  %v1346 = vrot.slane %v1322, %v1345
  %v1347 = vlaneseq
  %v1348 = vshrl.u32 %v1347, 7
  %v1349 = vsub.s32 5, %v1348
  %v1350 = vrot.slane %v1323, %v1349
  %v1351 = vlaneseq
  %v1352 = vshrl.u32 %v1351, 7
  %v1353 = vsub.s32 5, %v1352
  %v1354 = vrot.slane %v1324, %v1353
  %v1355 = vmul.f32 %v99, %v1346
  %v1356 = vmul.f32 %v99, %v1350
  %v1357 = vmul.f32 %v99, %v1354
  %v1358 = vadd.f32 %v1355, 0.0
  %v1359 = vadd.f32 %v1356, 0.0
  %v1360 = vadd.f32 %v1357, 0.0
  %v1361 = vlaneseq
  %v1362 = vshrl.u32 %v1361, 7
  %v1363 = vsub.s32 6, %v1362
  %v1364 = vrot.slane %v1322, %v1363
  %v1365 = vlaneseq
  %v1366 = vshrl.u32 %v1365, 7
  %v1367 = vsub.s32 6, %v1366
  %v1368 = vrot.slane %v1323, %v1367
  %v1369 = vlaneseq
  %v1370 = vshrl.u32 %v1369, 7
  %v1371 = vsub.s32 6, %v1370
  %v1372 = vrot.slane %v1324, %v1371
  %v1373 = vmul.f32 %v121, %v1364
  %v1374 = vmul.f32 %v121, %v1368
  %v1375 = vmul.f32 %v121, %v1372
  %v1376 = vadd.f32 %v1340, %v1373
  %v1377 = vadd.f32 %v1341, %v1374
  %v1378 = vadd.f32 %v1342, %v1375
  %v1379 = vlaneseq
  %v1380 = vshrl.u32 %v1379, 7
  %v1381 = vsub.s32 7, %v1380
  %v1382 = vrot.slane %v1322, %v1381
  %v1383 = vlaneseq
  %v1384 = vshrl.u32 %v1383, 7
  %v1385 = vsub.s32 7, %v1384
  %v1386 = vrot.slane %v1323, %v1385
  %v1387 = vlaneseq
  %v1388 = vshrl.u32 %v1387, 7
  %v1389 = vsub.s32 7, %v1388
  %v1390 = vrot.slane %v1324, %v1389
  %v1391 = vmul.f32 %v143, %v1382
  %v1392 = vmul.f32 %v143, %v1386
  %v1393 = vmul.f32 %v143, %v1390
  %v1394 = vadd.f32 %v1358, %v1391
  %v1395 = vadd.f32 %v1359, %v1392
  %v1396 = vadd.f32 %v1360, %v1393
  %v1397 = vlaneseq
  %v1398 = vshrl.u32 %v1397, 7
  %v1399 = vsub.s32 4, %v1398
  %v1400 = vrot.slane %v1319, %v1399
  %v1401 = vlaneseq
  %v1402 = vshrl.u32 %v1401, 7
  %v1403 = vsub.s32 4, %v1402
  %v1404 = vrot.slane %v1320, %v1403
  %v1405 = vlaneseq
  %v1406 = vshrl.u32 %v1405, 7
  %v1407 = vsub.s32 4, %v1406
  %v1408 = vrot.slane %v1321, %v1407
  %v1409 = vmul.f32 %v165, %v1400
  %v1410 = vmul.f32 %v165, %v1404
  %v1411 = vmul.f32 %v165, %v1408
  %1415 = vrot.lane.b32.xlu0 %v1409, 127
  %v1416 = vpop.permute.xlu0 %1415
  %1417 = vrot.lane.b32.xlu0 %v1410, 127
  %v1418 = vpop.permute.xlu0 %1417
  %1419 = vrot.lane.b32.xlu0 %v1411, 127
  %v1420 = vpop.permute.xlu0 %1419
  %v1421 = vsel %vm191, %v1416, %v1418
  %v1422 = vsel %vm191, %v1418, %v1420
  %v1426 = vadd.f32 %v1376, %v1421
  %v1427 = vadd.f32 %v1377, %v1422
  %v1428 = vadd.f32 %v1378, %v1420
  %v1429 = vlaneseq
  %v1430 = vshrl.u32 %v1429, 7
  %v1431 = vsub.s32 5, %v1430
  %v1432 = vrot.slane %v1319, %v1431
  %v1433 = vlaneseq
  %v1434 = vshrl.u32 %v1433, 7
  %v1435 = vsub.s32 5, %v1434
  %v1436 = vrot.slane %v1320, %v1435
  %v1437 = vlaneseq
  %v1438 = vshrl.u32 %v1437, 7
  %v1439 = vsub.s32 5, %v1438
  %v1440 = vrot.slane %v1321, %v1439
  %v1441 = vmul.f32 %v202, %v1432
  %v1442 = vmul.f32 %v202, %v1436
  %v1443 = vmul.f32 %v202, %v1440
  %1447 = vrot.lane.b32.xlu0 %v1441, 127
  %v1448 = vpop.permute.xlu0 %1447
  %1449 = vrot.lane.b32.xlu0 %v1442, 127
  %v1450 = vpop.permute.xlu0 %1449
  %1451 = vrot.lane.b32.xlu0 %v1443, 127
  %v1452 = vpop.permute.xlu0 %1451
  %v1453 = vsel %vm191, %v1448, %v1450
  %v1454 = vsel %vm191, %v1450, %v1452
  %v1458 = vadd.f32 %v1394, %v1453
  %v1459 = vadd.f32 %v1395, %v1454
  %v1460 = vadd.f32 %v1396, %v1452
  %v1461 = vlaneseq
  %v1462 = vshrl.u32 %v1461, 7
  %v1463 = vsub.s32 6, %v1462
  %v1464 = vrot.slane %v1319, %v1463
  %v1465 = vlaneseq
  %v1466 = vshrl.u32 %v1465, 7
  %v1467 = vsub.s32 6, %v1466
  %v1468 = vrot.slane %v1320, %v1467
  %v1469 = vlaneseq
  %v1470 = vshrl.u32 %v1469, 7
  %v1471 = vsub.s32 6, %v1470
  %v1472 = vrot.slane %v1321, %v1471
  %v1473 = vmul.f32 %v238, %v1464
  %v1474 = vmul.f32 %v238, %v1468
  %v1475 = vmul.f32 %v238, %v1472
  %1479 = vrot.lane.b32.xlu0 %v1473, 127
  %v1480 = vpop.permute.xlu0 %1479
  %1481 = vrot.lane.b32.xlu0 %v1474, 127
  %v1482 = vpop.permute.xlu0 %1481
  %1483 = vrot.lane.b32.xlu0 %v1475, 127
  %v1484 = vpop.permute.xlu0 %1483
  %v1485 = vsel %vm191, %v1480, %v1482
  %v1486 = vsel %vm191, %v1482, %v1484
  %v1490 = vadd.f32 %v1426, %v1485
  %v1491 = vadd.f32 %v1427, %v1486
  %v1492 = vadd.f32 %v1428, %v1484
  %v1493 = vlaneseq
  %v1494 = vshrl.u32 %v1493, 7
  %v1495 = vsub.s32 7, %v1494
  %v1496 = vrot.slane %v1319, %v1495
  %v1497 = vlaneseq
  %v1498 = vshrl.u32 %v1497, 7
  %v1499 = vsub.s32 7, %v1498
  %v1500 = vrot.slane %v1320, %v1499
  %v1501 = vlaneseq
  %v1502 = vshrl.u32 %v1501, 7
  %v1503 = vsub.s32 7, %v1502
  %v1504 = vrot.slane %v1321, %v1503
  %v1505 = vmul.f32 %v274, %v1496
  %v1506 = vmul.f32 %v274, %v1500
  %v1507 = vmul.f32 %v274, %v1504
  %1511 = vrot.lane.b32.xlu0 %v1505, 127
  %v1512 = vpop.permute.xlu0 %1511
  %1513 = vrot.lane.b32.xlu0 %v1506, 127
  %v1514 = vpop.permute.xlu0 %1513
  %1515 = vrot.lane.b32.xlu0 %v1507, 127
  %v1516 = vpop.permute.xlu0 %1515
  %v1517 = vsel %vm191, %v1512, %v1514
  %v1518 = vsel %vm191, %v1514, %v1516
  %v1522 = vadd.f32 %v1458, %v1517
  %v1523 = vadd.f32 %v1459, %v1518
  %v1524 = vadd.f32 %v1460, %v1516
  %v1525 = vmul.f32 %v1319, %v309
  %v1526 = vmul.f32 %v1320, %v313
  %v1527 = vmul.f32 %v1321, %v311
  %v1528 = vlaneseq
  %v1529 = vshrl.u32 %v1528, 7
  %v1530 = vsub.s32 4, %v1529
  %v1531 = vrot.slane %v1525, %v1530
  %v1532 = vlaneseq
  %v1533 = vshrl.u32 %v1532, 7
  %v1534 = vsub.s32 4, %v1533
  %v1535 = vrot.slane %v1526, %v1534
  %v1536 = vlaneseq
  %v1537 = vshrl.u32 %v1536, 7
  %v1538 = vsub.s32 4, %v1537
  %v1539 = vrot.slane %v1527, %v1538
  %v1540 = vmul.f32 %v322, %v1531
  %v1541 = vmul.f32 %v322, %v1535
  %v1542 = vmul.f32 %v322, %v1539
  %1546 = vrot.lane.b32.xlu0 %v1540, 126
  %v1547 = vpop.permute.xlu0 %1546
  %1548 = vrot.lane.b32.xlu0 %v1541, 126
  %v1549 = vpop.permute.xlu0 %1548
  %1550 = vrot.lane.b32.xlu0 %v1542, 126
  %v1551 = vpop.permute.xlu0 %1550
  %v1552 = vsel %vm348, %v1547, %v1549
  %v1553 = vsel %vm348, %v1549, %v1551
  %v1557 = vadd.f32 %v1490, %v1552
  %v1558 = vadd.f32 %v1491, %v1553
  %v1559 = vadd.f32 %v1492, %v1551
  %v1560 = vlaneseq
  %v1561 = vshrl.u32 %v1560, 7
  %v1562 = vsub.s32 5, %v1561
  %v1563 = vrot.slane %v1525, %v1562
  %v1564 = vlaneseq
  %v1565 = vshrl.u32 %v1564, 7
  %v1566 = vsub.s32 5, %v1565
  %v1567 = vrot.slane %v1526, %v1566
  %v1568 = vlaneseq
  %v1569 = vshrl.u32 %v1568, 7
  %v1570 = vsub.s32 5, %v1569
  %v1571 = vrot.slane %v1527, %v1570
  %v1572 = vmul.f32 %v359, %v1563
  %v1573 = vmul.f32 %v359, %v1567
  %v1574 = vmul.f32 %v359, %v1571
  %1578 = vrot.lane.b32.xlu0 %v1572, 126
  %v1579 = vpop.permute.xlu0 %1578
  %1580 = vrot.lane.b32.xlu0 %v1573, 126
  %v1581 = vpop.permute.xlu0 %1580
  %1582 = vrot.lane.b32.xlu0 %v1574, 126
  %v1583 = vpop.permute.xlu0 %1582
  %v1584 = vsel %vm348, %v1579, %v1581
  %v1585 = vsel %vm348, %v1581, %v1583
  %v1589 = vadd.f32 %v1522, %v1584
  %v1590 = vadd.f32 %v1523, %v1585
  %v1591 = vadd.f32 %v1524, %v1583
  %v1592 = vlaneseq
  %v1593 = vshrl.u32 %v1592, 7
  %v1594 = vsub.s32 6, %v1593
  %v1595 = vrot.slane %v1525, %v1594
  %v1596 = vlaneseq
  %v1597 = vshrl.u32 %v1596, 7
  %v1598 = vsub.s32 6, %v1597
  %v1599 = vrot.slane %v1526, %v1598
  %v1600 = vlaneseq
  %v1601 = vshrl.u32 %v1600, 7
  %v1602 = vsub.s32 6, %v1601
  %v1603 = vrot.slane %v1527, %v1602
  %v1604 = vmul.f32 %v395, %v1595
  %v1605 = vmul.f32 %v395, %v1599
  %v1606 = vmul.f32 %v395, %v1603
  %1610 = vrot.lane.b32.xlu0 %v1604, 126
  %v1611 = vpop.permute.xlu0 %1610
  %1612 = vrot.lane.b32.xlu0 %v1605, 126
  %v1613 = vpop.permute.xlu0 %1612
  %1614 = vrot.lane.b32.xlu0 %v1606, 126
  %v1615 = vpop.permute.xlu0 %1614
  %v1616 = vsel %vm348, %v1611, %v1613
  %v1617 = vsel %vm348, %v1613, %v1615
  %v1621 = vadd.f32 %v1557, %v1616
  %v1622 = vadd.f32 %v1558, %v1617
  %v1623 = vadd.f32 %v1559, %v1615
  %v1624 = vlaneseq
  %v1625 = vshrl.u32 %v1624, 7
  %v1626 = vsub.s32 7, %v1625
  %v1627 = vrot.slane %v1525, %v1626
  %v1628 = vlaneseq
  %v1629 = vshrl.u32 %v1628, 7
  %v1630 = vsub.s32 7, %v1629
  %v1631 = vrot.slane %v1526, %v1630
  %v1632 = vlaneseq
  %v1633 = vshrl.u32 %v1632, 7
  %v1634 = vsub.s32 7, %v1633
  %v1635 = vrot.slane %v1527, %v1634
  %v1636 = vmul.f32 %v431, %v1627
  %v1637 = vmul.f32 %v431, %v1631
  %v1638 = vmul.f32 %v431, %v1635
  %1642 = vrot.lane.b32.xlu0 %v1636, 126
  %v1643 = vpop.permute.xlu0 %1642
  %1644 = vrot.lane.b32.xlu0 %v1637, 126
  %v1645 = vpop.permute.xlu0 %1644
  %1646 = vrot.lane.b32.xlu0 %v1638, 126
  %v1647 = vpop.permute.xlu0 %1646
  %v1648 = vsel %vm348, %v1643, %v1645
  %v1649 = vsel %vm348, %v1645, %v1647
  %v1653 = vadd.f32 %v1589, %v1648
  %v1654 = vadd.f32 %v1590, %v1649
  %v1655 = vadd.f32 %v1591, %v1647
  %v1656 = vmul.f32 %v1319, %v466
  %v1657 = vmul.f32 %v1320, %v469
  %v1658 = vmul.f32 %v1321, %v468
  %v1659 = vlaneseq
  %v1660 = vshrl.u32 %v1659, 7
  %v1661 = vsub.s32 4, %v1660
  %v1662 = vrot.slane %v1656, %v1661
  %v1663 = vlaneseq
  %v1664 = vshrl.u32 %v1663, 7
  %v1665 = vsub.s32 4, %v1664
  %v1666 = vrot.slane %v1657, %v1665
  %v1667 = vlaneseq
  %v1668 = vshrl.u32 %v1667, 7
  %v1669 = vsub.s32 4, %v1668
  %v1670 = vrot.slane %v1658, %v1669
  %v1671 = vmul.f32 %v478, %v1662
  %v1672 = vmul.f32 %v478, %v1666
  %v1673 = vmul.f32 %v478, %v1670
  %1677 = vrot.lane.b32.xlu0 %v1671, 112
  %v1678 = vpop.permute.xlu0 %1677
  %1679 = vrot.lane.b32.xlu0 %v1672, 112
  %v1680 = vpop.permute.xlu0 %1679
  %1681 = vrot.lane.b32.xlu0 %v1673, 112
  %v1682 = vpop.permute.xlu0 %1681
  %v1683 = vsel %vm504, %v1678, %v1680
  %v1684 = vsel %vm504, %v1680, %v1682
  %v1688 = vadd.f32 %v1621, %v1683
  %v1689 = vadd.f32 %v1622, %v1684
  %v1690 = vadd.f32 %v1623, %v1682
  %v1691 = vlaneseq
  %v1692 = vshrl.u32 %v1691, 7
  %v1693 = vsub.s32 5, %v1692
  %v1694 = vrot.slane %v1656, %v1693
  %v1695 = vlaneseq
  %v1696 = vshrl.u32 %v1695, 7
  %v1697 = vsub.s32 5, %v1696
  %v1698 = vrot.slane %v1657, %v1697
  %v1699 = vlaneseq
  %v1700 = vshrl.u32 %v1699, 7
  %v1701 = vsub.s32 5, %v1700
  %v1702 = vrot.slane %v1658, %v1701
  %v1703 = vmul.f32 %v515, %v1694
  %v1704 = vmul.f32 %v515, %v1698
  %v1705 = vmul.f32 %v515, %v1702
  %1709 = vrot.lane.b32.xlu0 %v1703, 112
  %v1710 = vpop.permute.xlu0 %1709
  %1711 = vrot.lane.b32.xlu0 %v1704, 112
  %v1712 = vpop.permute.xlu0 %1711
  %1713 = vrot.lane.b32.xlu0 %v1705, 112
  %v1714 = vpop.permute.xlu0 %1713
  %v1715 = vsel %vm504, %v1710, %v1712
  %v1716 = vsel %vm504, %v1712, %v1714
  %v1720 = vadd.f32 %v1653, %v1715
  %v1721 = vadd.f32 %v1654, %v1716
  %v1722 = vadd.f32 %v1655, %v1714
  %v1723 = vlaneseq
  %v1724 = vshrl.u32 %v1723, 7
  %v1725 = vsub.s32 6, %v1724
  %v1726 = vrot.slane %v1656, %v1725
  %v1727 = vlaneseq
  %v1728 = vshrl.u32 %v1727, 7
  %v1729 = vsub.s32 6, %v1728
  %v1730 = vrot.slane %v1657, %v1729
  %v1731 = vlaneseq
  %v1732 = vshrl.u32 %v1731, 7
  %v1733 = vsub.s32 6, %v1732
  %v1734 = vrot.slane %v1658, %v1733
  %v1735 = vmul.f32 %v551, %v1726
  %v1736 = vmul.f32 %v551, %v1730
  %v1737 = vmul.f32 %v551, %v1734
  %1741 = vrot.lane.b32.xlu0 %v1735, 112
  %v1742 = vpop.permute.xlu0 %1741
  %1743 = vrot.lane.b32.xlu0 %v1736, 112
  %v1744 = vpop.permute.xlu0 %1743
  %1745 = vrot.lane.b32.xlu0 %v1737, 112
  %v1746 = vpop.permute.xlu0 %1745
  %v1747 = vsel %vm504, %v1742, %v1744
  %v1748 = vsel %vm504, %v1744, %v1746
  %v1752 = vadd.f32 %v1688, %v1747
  %v1753 = vadd.f32 %v1689, %v1748
  %v1754 = vadd.f32 %v1690, %v1746
  %v1755 = vlaneseq
  %v1756 = vshrl.u32 %v1755, 7
  %v1757 = vsub.s32 7, %v1756
  %v1758 = vrot.slane %v1656, %v1757
  %v1759 = vlaneseq
  %v1760 = vshrl.u32 %v1759, 7
  %v1761 = vsub.s32 7, %v1760
  %v1762 = vrot.slane %v1657, %v1761
  %v1763 = vlaneseq
  %v1764 = vshrl.u32 %v1763, 7
  %v1765 = vsub.s32 7, %v1764
  %v1766 = vrot.slane %v1658, %v1765
  %v1767 = vmul.f32 %v587, %v1758
  %v1768 = vmul.f32 %v587, %v1762
  %v1769 = vmul.f32 %v587, %v1766
  %1773 = vrot.lane.b32.xlu0 %v1767, 112
  %v1774 = vpop.permute.xlu0 %1773
  %1775 = vrot.lane.b32.xlu0 %v1768, 112
  %v1776 = vpop.permute.xlu0 %1775
  %1777 = vrot.lane.b32.xlu0 %v1769, 112
  %v1778 = vpop.permute.xlu0 %1777
  %v1779 = vsel %vm504, %v1774, %v1776
  %v1780 = vsel %vm504, %v1776, %v1778
  %v1784 = vadd.f32 %v1720, %v1779
  %v1785 = vadd.f32 %v1721, %v1780
  %v1786 = vadd.f32 %v1722, %v1778
  %v1787 = vmul.f32 %v623, %v1404
  %v1788 = vmul.f32 %v623, %v1408
  %1791 = vrot.lane.b32.xlu0 %v1787, 111
  %v1792 = vpop.permute.xlu0 %1791
  %1793 = vrot.lane.b32.xlu0 %v1788, 111
  %v1794 = vpop.permute.xlu0 %1793
  %v1795 = vsel %vm65, %v1792, %v1794
  %v1799 = vadd.f32 %v1752, %v1792
  %v1800 = vadd.f32 %v1753, %v1795
  %v1801 = vadd.f32 %v1754, %v1794
  %v1802 = vmul.f32 %v642, %v1436
  %v1803 = vmul.f32 %v642, %v1440
  %1806 = vrot.lane.b32.xlu0 %v1802, 111
  %v1807 = vpop.permute.xlu0 %1806
  %1808 = vrot.lane.b32.xlu0 %v1803, 111
  %v1809 = vpop.permute.xlu0 %1808
  %v1810 = vsel %vm65, %v1807, %v1809
  %v1814 = vadd.f32 %v1784, %v1807
  %v1815 = vadd.f32 %v1785, %v1810
  %v1816 = vadd.f32 %v1786, %v1809
  %v1817 = vmul.f32 %v661, %v1468
  %v1818 = vmul.f32 %v661, %v1472
  %1821 = vrot.lane.b32.xlu0 %v1817, 111
  %v1822 = vpop.permute.xlu0 %1821
  %1823 = vrot.lane.b32.xlu0 %v1818, 111
  %v1824 = vpop.permute.xlu0 %1823
  %v1825 = vsel %vm65, %v1822, %v1824
  %v1829 = vadd.f32 %v1799, %v1822
  %v1830 = vadd.f32 %v1800, %v1825
  %v1831 = vadd.f32 %v1801, %v1824
  %v1832 = vmul.f32 %v680, %v1500
  %v1833 = vmul.f32 %v680, %v1504
  %1836 = vrot.lane.b32.xlu0 %v1832, 111
  %v1837 = vpop.permute.xlu0 %1836
  %1838 = vrot.lane.b32.xlu0 %v1833, 111
  %v1839 = vpop.permute.xlu0 %1838
  %v1840 = vsel %vm65, %v1837, %v1839
  %v1844 = vadd.f32 %v1814, %v1837
  %v1845 = vadd.f32 %v1815, %v1840
  %v1846 = vadd.f32 %v1816, %v1839
  %v1847 = vld [vmem:[#allocation2 + $0x8] sm:$0xf0]
  %v1848 = vld [vmem:[#allocation2 + $0x10] sm:$0xf0]
  %v1849 = vld [vmem:[#allocation2 + $0x18] sm:$0xf0]
  %v1850 = vmul.f32 %v1847, %v701
  %v1851 = vmul.f32 %v1848, %v705
  %v1852 = vmul.f32 %v1849, %v703
  %v1853 = vlaneseq
  %v1854 = vshrl.u32 %v1853, 7
  %v1855 = vsub.s32 4, %v1854
  %v1856 = vrot.slane %v1850, %v1855
  %v1857 = vlaneseq
  %v1858 = vshrl.u32 %v1857, 7
  %v1859 = vsub.s32 4, %v1858
  %v1860 = vrot.slane %v1851, %v1859
  %v1861 = vlaneseq
  %v1862 = vshrl.u32 %v1861, 7
  %v1863 = vsub.s32 4, %v1862
  %v1864 = vrot.slane %v1852, %v1863
  %v1865 = vmul.f32 %v714, %v1856
  %v1866 = vmul.f32 %v714, %v1860
  %v1867 = vmul.f32 %v714, %v1864
  %1871 = vrot.lane.b32.xlu0 %v1865, 110
  %v1872 = vpop.permute.xlu0 %1871
  %1873 = vrot.lane.b32.xlu0 %v1866, 110
  %v1874 = vpop.permute.xlu0 %1873
  %1875 = vrot.lane.b32.xlu0 %v1867, 110
  %v1876 = vpop.permute.xlu0 %1875
  %v1877 = vsel %vm740, %v1872, %v1874
  %v1878 = vsel %vm740, %v1874, %v1876
  %v1882 = vadd.f32 %v1829, %v1872
  %v1883 = vadd.f32 %v1830, %v1877
  %v1884 = vadd.f32 %v1831, %v1878
  %v1885 = vlaneseq
  %v1886 = vshrl.u32 %v1885, 7
  %v1887 = vsub.s32 5, %v1886
  %v1888 = vrot.slane %v1850, %v1887
  %v1889 = vlaneseq
  %v1890 = vshrl.u32 %v1889, 7
  %v1891 = vsub.s32 5, %v1890
  %v1892 = vrot.slane %v1851, %v1891
  %v1893 = vlaneseq
  %v1894 = vshrl.u32 %v1893, 7
  %v1895 = vsub.s32 5, %v1894
  %v1896 = vrot.slane %v1852, %v1895
  %v1897 = vmul.f32 %v751, %v1888
  %v1898 = vmul.f32 %v751, %v1892
  %v1899 = vmul.f32 %v751, %v1896
  %1903 = vrot.lane.b32.xlu0 %v1897, 110
  %v1904 = vpop.permute.xlu0 %1903
  %1905 = vrot.lane.b32.xlu0 %v1898, 110
  %v1906 = vpop.permute.xlu0 %1905
  %1907 = vrot.lane.b32.xlu0 %v1899, 110
  %v1908 = vpop.permute.xlu0 %1907
  %v1909 = vsel %vm740, %v1904, %v1906
  %v1910 = vsel %vm740, %v1906, %v1908
  %v1914 = vadd.f32 %v1844, %v1904
  %v1915 = vadd.f32 %v1845, %v1909
  %v1916 = vadd.f32 %v1846, %v1910
  %v1917 = vlaneseq
  %v1918 = vshrl.u32 %v1917, 7
  %v1919 = vsub.s32 6, %v1918
  %v1920 = vrot.slane %v1850, %v1919
  %v1921 = vlaneseq
  %v1922 = vshrl.u32 %v1921, 7
  %v1923 = vsub.s32 6, %v1922
  %v1924 = vrot.slane %v1851, %v1923
  %v1925 = vlaneseq
  %v1926 = vshrl.u32 %v1925, 7
  %v1927 = vsub.s32 6, %v1926
  %v1928 = vrot.slane %v1852, %v1927
  %v1929 = vmul.f32 %v787, %v1920
  %v1930 = vmul.f32 %v787, %v1924
  %v1931 = vmul.f32 %v787, %v1928
  %1935 = vrot.lane.b32.xlu0 %v1929, 110
  %v1936 = vpop.permute.xlu0 %1935
  %1937 = vrot.lane.b32.xlu0 %v1930, 110
  %v1938 = vpop.permute.xlu0 %1937
  %1939 = vrot.lane.b32.xlu0 %v1931, 110
  %v1940 = vpop.permute.xlu0 %1939
  %v1941 = vsel %vm740, %v1936, %v1938
  %v1942 = vsel %vm740, %v1938, %v1940
  %v1946 = vadd.f32 %v1882, %v1936
  %v1947 = vadd.f32 %v1883, %v1941
  %v1948 = vadd.f32 %v1884, %v1942
  %v1949 = vlaneseq
  %v1950 = vshrl.u32 %v1949, 7
  %v1951 = vsub.s32 7, %v1950
  %v1952 = vrot.slane %v1850, %v1951
  %v1953 = vlaneseq
  %v1954 = vshrl.u32 %v1953, 7
  %v1955 = vsub.s32 7, %v1954
  %v1956 = vrot.slane %v1851, %v1955
  %v1957 = vlaneseq
  %v1958 = vshrl.u32 %v1957, 7
  %v1959 = vsub.s32 7, %v1958
  %v1960 = vrot.slane %v1852, %v1959
  %v1961 = vmul.f32 %v823, %v1952
  %v1962 = vmul.f32 %v823, %v1956
  %v1963 = vmul.f32 %v823, %v1960
  %1967 = vrot.lane.b32.xlu0 %v1961, 110
  %v1968 = vpop.permute.xlu0 %1967
  %1969 = vrot.lane.b32.xlu0 %v1962, 110
  %v1970 = vpop.permute.xlu0 %1969
  %1971 = vrot.lane.b32.xlu0 %v1963, 110
  %v1972 = vpop.permute.xlu0 %1971
  %v1973 = vsel %vm740, %v1968, %v1970
  %v1974 = vsel %vm740, %v1970, %v1972
  %v1978 = vadd.f32 %v1914, %v1968
  %v1979 = vadd.f32 %v1915, %v1973
  %v1980 = vadd.f32 %v1916, %v1974
  %v1981 = vmul.f32 %v1847, %v858
  %v1982 = vmul.f32 %v1848, %v862
  %v1983 = vmul.f32 %v1849, %v860
  %v1984 = vlaneseq
  %v1985 = vshrl.u32 %v1984, 7
  %v1986 = vsub.s32 4, %v1985
  %v1987 = vrot.slane %v1981, %v1986
  %v1988 = vlaneseq
  %v1989 = vshrl.u32 %v1988, 7
  %v1990 = vsub.s32 4, %v1989
  %v1991 = vrot.slane %v1982, %v1990
  %v1992 = vlaneseq
  %v1993 = vshrl.u32 %v1992, 7
  %v1994 = vsub.s32 4, %v1993
  %v1995 = vrot.slane %v1983, %v1994
  %v1996 = vmul.f32 %v871, %v1987
  %v1997 = vmul.f32 %v871, %v1991
  %v1998 = vmul.f32 %v871, %v1995
  %2002 = vrot.lane.b32.xlu0 %v1996, 96
  %v2003 = vpop.permute.xlu0 %2002
  %2004 = vrot.lane.b32.xlu0 %v1997, 96
  %v2005 = vpop.permute.xlu0 %2004
  %2006 = vrot.lane.b32.xlu0 %v1998, 96
  %v2007 = vpop.permute.xlu0 %2006
  %v2008 = vsel %vm897, %v2003, %v2005
  %v2009 = vsel %vm897, %v2005, %v2007
  %v2013 = vadd.f32 %v1946, %v2003
  %v2014 = vadd.f32 %v1947, %v2008
  %v2015 = vadd.f32 %v1948, %v2009
  %v2016 = vlaneseq
  %v2017 = vshrl.u32 %v2016, 7
  %v2018 = vsub.s32 5, %v2017
  %v2019 = vrot.slane %v1981, %v2018
  %v2020 = vlaneseq
  %v2021 = vshrl.u32 %v2020, 7
  %v2022 = vsub.s32 5, %v2021
  %v2023 = vrot.slane %v1982, %v2022
  %v2024 = vlaneseq
  %v2025 = vshrl.u32 %v2024, 7
  %v2026 = vsub.s32 5, %v2025
  %v2027 = vrot.slane %v1983, %v2026
  %v2028 = vmul.f32 %v908, %v2019
  %v2029 = vmul.f32 %v908, %v2023
  %v2030 = vmul.f32 %v908, %v2027
  %2034 = vrot.lane.b32.xlu0 %v2028, 96
  %v2035 = vpop.permute.xlu0 %2034
  %2036 = vrot.lane.b32.xlu0 %v2029, 96
  %v2037 = vpop.permute.xlu0 %2036
  %2038 = vrot.lane.b32.xlu0 %v2030, 96
  %v2039 = vpop.permute.xlu0 %2038
  %v2040 = vsel %vm897, %v2035, %v2037
  %v2041 = vsel %vm897, %v2037, %v2039
  %v2045 = vadd.f32 %v1978, %v2035
  %v2046 = vadd.f32 %v1979, %v2040
  %v2047 = vadd.f32 %v1980, %v2041
  %v2048 = vlaneseq
  %v2049 = vshrl.u32 %v2048, 7
  %v2050 = vsub.s32 6, %v2049
  %v2051 = vrot.slane %v1981, %v2050
  %v2052 = vlaneseq
  %v2053 = vshrl.u32 %v2052, 7
  %v2054 = vsub.s32 6, %v2053
  %v2055 = vrot.slane %v1982, %v2054
  %v2056 = vlaneseq
  %v2057 = vshrl.u32 %v2056, 7
  %v2058 = vsub.s32 6, %v2057
  %v2059 = vrot.slane %v1983, %v2058
  %v2060 = vmul.f32 %v944, %v2051
  %v2061 = vmul.f32 %v944, %v2055
  %v2062 = vmul.f32 %v944, %v2059
  %2066 = vrot.lane.b32.xlu0 %v2060, 96
  %v2067 = vpop.permute.xlu0 %2066
  %2068 = vrot.lane.b32.xlu0 %v2061, 96
  %v2069 = vpop.permute.xlu0 %2068
  %2070 = vrot.lane.b32.xlu0 %v2062, 96
  %v2071 = vpop.permute.xlu0 %2070
  %v2072 = vsel %vm897, %v2067, %v2069
  %v2073 = vsel %vm897, %v2069, %v2071
  %v2077 = vadd.f32 %v2013, %v2067
  %v2078 = vadd.f32 %v2014, %v2072
  %v2079 = vadd.f32 %v2015, %v2073
  %v2080 = vlaneseq
  %v2081 = vshrl.u32 %v2080, 7
  %v2082 = vsub.s32 7, %v2081
  %v2083 = vrot.slane %v1981, %v2082
  %v2084 = vlaneseq
  %v2085 = vshrl.u32 %v2084, 7
  %v2086 = vsub.s32 7, %v2085
  %v2087 = vrot.slane %v1982, %v2086
  %v2088 = vlaneseq
  %v2089 = vshrl.u32 %v2088, 7
  %v2090 = vsub.s32 7, %v2089
  %v2091 = vrot.slane %v1983, %v2090
  %v2092 = vmul.f32 %v980, %v2083
  %v2093 = vmul.f32 %v980, %v2087
  %v2094 = vmul.f32 %v980, %v2091
  %2098 = vrot.lane.b32.xlu0 %v2092, 96
  %v2099 = vpop.permute.xlu0 %2098
  %2100 = vrot.lane.b32.xlu0 %v2093, 96
  %v2101 = vpop.permute.xlu0 %2100
  %2102 = vrot.lane.b32.xlu0 %v2094, 96
  %v2103 = vpop.permute.xlu0 %2102
  %v2104 = vsel %vm897, %v2099, %v2101
  %v2105 = vsel %vm897, %v2101, %v2103
  %v2109 = vadd.f32 %v2045, %v2099
  %v2110 = vadd.f32 %v2046, %v2104
  %v2111 = vadd.f32 %v2047, %v2105
  %v2112 = vlaneseq
  %v2113 = vshrl.u32 %v2112, 7
  %v2114 = vsub.s32 4, %v2113
  %v2115 = vrot.slane %v1847, %v2114
  %v2116 = vlaneseq
  %v2117 = vshrl.u32 %v2116, 7
  %v2118 = vsub.s32 4, %v2117
  %v2119 = vrot.slane %v1848, %v2118
  %v2120 = vlaneseq
  %v2121 = vshrl.u32 %v2120, 7
  %v2122 = vsub.s32 4, %v2121
  %v2123 = vrot.slane %v1849, %v2122
  %v2124 = vmul.f32 %v1016, %v2115
  %v2125 = vmul.f32 %v1016, %v2119
  %v2126 = vmul.f32 %v1016, %v2123
  %2130 = vrot.lane.b32.xlu0 %v2124, 95
  %v2131 = vpop.permute.xlu0 %2130
  %2132 = vrot.lane.b32.xlu0 %v2125, 95
  %v2133 = vpop.permute.xlu0 %2132
  %2134 = vrot.lane.b32.xlu0 %v2126, 95
  %v2135 = vpop.permute.xlu0 %2134
  %v2136 = vsel %vm1042, %v2131, %v2133
  %v2137 = vsel %vm1042, %v2133, %v2135
  %v2141 = vadd.f32 %v2077, %v2131
  %v2142 = vadd.f32 %v2078, %v2136
  %v2143 = vadd.f32 %v2079, %v2137
  %v2144 = vlaneseq
  %v2145 = vshrl.u32 %v2144, 7
  %v2146 = vsub.s32 5, %v2145
  %v2147 = vrot.slane %v1847, %v2146
  %v2148 = vlaneseq
  %v2149 = vshrl.u32 %v2148, 7
  %v2150 = vsub.s32 5, %v2149
  %v2151 = vrot.slane %v1848, %v2150
  %v2152 = vlaneseq
  %v2153 = vshrl.u32 %v2152, 7
  %v2154 = vsub.s32 5, %v2153
  %v2155 = vrot.slane %v1849, %v2154
  %v2156 = vmul.f32 %v1053, %v2147
  %v2157 = vmul.f32 %v1053, %v2151
  %v2158 = vmul.f32 %v1053, %v2155
  %2162 = vrot.lane.b32.xlu0 %v2156, 95
  %v2163 = vpop.permute.xlu0 %2162
  %2164 = vrot.lane.b32.xlu0 %v2157, 95
  %v2165 = vpop.permute.xlu0 %2164
  %2166 = vrot.lane.b32.xlu0 %v2158, 95
  %v2167 = vpop.permute.xlu0 %2166
  %v2168 = vsel %vm1042, %v2163, %v2165
  %v2169 = vsel %vm1042, %v2165, %v2167
  %v2173 = vadd.f32 %v2109, %v2163
  %v2174 = vadd.f32 %v2110, %v2168
  %v2175 = vadd.f32 %v2111, %v2169
  %v2176 = vlaneseq
  %v2177 = vshrl.u32 %v2176, 7
  %v2178 = vsub.s32 6, %v2177
  %v2179 = vrot.slane %v1847, %v2178
  %v2180 = vlaneseq
  %v2181 = vshrl.u32 %v2180, 7
  %v2182 = vsub.s32 6, %v2181
  %v2183 = vrot.slane %v1848, %v2182
  %v2184 = vlaneseq
  %v2185 = vshrl.u32 %v2184, 7
  %v2186 = vsub.s32 6, %v2185
  %v2187 = vrot.slane %v1849, %v2186
  %v2188 = vmul.f32 %v1089, %v2179
  %v2189 = vmul.f32 %v1089, %v2183
  %v2190 = vmul.f32 %v1089, %v2187
  %2194 = vrot.lane.b32.xlu0 %v2188, 95
  %v2195 = vpop.permute.xlu0 %2194
  %2196 = vrot.lane.b32.xlu0 %v2189, 95
  %v2197 = vpop.permute.xlu0 %2196
  %2198 = vrot.lane.b32.xlu0 %v2190, 95
  %v2199 = vpop.permute.xlu0 %2198
  %v2200 = vsel %vm1042, %v2195, %v2197
  %v2201 = vsel %vm1042, %v2197, %v2199
  %v2205 = vadd.f32 %v2141, %v2195
  %v2206 = vadd.f32 %v2142, %v2200
  %v2207 = vadd.f32 %v2143, %v2201
  %v2208 = vlaneseq
  %v2209 = vshrl.u32 %v2208, 7
  %v2210 = vsub.s32 7, %v2209
  %v2211 = vrot.slane %v1847, %v2210
  %v2212 = vlaneseq
  %v2213 = vshrl.u32 %v2212, 7
  %v2214 = vsub.s32 7, %v2213
  %v2215 = vrot.slane %v1848, %v2214
  %v2216 = vlaneseq
  %v2217 = vshrl.u32 %v2216, 7
  %v2218 = vsub.s32 7, %v2217
  %v2219 = vrot.slane %v1849, %v2218
  %v2220 = vmul.f32 %v1125, %v2211
  %v2221 = vmul.f32 %v1125, %v2215
  %v2222 = vmul.f32 %v1125, %v2219
  %2226 = vrot.lane.b32.xlu0 %v2220, 95
  %v2227 = vpop.permute.xlu0 %2226
  %2228 = vrot.lane.b32.xlu0 %v2221, 95
  %v2229 = vpop.permute.xlu0 %2228
  %2230 = vrot.lane.b32.xlu0 %v2222, 95
  %v2231 = vpop.permute.xlu0 %2230
  %v2232 = vsel %vm1042, %v2227, %v2229
  %v2233 = vsel %vm1042, %v2229, %v2231
  %v2237 = vadd.f32 %v2173, %v2227
  %v2238 = vadd.f32 %v2174, %v2232
  %v2239 = vadd.f32 %v2175, %v2233
  %v2240 = vmul.f32 %v1847, %v1160
  %v2241 = vmul.f32 %v1848, %v1164
  %v2242 = vmul.f32 %v1849, %v1162
  %v2243 = vlaneseq
  %v2244 = vshrl.u32 %v2243, 7
  %v2245 = vsub.s32 4, %v2244
  %v2246 = vrot.slane %v2240, %v2245
  %v2247 = vlaneseq
  %v2248 = vshrl.u32 %v2247, 7
  %v2249 = vsub.s32 4, %v2248
  %v2250 = vrot.slane %v2241, %v2249
  %v2251 = vlaneseq
  %v2252 = vshrl.u32 %v2251, 7
  %v2253 = vsub.s32 4, %v2252
  %v2254 = vrot.slane %v2242, %v2253
  %v2255 = vmul.f32 %v1173, %v2246
  %v2256 = vmul.f32 %v1173, %v2250
  %v2257 = vmul.f32 %v1173, %v2254
  %2261 = vrot.lane.b32.xlu0 %v2255, 94
  %v2262 = vpop.permute.xlu0 %2261
  %2263 = vrot.lane.b32.xlu0 %v2256, 94
  %v2264 = vpop.permute.xlu0 %2263
  %2265 = vrot.lane.b32.xlu0 %v2257, 94
  %v2266 = vpop.permute.xlu0 %2265
  %v2267 = vsel %vm1199, %v2262, %v2264
  %v2268 = vsel %vm1199, %v2264, %v2266
  %v2272 = vadd.f32 %v2205, %v2262
  %v2273 = vadd.f32 %v2206, %v2267
  %v2274 = vadd.f32 %v2207, %v2268
  %v2275 = vlaneseq
  %v2276 = vshrl.u32 %v2275, 7
  %v2277 = vsub.s32 5, %v2276
  %v2278 = vrot.slane %v2240, %v2277
  %v2279 = vlaneseq
  %v2280 = vshrl.u32 %v2279, 7
  %v2281 = vsub.s32 5, %v2280
  %v2282 = vrot.slane %v2241, %v2281
  %v2283 = vlaneseq
  %v2284 = vshrl.u32 %v2283, 7
  %v2285 = vsub.s32 5, %v2284
  %v2286 = vrot.slane %v2242, %v2285
  %v2287 = vmul.f32 %v1210, %v2278
  %v2288 = vmul.f32 %v1210, %v2282
  %v2289 = vmul.f32 %v1210, %v2286
  %2293 = vrot.lane.b32.xlu0 %v2287, 94
  %v2294 = vpop.permute.xlu0 %2293
  %2295 = vrot.lane.b32.xlu0 %v2288, 94
  %v2296 = vpop.permute.xlu0 %2295
  %2297 = vrot.lane.b32.xlu0 %v2289, 94
  %v2298 = vpop.permute.xlu0 %2297
  %v2299 = vsel %vm1199, %v2294, %v2296
  %v2300 = vsel %vm1199, %v2296, %v2298
  %v2304 = vadd.f32 %v2237, %v2294
  %v2305 = vadd.f32 %v2238, %v2299
  %v2306 = vadd.f32 %v2239, %v2300
  %v2307 = vlaneseq
  %v2308 = vshrl.u32 %v2307, 7
  %v2309 = vsub.s32 6, %v2308
  %v2310 = vrot.slane %v2240, %v2309
  %v2311 = vlaneseq
  %v2312 = vshrl.u32 %v2311, 7
  %v2313 = vsub.s32 6, %v2312
  %v2314 = vrot.slane %v2241, %v2313
  %v2315 = vlaneseq
  %v2316 = vshrl.u32 %v2315, 7
  %v2317 = vsub.s32 6, %v2316
  %v2318 = vrot.slane %v2242, %v2317
  %v2319 = vmul.f32 %v1246, %v2310
  %v2320 = vmul.f32 %v1246, %v2314
  %v2321 = vmul.f32 %v1246, %v2318
  %2325 = vrot.lane.b32.xlu0 %v2319, 94
  %v2326 = vpop.permute.xlu0 %2325
  %2327 = vrot.lane.b32.xlu0 %v2320, 94
  %v2328 = vpop.permute.xlu0 %2327
  %2329 = vrot.lane.b32.xlu0 %v2321, 94
  %v2330 = vpop.permute.xlu0 %2329
  %v2331 = vsel %vm1199, %v2326, %v2328
  %v2332 = vsel %vm1199, %v2328, %v2330
  %v2336 = vadd.f32 %v2272, %v2326
  %v2337 = vadd.f32 %v2273, %v2331
  %v2338 = vadd.f32 %v2274, %v2332
  %v2339 = vlaneseq
  %v2340 = vshrl.u32 %v2339, 7
  %v2341 = vsub.s32 7, %v2340
  %v2342 = vrot.slane %v2240, %v2341
  %v2343 = vlaneseq
  %v2344 = vshrl.u32 %v2343, 7
  %v2345 = vsub.s32 7, %v2344
  %v2346 = vrot.slane %v2241, %v2345
  %v2347 = vlaneseq
  %v2348 = vshrl.u32 %v2347, 7
  %v2349 = vsub.s32 7, %v2348
  %v2350 = vrot.slane %v2242, %v2349
  %v2351 = vmul.f32 %v1282, %v2342
  %v2352 = vmul.f32 %v1282, %v2346
  %v2353 = vmul.f32 %v1282, %v2350
  %2357 = vrot.lane.b32.xlu0 %v2351, 94
  %v2358 = vpop.permute.xlu0 %2357
  %2359 = vrot.lane.b32.xlu0 %v2352, 94
  %v2360 = vpop.permute.xlu0 %2359
  %2361 = vrot.lane.b32.xlu0 %v2353, 94
  %v2362 = vpop.permute.xlu0 %2361
  %v2363 = vsel %vm1199, %v2358, %v2360
  %v2364 = vsel %vm1199, %v2360, %v2362
  %v2368 = vadd.f32 %v2304, %v2358
  %v2369 = vadd.f32 %v2305, %v2363
  %v2370 = vadd.f32 %v2306, %v2364
  %v2371 = vadd.f32 %v2336, %v2368
  %v2372 = vadd.f32 %v2337, %v2369
  %v2373 = vadd.f32 %v2338, %v2370
  %v2377 = vrot.slane %v2371, 4
  %v2378 = vrot.slane %v2372, 4
  %v2379 = vrot.slane %v2373, 4
  %vm2383 = vcmask 1043456
  %v2384 = vsel %vm2383, %v1316, %v2377
  %v2385 = vsel %vm2383, %v1317, %v2378
  %v2386 = vsel %vm2383, %v1318, %v2379
  %v2387 = vmax.f32 %v2384, 0.0
  %v2388 = vmax.f32 %v2385, 0.0
  %v2389 = vmax.f32 %v2386, 0.0
  %2393 = vrot.lane.b32.xlu0 %v2387, 17
  %v2394 = vpop.permute.xlu0 %2393
  %2395 = vrot.lane.b32.xlu0 %v2388, 17
  %v2396 = vpop.permute.xlu0 %2395
  %2397 = vrot.lane.b32.xlu0 %v2389, 17
  %v2398 = vpop.permute.xlu0 %2397
  %v2399 = vsel %vm1163, %v2394, %v2396
  %v2400 = vsel %vm1163, %v2396, %v2398
  %2403 = vst [vmem:[#allocation2 + $0x8] sm:$0xff] %v2399
  %2404 = vst [vmem:[#allocation2 + $0x10] sm:$0xff] %v2400
  %v2405 = vld [vmem:[%s4] sm:$0xf]
  %2407 = vset.pattern.permute.xlu0 0
  %2408 = vperm.xlu0 %2407, %v2405
  %v2409 = vpop.permute.xlu0 %2408
  %v2411 = vld [vmem:[#allocation2] sm:$0xf]
  %v2412 = vld [vmem:[#allocation2 + $0x8] sm:$0xf]
  %v2413 = vld [vmem:[#allocation2 + $0x10] sm:$0xf]
  %v2414 = vmul.f32 %v2411, %v62
  %v2415 = vmul.f32 %v2412, %v66
  %v2416 = vmul.f32 %v2413, %v64
  %v2417 = vld [vmem:[%s3] sm:$0xf]
  %2419 = vset.pattern.permute.xlu0 0
  %2420 = vperm.xlu0 %2419, %v2417
  %v2421 = vpop.permute.xlu0 %2420
  %v2423 = vlaneseq
  %v2424 = vshrl.u32 %v2423, 7
  %v2425 = vsub.s32 0, %v2424
  %v2426 = vrot.slane %v2414, %v2425
  %v2427 = vlaneseq
  %v2428 = vshrl.u32 %v2427, 7
  %v2429 = vsub.s32 0, %v2428
  %v2430 = vrot.slane %v2415, %v2429
  %v2431 = vlaneseq
  %v2432 = vshrl.u32 %v2431, 7
  %v2433 = vsub.s32 0, %v2432
  %v2434 = vrot.slane %v2416, %v2433
  %v2435 = vmul.f32 %v2421, %v2426
  %v2436 = vmul.f32 %v2421, %v2430
  %v2437 = vmul.f32 %v2421, %v2434
  %v2438 = vadd.f32 %v2409, %v2435
  %v2439 = vadd.f32 %v2409, %v2436
  %v2440 = vadd.f32 %v2409, %v2437
  %2441 = vset.pattern.permute.xlu0 1
  %2442 = vperm.xlu0 %2441, %v2417
  %v2443 = vpop.permute.xlu0 %2442
  %v2445 = vlaneseq
  %v2446 = vshrl.u32 %v2445, 7
  %v2447 = vsub.s32 1, %v2446
  %v2448 = vrot.slane %v2414, %v2447
  %v2449 = vlaneseq
  %v2450 = vshrl.u32 %v2449, 7
  %v2451 = vsub.s32 1, %v2450
  %v2452 = vrot.slane %v2415, %v2451
  %v2453 = vlaneseq
  %v2454 = vshrl.u32 %v2453, 7
  %v2455 = vsub.s32 1, %v2454
  %v2456 = vrot.slane %v2416, %v2455
  %v2457 = vmul.f32 %v2443, %v2448
  %v2458 = vmul.f32 %v2443, %v2452
  %v2459 = vmul.f32 %v2443, %v2456
  %v2460 = vadd.f32 %v2457, 0.0
  %v2461 = vadd.f32 %v2458, 0.0
  %v2462 = vadd.f32 %v2459, 0.0
  %2463 = vset.pattern.permute.xlu0 2
  %2464 = vperm.xlu0 %2463, %v2417
  %v2465 = vpop.permute.xlu0 %2464
  %v2467 = vlaneseq
  %v2468 = vshrl.u32 %v2467, 7
  %v2469 = vsub.s32 2, %v2468
  %v2470 = vrot.slane %v2414, %v2469
  %v2471 = vlaneseq
  %v2472 = vshrl.u32 %v2471, 7
  %v2473 = vsub.s32 2, %v2472
  %v2474 = vrot.slane %v2415, %v2473
  %v2475 = vlaneseq
  %v2476 = vshrl.u32 %v2475, 7
  %v2477 = vsub.s32 2, %v2476
  %v2478 = vrot.slane %v2416, %v2477
  %v2479 = vmul.f32 %v2465, %v2470
  %v2480 = vmul.f32 %v2465, %v2474
  %v2481 = vmul.f32 %v2465, %v2478
  %v2482 = vadd.f32 %v2438, %v2479
  %v2483 = vadd.f32 %v2439, %v2480
  %v2484 = vadd.f32 %v2440, %v2481
  %2485 = vset.pattern.permute.xlu0 3
  %2486 = vperm.xlu0 %2485, %v2417
  %v2487 = vpop.permute.xlu0 %2486
  %v2489 = vlaneseq
  %v2490 = vshrl.u32 %v2489, 7
  %v2491 = vsub.s32 3, %v2490
  %v2492 = vrot.slane %v2414, %v2491
  %v2493 = vlaneseq
  %v2494 = vshrl.u32 %v2493, 7
  %v2495 = vsub.s32 3, %v2494
  %v2496 = vrot.slane %v2415, %v2495
  %v2497 = vlaneseq
  %v2498 = vshrl.u32 %v2497, 7
  %v2499 = vsub.s32 3, %v2498
  %v2500 = vrot.slane %v2416, %v2499
  %v2501 = vmul.f32 %v2487, %v2492
  %v2502 = vmul.f32 %v2487, %v2496
  %v2503 = vmul.f32 %v2487, %v2500
  %v2504 = vadd.f32 %v2460, %v2501
  %v2505 = vadd.f32 %v2461, %v2502
  %v2506 = vadd.f32 %v2462, %v2503
  %2507 = vset.pattern.permute.xlu0 4
  %2508 = vperm.xlu0 %2507, %v2417
  %v2509 = vpop.permute.xlu0 %2508
  %v2511 = vlaneseq
  %v2512 = vshrl.u32 %v2511, 7
  %v2513 = vsub.s32 0, %v2512
  %v2514 = vrot.slane %v2411, %v2513
  %v2515 = vlaneseq
  %v2516 = vshrl.u32 %v2515, 7
  %v2517 = vsub.s32 0, %v2516
  %v2518 = vrot.slane %v2412, %v2517
  %v2519 = vlaneseq
  %v2520 = vshrl.u32 %v2519, 7
  %v2521 = vsub.s32 0, %v2520
  %v2522 = vrot.slane %v2413, %v2521
  %v2523 = vmul.f32 %v2509, %v2514
  %v2524 = vmul.f32 %v2509, %v2518
  %v2525 = vmul.f32 %v2509, %v2522
  %2529 = vrot.lane.b32.xlu0 %v2523, 127
  %v2530 = vpop.permute.xlu0 %2529
  %2531 = vrot.lane.b32.xlu0 %v2524, 127
  %v2532 = vpop.permute.xlu0 %2531
  %2533 = vrot.lane.b32.xlu0 %v2525, 127
  %v2534 = vpop.permute.xlu0 %2533
  %v2535 = vsel %vm191, %v2530, %v2532
  %v2536 = vsel %vm191, %v2532, %v2534
  %v2540 = vadd.f32 %v2482, %v2535
  %v2541 = vadd.f32 %v2483, %v2536
  %v2542 = vadd.f32 %v2484, %v2534
  %2543 = vset.pattern.permute.xlu0 5
  %2544 = vperm.xlu0 %2543, %v2417
  %v2545 = vpop.permute.xlu0 %2544
  %v2547 = vlaneseq
  %v2548 = vshrl.u32 %v2547, 7
  %v2549 = vsub.s32 1, %v2548
  %v2550 = vrot.slane %v2411, %v2549
  %v2551 = vlaneseq
  %v2552 = vshrl.u32 %v2551, 7
  %v2553 = vsub.s32 1, %v2552
  %v2554 = vrot.slane %v2412, %v2553
  %v2555 = vlaneseq
  %v2556 = vshrl.u32 %v2555, 7
  %v2557 = vsub.s32 1, %v2556
  %v2558 = vrot.slane %v2413, %v2557
  %v2559 = vmul.f32 %v2545, %v2550
  %v2560 = vmul.f32 %v2545, %v2554
  %v2561 = vmul.f32 %v2545, %v2558
  %2565 = vrot.lane.b32.xlu0 %v2559, 127
  %v2566 = vpop.permute.xlu0 %2565
  %2567 = vrot.lane.b32.xlu0 %v2560, 127
  %v2568 = vpop.permute.xlu0 %2567
  %2569 = vrot.lane.b32.xlu0 %v2561, 127
  %v2570 = vpop.permute.xlu0 %2569
  %v2571 = vsel %vm191, %v2566, %v2568
  %v2572 = vsel %vm191, %v2568, %v2570
  %v2576 = vadd.f32 %v2504, %v2571
  %v2577 = vadd.f32 %v2505, %v2572
  %v2578 = vadd.f32 %v2506, %v2570
  %2579 = vset.pattern.permute.xlu0 6
  %2580 = vperm.xlu0 %2579, %v2417
  %v2581 = vpop.permute.xlu0 %2580
  %v2583 = vlaneseq
  %v2584 = vshrl.u32 %v2583, 7
  %v2585 = vsub.s32 2, %v2584
  %v2586 = vrot.slane %v2411, %v2585
  %v2587 = vlaneseq
  %v2588 = vshrl.u32 %v2587, 7
  %v2589 = vsub.s32 2, %v2588
  %v2590 = vrot.slane %v2412, %v2589
  %v2591 = vlaneseq
  %v2592 = vshrl.u32 %v2591, 7
  %v2593 = vsub.s32 2, %v2592
  %v2594 = vrot.slane %v2413, %v2593
  %v2595 = vmul.f32 %v2581, %v2586
  %v2596 = vmul.f32 %v2581, %v2590
  %v2597 = vmul.f32 %v2581, %v2594
  %2601 = vrot.lane.b32.xlu0 %v2595, 127
  %v2602 = vpop.permute.xlu0 %2601
  %2603 = vrot.lane.b32.xlu0 %v2596, 127
  %v2604 = vpop.permute.xlu0 %2603
  %2605 = vrot.lane.b32.xlu0 %v2597, 127
  %v2606 = vpop.permute.xlu0 %2605
  %v2607 = vsel %vm191, %v2602, %v2604
  %v2608 = vsel %vm191, %v2604, %v2606
  %v2612 = vadd.f32 %v2540, %v2607
  %v2613 = vadd.f32 %v2541, %v2608
  %v2614 = vadd.f32 %v2542, %v2606
  %2615 = vset.pattern.permute.xlu0 7
  %2616 = vperm.xlu0 %2615, %v2417
  %v2617 = vpop.permute.xlu0 %2616
  %v2619 = vlaneseq
  %v2620 = vshrl.u32 %v2619, 7
  %v2621 = vsub.s32 3, %v2620
  %v2622 = vrot.slane %v2411, %v2621
  %v2623 = vlaneseq
  %v2624 = vshrl.u32 %v2623, 7
  %v2625 = vsub.s32 3, %v2624
  %v2626 = vrot.slane %v2412, %v2625
  %v2627 = vlaneseq
  %v2628 = vshrl.u32 %v2627, 7
  %v2629 = vsub.s32 3, %v2628
  %v2630 = vrot.slane %v2413, %v2629
  %v2631 = vmul.f32 %v2617, %v2622
  %v2632 = vmul.f32 %v2617, %v2626
  %v2633 = vmul.f32 %v2617, %v2630
  %2637 = vrot.lane.b32.xlu0 %v2631, 127
  %v2638 = vpop.permute.xlu0 %2637
  %2639 = vrot.lane.b32.xlu0 %v2632, 127
  %v2640 = vpop.permute.xlu0 %2639
  %2641 = vrot.lane.b32.xlu0 %v2633, 127
  %v2642 = vpop.permute.xlu0 %2641
  %v2643 = vsel %vm191, %v2638, %v2640
  %v2644 = vsel %vm191, %v2640, %v2642
  %v2648 = vadd.f32 %v2576, %v2643
  %v2649 = vadd.f32 %v2577, %v2644
  %v2650 = vadd.f32 %v2578, %v2642
  %v2651 = vmul.f32 %v2411, %v309
  %v2652 = vmul.f32 %v2412, %v313
  %v2653 = vmul.f32 %v2413, %v311
  %2654 = vset.pattern.permute.xlu0 8
  %2655 = vperm.xlu0 %2654, %v2417
  %v2656 = vpop.permute.xlu0 %2655
  %v2658 = vlaneseq
  %v2659 = vshrl.u32 %v2658, 7
  %v2660 = vsub.s32 0, %v2659
  %v2661 = vrot.slane %v2651, %v2660
  %v2662 = vlaneseq
  %v2663 = vshrl.u32 %v2662, 7
  %v2664 = vsub.s32 0, %v2663
  %v2665 = vrot.slane %v2652, %v2664
  %v2666 = vlaneseq
  %v2667 = vshrl.u32 %v2666, 7
  %v2668 = vsub.s32 0, %v2667
  %v2669 = vrot.slane %v2653, %v2668
  %v2670 = vmul.f32 %v2656, %v2661
  %v2671 = vmul.f32 %v2656, %v2665
  %v2672 = vmul.f32 %v2656, %v2669
  %2676 = vrot.lane.b32.xlu0 %v2670, 126
  %v2677 = vpop.permute.xlu0 %2676
  %2678 = vrot.lane.b32.xlu0 %v2671, 126
  %v2679 = vpop.permute.xlu0 %2678
  %2680 = vrot.lane.b32.xlu0 %v2672, 126
  %v2681 = vpop.permute.xlu0 %2680
  %v2682 = vsel %vm348, %v2677, %v2679
  %v2683 = vsel %vm348, %v2679, %v2681
  %v2687 = vadd.f32 %v2612, %v2682
  %v2688 = vadd.f32 %v2613, %v2683
  %v2689 = vadd.f32 %v2614, %v2681
  %2690 = vset.pattern.permute.xlu0 9
  %2691 = vperm.xlu0 %2690, %v2417
  %v2692 = vpop.permute.xlu0 %2691
  %v2694 = vlaneseq
  %v2695 = vshrl.u32 %v2694, 7
  %v2696 = vsub.s32 1, %v2695
  %v2697 = vrot.slane %v2651, %v2696
  %v2698 = vlaneseq
  %v2699 = vshrl.u32 %v2698, 7
  %v2700 = vsub.s32 1, %v2699
  %v2701 = vrot.slane %v2652, %v2700
  %v2702 = vlaneseq
  %v2703 = vshrl.u32 %v2702, 7
  %v2704 = vsub.s32 1, %v2703
  %v2705 = vrot.slane %v2653, %v2704
  %v2706 = vmul.f32 %v2692, %v2697
  %v2707 = vmul.f32 %v2692, %v2701
  %v2708 = vmul.f32 %v2692, %v2705
  %2712 = vrot.lane.b32.xlu0 %v2706, 126
  %v2713 = vpop.permute.xlu0 %2712
  %2714 = vrot.lane.b32.xlu0 %v2707, 126
  %v2715 = vpop.permute.xlu0 %2714
  %2716 = vrot.lane.b32.xlu0 %v2708, 126
  %v2717 = vpop.permute.xlu0 %2716
  %v2718 = vsel %vm348, %v2713, %v2715
  %v2719 = vsel %vm348, %v2715, %v2717
  %v2723 = vadd.f32 %v2648, %v2718
  %v2724 = vadd.f32 %v2649, %v2719
  %v2725 = vadd.f32 %v2650, %v2717
  %2726 = vset.pattern.permute.xlu0 10
  %2727 = vperm.xlu0 %2726, %v2417
  %v2728 = vpop.permute.xlu0 %2727
  %v2730 = vlaneseq
  %v2731 = vshrl.u32 %v2730, 7
  %v2732 = vsub.s32 2, %v2731
  %v2733 = vrot.slane %v2651, %v2732
  %v2734 = vlaneseq
  %v2735 = vshrl.u32 %v2734, 7
  %v2736 = vsub.s32 2, %v2735
  %v2737 = vrot.slane %v2652, %v2736
  %v2738 = vlaneseq
  %v2739 = vshrl.u32 %v2738, 7
  %v2740 = vsub.s32 2, %v2739
  %v2741 = vrot.slane %v2653, %v2740
  %v2742 = vmul.f32 %v2728, %v2733
  %v2743 = vmul.f32 %v2728, %v2737
  %v2744 = vmul.f32 %v2728, %v2741
  %2748 = vrot.lane.b32.xlu0 %v2742, 126
  %v2749 = vpop.permute.xlu0 %2748
  %2750 = vrot.lane.b32.xlu0 %v2743, 126
  %v2751 = vpop.permute.xlu0 %2750
  %2752 = vrot.lane.b32.xlu0 %v2744, 126
  %v2753 = vpop.permute.xlu0 %2752
  %v2754 = vsel %vm348, %v2749, %v2751
  %v2755 = vsel %vm348, %v2751, %v2753
  %v2759 = vadd.f32 %v2687, %v2754
  %v2760 = vadd.f32 %v2688, %v2755
  %v2761 = vadd.f32 %v2689, %v2753
  %2762 = vset.pattern.permute.xlu0 11
  %2763 = vperm.xlu0 %2762, %v2417
  %v2764 = vpop.permute.xlu0 %2763
  %v2766 = vlaneseq
  %v2767 = vshrl.u32 %v2766, 7
  %v2768 = vsub.s32 3, %v2767
  %v2769 = vrot.slane %v2651, %v2768
  %v2770 = vlaneseq
  %v2771 = vshrl.u32 %v2770, 7
  %v2772 = vsub.s32 3, %v2771
  %v2773 = vrot.slane %v2652, %v2772
  %v2774 = vlaneseq
  %v2775 = vshrl.u32 %v2774, 7
  %v2776 = vsub.s32 3, %v2775
  %v2777 = vrot.slane %v2653, %v2776
  %v2778 = vmul.f32 %v2764, %v2769
  %v2779 = vmul.f32 %v2764, %v2773
  %v2780 = vmul.f32 %v2764, %v2777
  %2784 = vrot.lane.b32.xlu0 %v2778, 126
  %v2785 = vpop.permute.xlu0 %2784
  %2786 = vrot.lane.b32.xlu0 %v2779, 126
  %v2787 = vpop.permute.xlu0 %2786
  %2788 = vrot.lane.b32.xlu0 %v2780, 126
  %v2789 = vpop.permute.xlu0 %2788
  %v2790 = vsel %vm348, %v2785, %v2787
  %v2791 = vsel %vm348, %v2787, %v2789
  %v2795 = vadd.f32 %v2723, %v2790
  %v2796 = vadd.f32 %v2724, %v2791
  %v2797 = vadd.f32 %v2725, %v2789
  %v2798 = vmul.f32 %v2411, %v466
  %v2799 = vmul.f32 %v2412, %v469
  %v2800 = vmul.f32 %v2413, %v468
  %2801 = vset.pattern.permute.xlu0 12
  %2802 = vperm.xlu0 %2801, %v2417
  %v2803 = vpop.permute.xlu0 %2802
  %v2805 = vlaneseq
  %v2806 = vshrl.u32 %v2805, 7
  %v2807 = vsub.s32 0, %v2806
  %v2808 = vrot.slane %v2798, %v2807
  %v2809 = vlaneseq
  %v2810 = vshrl.u32 %v2809, 7
  %v2811 = vsub.s32 0, %v2810
  %v2812 = vrot.slane %v2799, %v2811
  %v2813 = vlaneseq
  %v2814 = vshrl.u32 %v2813, 7
  %v2815 = vsub.s32 0, %v2814
  %v2816 = vrot.slane %v2800, %v2815
  %v2817 = vmul.f32 %v2803, %v2808
  %v2818 = vmul.f32 %v2803, %v2812
  %v2819 = vmul.f32 %v2803, %v2816
  %2823 = vrot.lane.b32.xlu0 %v2817, 112
  %v2824 = vpop.permute.xlu0 %2823
  %2825 = vrot.lane.b32.xlu0 %v2818, 112
  %v2826 = vpop.permute.xlu0 %2825
  %2827 = vrot.lane.b32.xlu0 %v2819, 112
  %v2828 = vpop.permute.xlu0 %2827
  %v2829 = vsel %vm504, %v2824, %v2826
  %v2830 = vsel %vm504, %v2826, %v2828
  %v2834 = vadd.f32 %v2759, %v2829
  %v2835 = vadd.f32 %v2760, %v2830
  %v2836 = vadd.f32 %v2761, %v2828
  %2837 = vset.pattern.permute.xlu0 13
  %2838 = vperm.xlu0 %2837, %v2417
  %v2839 = vpop.permute.xlu0 %2838
  %v2841 = vlaneseq
  %v2842 = vshrl.u32 %v2841, 7
  %v2843 = vsub.s32 1, %v2842
  %v2844 = vrot.slane %v2798, %v2843
  %v2845 = vlaneseq
  %v2846 = vshrl.u32 %v2845, 7
  %v2847 = vsub.s32 1, %v2846
  %v2848 = vrot.slane %v2799, %v2847
  %v2849 = vlaneseq
  %v2850 = vshrl.u32 %v2849, 7
  %v2851 = vsub.s32 1, %v2850
  %v2852 = vrot.slane %v2800, %v2851
  %v2853 = vmul.f32 %v2839, %v2844
  %v2854 = vmul.f32 %v2839, %v2848
  %v2855 = vmul.f32 %v2839, %v2852
  %2859 = vrot.lane.b32.xlu0 %v2853, 112
  %v2860 = vpop.permute.xlu0 %2859
  %2861 = vrot.lane.b32.xlu0 %v2854, 112
  %v2862 = vpop.permute.xlu0 %2861
  %2863 = vrot.lane.b32.xlu0 %v2855, 112
  %v2864 = vpop.permute.xlu0 %2863
  %v2865 = vsel %vm504, %v2860, %v2862
  %v2866 = vsel %vm504, %v2862, %v2864
  %v2870 = vadd.f32 %v2795, %v2865
  %v2871 = vadd.f32 %v2796, %v2866
  %v2872 = vadd.f32 %v2797, %v2864
  %2873 = vset.pattern.permute.xlu0 14
  %2874 = vperm.xlu0 %2873, %v2417
  %v2875 = vpop.permute.xlu0 %2874
  %v2877 = vlaneseq
  %v2878 = vshrl.u32 %v2877, 7
  %v2879 = vsub.s32 2, %v2878
  %v2880 = vrot.slane %v2798, %v2879
  %v2881 = vlaneseq
  %v2882 = vshrl.u32 %v2881, 7
  %v2883 = vsub.s32 2, %v2882
  %v2884 = vrot.slane %v2799, %v2883
  %v2885 = vlaneseq
  %v2886 = vshrl.u32 %v2885, 7
  %v2887 = vsub.s32 2, %v2886
  %v2888 = vrot.slane %v2800, %v2887
  %v2889 = vmul.f32 %v2875, %v2880
  %v2890 = vmul.f32 %v2875, %v2884
  %v2891 = vmul.f32 %v2875, %v2888
  %2895 = vrot.lane.b32.xlu0 %v2889, 112
  %v2896 = vpop.permute.xlu0 %2895
  %2897 = vrot.lane.b32.xlu0 %v2890, 112
  %v2898 = vpop.permute.xlu0 %2897
  %2899 = vrot.lane.b32.xlu0 %v2891, 112
  %v2900 = vpop.permute.xlu0 %2899
  %v2901 = vsel %vm504, %v2896, %v2898
  %v2902 = vsel %vm504, %v2898, %v2900
  %v2906 = vadd.f32 %v2834, %v2901
  %v2907 = vadd.f32 %v2835, %v2902
  %v2908 = vadd.f32 %v2836, %v2900
  %2909 = vset.pattern.permute.xlu0 15
  %2910 = vperm.xlu0 %2909, %v2417
  %v2911 = vpop.permute.xlu0 %2910
  %v2913 = vlaneseq
  %v2914 = vshrl.u32 %v2913, 7
  %v2915 = vsub.s32 3, %v2914
  %v2916 = vrot.slane %v2798, %v2915
  %v2917 = vlaneseq
  %v2918 = vshrl.u32 %v2917, 7
  %v2919 = vsub.s32 3, %v2918
  %v2920 = vrot.slane %v2799, %v2919
  %v2921 = vlaneseq
  %v2922 = vshrl.u32 %v2921, 7
  %v2923 = vsub.s32 3, %v2922
  %v2924 = vrot.slane %v2800, %v2923
  %v2925 = vmul.f32 %v2911, %v2916
  %v2926 = vmul.f32 %v2911, %v2920
  %v2927 = vmul.f32 %v2911, %v2924
  %2931 = vrot.lane.b32.xlu0 %v2925, 112
  %v2932 = vpop.permute.xlu0 %2931
  %2933 = vrot.lane.b32.xlu0 %v2926, 112
  %v2934 = vpop.permute.xlu0 %2933
  %2935 = vrot.lane.b32.xlu0 %v2927, 112
  %v2936 = vpop.permute.xlu0 %2935
  %v2937 = vsel %vm504, %v2932, %v2934
  %v2938 = vsel %vm504, %v2934, %v2936
  %v2942 = vadd.f32 %v2870, %v2937
  %v2943 = vadd.f32 %v2871, %v2938
  %v2944 = vadd.f32 %v2872, %v2936
  %2945 = vset.pattern.permute.xlu0 16
  %2946 = vperm.xlu0 %2945, %v2417
  %v2947 = vpop.permute.xlu0 %2946
  %v2949 = vmul.f32 %v2947, %v2518
  %v2950 = vmul.f32 %v2947, %v2522
  %2953 = vrot.lane.b32.xlu0 %v2949, 111
  %v2954 = vpop.permute.xlu0 %2953
  %2955 = vrot.lane.b32.xlu0 %v2950, 111
  %v2956 = vpop.permute.xlu0 %2955
  %v2957 = vsel %vm65, %v2954, %v2956
  %v2961 = vadd.f32 %v2906, %v2954
  %v2962 = vadd.f32 %v2907, %v2957
  %v2963 = vadd.f32 %v2908, %v2956
  %2964 = vset.pattern.permute.xlu0 17
  %2965 = vperm.xlu0 %2964, %v2417
  %v2966 = vpop.permute.xlu0 %2965
  %v2968 = vmul.f32 %v2966, %v2554
  %v2969 = vmul.f32 %v2966, %v2558
  %2972 = vrot.lane.b32.xlu0 %v2968, 111
  %v2973 = vpop.permute.xlu0 %2972
  %2974 = vrot.lane.b32.xlu0 %v2969, 111
  %v2975 = vpop.permute.xlu0 %2974
  %v2976 = vsel %vm65, %v2973, %v2975
  %v2980 = vadd.f32 %v2942, %v2973
  %v2981 = vadd.f32 %v2943, %v2976
  %v2982 = vadd.f32 %v2944, %v2975
  %2983 = vset.pattern.permute.xlu0 18
  %2984 = vperm.xlu0 %2983, %v2417
  %v2985 = vpop.permute.xlu0 %2984
  %v2987 = vmul.f32 %v2985, %v2590
  %v2988 = vmul.f32 %v2985, %v2594
  %2991 = vrot.lane.b32.xlu0 %v2987, 111
  %v2992 = vpop.permute.xlu0 %2991
  %2993 = vrot.lane.b32.xlu0 %v2988, 111
  %v2994 = vpop.permute.xlu0 %2993
  %v2995 = vsel %vm65, %v2992, %v2994
  %v2999 = vadd.f32 %v2961, %v2992
  %v3000 = vadd.f32 %v2962, %v2995
  %v3001 = vadd.f32 %v2963, %v2994
  %3002 = vset.pattern.permute.xlu0 19
  %3003 = vperm.xlu0 %3002, %v2417
  %v3004 = vpop.permute.xlu0 %3003
  %v3006 = vmul.f32 %v3004, %v2626
  %v3007 = vmul.f32 %v3004, %v2630
  %3010 = vrot.lane.b32.xlu0 %v3006, 111
  %v3011 = vpop.permute.xlu0 %3010
  %3012 = vrot.lane.b32.xlu0 %v3007, 111
  %v3013 = vpop.permute.xlu0 %3012
  %v3014 = vsel %vm65, %v3011, %v3013
  %v3018 = vadd.f32 %v2980, %v3011
  %v3019 = vadd.f32 %v2981, %v3014
  %v3020 = vadd.f32 %v2982, %v3013
  %v3021 = vld [vmem:[#allocation2 + $0x8] sm:$0xf]
  %v3022 = vld [vmem:[#allocation2 + $0x10] sm:$0xf]
  %v3023 = vld [vmem:[#allocation2 + $0x18] sm:$0xf]
  %v3024 = vmul.f32 %v3021, %v701
  %v3025 = vmul.f32 %v3022, %v705
  %v3026 = vmul.f32 %v3023, %v703
  %3027 = vset.pattern.permute.xlu0 20
  %3028 = vperm.xlu0 %3027, %v2417
  %v3029 = vpop.permute.xlu0 %3028
  %v3031 = vlaneseq
  %v3032 = vshrl.u32 %v3031, 7
  %v3033 = vsub.s32 0, %v3032
  %v3034 = vrot.slane %v3024, %v3033
  %v3035 = vlaneseq
  %v3036 = vshrl.u32 %v3035, 7
  %v3037 = vsub.s32 0, %v3036
  %v3038 = vrot.slane %v3025, %v3037
  %v3039 = vlaneseq
  %v3040 = vshrl.u32 %v3039, 7
  %v3041 = vsub.s32 0, %v3040
  %v3042 = vrot.slane %v3026, %v3041
  %v3043 = vmul.f32 %v3029, %v3034
  %v3044 = vmul.f32 %v3029, %v3038
  %v3045 = vmul.f32 %v3029, %v3042
  %3049 = vrot.lane.b32.xlu0 %v3043, 110
  %v3050 = vpop.permute.xlu0 %3049
  %3051 = vrot.lane.b32.xlu0 %v3044, 110
  %v3052 = vpop.permute.xlu0 %3051
  %3053 = vrot.lane.b32.xlu0 %v3045, 110
  %v3054 = vpop.permute.xlu0 %3053
  %v3055 = vsel %vm740, %v3050, %v3052
  %v3056 = vsel %vm740, %v3052, %v3054
  %v3060 = vadd.f32 %v2999, %v3050
  %v3061 = vadd.f32 %v3000, %v3055
  %v3062 = vadd.f32 %v3001, %v3056
  %3063 = vset.pattern.permute.xlu0 21
  %3064 = vperm.xlu0 %3063, %v2417
  %v3065 = vpop.permute.xlu0 %3064
  %v3067 = vlaneseq
  %v3068 = vshrl.u32 %v3067, 7
  %v3069 = vsub.s32 1, %v3068
  %v3070 = vrot.slane %v3024, %v3069
  %v3071 = vlaneseq
  %v3072 = vshrl.u32 %v3071, 7
  %v3073 = vsub.s32 1, %v3072
  %v3074 = vrot.slane %v3025, %v3073
  %v3075 = vlaneseq
  %v3076 = vshrl.u32 %v3075, 7
  %v3077 = vsub.s32 1, %v3076
  %v3078 = vrot.slane %v3026, %v3077
  %v3079 = vmul.f32 %v3065, %v3070
  %v3080 = vmul.f32 %v3065, %v3074
  %v3081 = vmul.f32 %v3065, %v3078
  %3085 = vrot.lane.b32.xlu0 %v3079, 110
  %v3086 = vpop.permute.xlu0 %3085
  %3087 = vrot.lane.b32.xlu0 %v3080, 110
  %v3088 = vpop.permute.xlu0 %3087
  %3089 = vrot.lane.b32.xlu0 %v3081, 110
  %v3090 = vpop.permute.xlu0 %3089
  %v3091 = vsel %vm740, %v3086, %v3088
  %v3092 = vsel %vm740, %v3088, %v3090
  %v3096 = vadd.f32 %v3018, %v3086
  %v3097 = vadd.f32 %v3019, %v3091
  %v3098 = vadd.f32 %v3020, %v3092
  %3099 = vset.pattern.permute.xlu0 22
  %3100 = vperm.xlu0 %3099, %v2417
  %v3101 = vpop.permute.xlu0 %3100
  %v3103 = vlaneseq
  %v3104 = vshrl.u32 %v3103, 7
  %v3105 = vsub.s32 2, %v3104
  %v3106 = vrot.slane %v3024, %v3105
  %v3107 = vlaneseq
  %v3108 = vshrl.u32 %v3107, 7
  %v3109 = vsub.s32 2, %v3108
  %v3110 = vrot.slane %v3025, %v3109
  %v3111 = vlaneseq
  %v3112 = vshrl.u32 %v3111, 7
  %v3113 = vsub.s32 2, %v3112
  %v3114 = vrot.slane %v3026, %v3113
  %v3115 = vmul.f32 %v3101, %v3106
  %v3116 = vmul.f32 %v3101, %v3110
  %v3117 = vmul.f32 %v3101, %v3114
  %3121 = vrot.lane.b32.xlu0 %v3115, 110
  %v3122 = vpop.permute.xlu0 %3121
  %3123 = vrot.lane.b32.xlu0 %v3116, 110
  %v3124 = vpop.permute.xlu0 %3123
  %3125 = vrot.lane.b32.xlu0 %v3117, 110
  %v3126 = vpop.permute.xlu0 %3125
  %v3127 = vsel %vm740, %v3122, %v3124
  %v3128 = vsel %vm740, %v3124, %v3126
  %v3132 = vadd.f32 %v3060, %v3122
  %v3133 = vadd.f32 %v3061, %v3127
  %v3134 = vadd.f32 %v3062, %v3128
  %3135 = vset.pattern.permute.xlu0 23
  %3136 = vperm.xlu0 %3135, %v2417
  %v3137 = vpop.permute.xlu0 %3136
  %v3139 = vlaneseq
  %v3140 = vshrl.u32 %v3139, 7
  %v3141 = vsub.s32 3, %v3140
  %v3142 = vrot.slane %v3024, %v3141
  %v3143 = vlaneseq
  %v3144 = vshrl.u32 %v3143, 7
  %v3145 = vsub.s32 3, %v3144
  %v3146 = vrot.slane %v3025, %v3145
  %v3147 = vlaneseq
  %v3148 = vshrl.u32 %v3147, 7
  %v3149 = vsub.s32 3, %v3148
  %v3150 = vrot.slane %v3026, %v3149
  %v3151 = vmul.f32 %v3137, %v3142
  %v3152 = vmul.f32 %v3137, %v3146
  %v3153 = vmul.f32 %v3137, %v3150
  %3157 = vrot.lane.b32.xlu0 %v3151, 110
  %v3158 = vpop.permute.xlu0 %3157
  %3159 = vrot.lane.b32.xlu0 %v3152, 110
  %v3160 = vpop.permute.xlu0 %3159
  %3161 = vrot.lane.b32.xlu0 %v3153, 110
  %v3162 = vpop.permute.xlu0 %3161
  %v3163 = vsel %vm740, %v3158, %v3160
  %v3164 = vsel %vm740, %v3160, %v3162
  %v3168 = vadd.f32 %v3096, %v3158
  %v3169 = vadd.f32 %v3097, %v3163
  %v3170 = vadd.f32 %v3098, %v3164
  %v3171 = vmul.f32 %v3021, %v858
  %v3172 = vmul.f32 %v3022, %v862
  %v3173 = vmul.f32 %v3023, %v860
  %3174 = vset.pattern.permute.xlu0 24
  %3175 = vperm.xlu0 %3174, %v2417
  %v3176 = vpop.permute.xlu0 %3175
  %v3178 = vlaneseq
  %v3179 = vshrl.u32 %v3178, 7
  %v3180 = vsub.s32 0, %v3179
  %v3181 = vrot.slane %v3171, %v3180
  %v3182 = vlaneseq
  %v3183 = vshrl.u32 %v3182, 7
  %v3184 = vsub.s32 0, %v3183
  %v3185 = vrot.slane %v3172, %v3184
  %v3186 = vlaneseq
  %v3187 = vshrl.u32 %v3186, 7
  %v3188 = vsub.s32 0, %v3187
  %v3189 = vrot.slane %v3173, %v3188
  %v3190 = vmul.f32 %v3176, %v3181
  %v3191 = vmul.f32 %v3176, %v3185
  %v3192 = vmul.f32 %v3176, %v3189
  %3196 = vrot.lane.b32.xlu0 %v3190, 96
  %v3197 = vpop.permute.xlu0 %3196
  %3198 = vrot.lane.b32.xlu0 %v3191, 96
  %v3199 = vpop.permute.xlu0 %3198
  %3200 = vrot.lane.b32.xlu0 %v3192, 96
  %v3201 = vpop.permute.xlu0 %3200
  %v3202 = vsel %vm897, %v3197, %v3199
  %v3203 = vsel %vm897, %v3199, %v3201
  %v3207 = vadd.f32 %v3132, %v3197
  %v3208 = vadd.f32 %v3133, %v3202
  %v3209 = vadd.f32 %v3134, %v3203
  %3210 = vset.pattern.permute.xlu0 25
  %3211 = vperm.xlu0 %3210, %v2417
  %v3212 = vpop.permute.xlu0 %3211
  %v3214 = vlaneseq
  %v3215 = vshrl.u32 %v3214, 7
  %v3216 = vsub.s32 1, %v3215
  %v3217 = vrot.slane %v3171, %v3216
  %v3218 = vlaneseq
  %v3219 = vshrl.u32 %v3218, 7
  %v3220 = vsub.s32 1, %v3219
  %v3221 = vrot.slane %v3172, %v3220
  %v3222 = vlaneseq
  %v3223 = vshrl.u32 %v3222, 7
  %v3224 = vsub.s32 1, %v3223
  %v3225 = vrot.slane %v3173, %v3224
  %v3226 = vmul.f32 %v3212, %v3217
  %v3227 = vmul.f32 %v3212, %v3221
  %v3228 = vmul.f32 %v3212, %v3225
  %3232 = vrot.lane.b32.xlu0 %v3226, 96
  %v3233 = vpop.permute.xlu0 %3232
  %3234 = vrot.lane.b32.xlu0 %v3227, 96
  %v3235 = vpop.permute.xlu0 %3234
  %3236 = vrot.lane.b32.xlu0 %v3228, 96
  %v3237 = vpop.permute.xlu0 %3236
  %v3238 = vsel %vm897, %v3233, %v3235
  %v3239 = vsel %vm897, %v3235, %v3237
  %v3243 = vadd.f32 %v3168, %v3233
  %v3244 = vadd.f32 %v3169, %v3238
  %v3245 = vadd.f32 %v3170, %v3239
  %3246 = vset.pattern.permute.xlu0 26
  %3247 = vperm.xlu0 %3246, %v2417
  %v3248 = vpop.permute.xlu0 %3247
  %v3250 = vlaneseq
  %v3251 = vshrl.u32 %v3250, 7
  %v3252 = vsub.s32 2, %v3251
  %v3253 = vrot.slane %v3171, %v3252
  %v3254 = vlaneseq
  %v3255 = vshrl.u32 %v3254, 7
  %v3256 = vsub.s32 2, %v3255
  %v3257 = vrot.slane %v3172, %v3256
  %v3258 = vlaneseq
  %v3259 = vshrl.u32 %v3258, 7
  %v3260 = vsub.s32 2, %v3259
  %v3261 = vrot.slane %v3173, %v3260
  %v3262 = vmul.f32 %v3248, %v3253
  %v3263 = vmul.f32 %v3248, %v3257
  %v3264 = vmul.f32 %v3248, %v3261
  %3268 = vrot.lane.b32.xlu0 %v3262, 96
  %v3269 = vpop.permute.xlu0 %3268
  %3270 = vrot.lane.b32.xlu0 %v3263, 96
  %v3271 = vpop.permute.xlu0 %3270
  %3272 = vrot.lane.b32.xlu0 %v3264, 96
  %v3273 = vpop.permute.xlu0 %3272
  %v3274 = vsel %vm897, %v3269, %v3271
  %v3275 = vsel %vm897, %v3271, %v3273
  %v3279 = vadd.f32 %v3207, %v3269
  %v3280 = vadd.f32 %v3208, %v3274
  %v3281 = vadd.f32 %v3209, %v3275
  %3282 = vset.pattern.permute.xlu0 27
  %3283 = vperm.xlu0 %3282, %v2417
  %v3284 = vpop.permute.xlu0 %3283
  %v3286 = vlaneseq
  %v3287 = vshrl.u32 %v3286, 7
  %v3288 = vsub.s32 3, %v3287
  %v3289 = vrot.slane %v3171, %v3288
  %v3290 = vlaneseq
  %v3291 = vshrl.u32 %v3290, 7
  %v3292 = vsub.s32 3, %v3291
  %v3293 = vrot.slane %v3172, %v3292
  %v3294 = vlaneseq
  %v3295 = vshrl.u32 %v3294, 7
  %v3296 = vsub.s32 3, %v3295
  %v3297 = vrot.slane %v3173, %v3296
  %v3298 = vmul.f32 %v3284, %v3289
  %v3299 = vmul.f32 %v3284, %v3293
  %v3300 = vmul.f32 %v3284, %v3297
  %3304 = vrot.lane.b32.xlu0 %v3298, 96
  %v3305 = vpop.permute.xlu0 %3304
  %3306 = vrot.lane.b32.xlu0 %v3299, 96
  %v3307 = vpop.permute.xlu0 %3306
  %3308 = vrot.lane.b32.xlu0 %v3300, 96
  %v3309 = vpop.permute.xlu0 %3308
  %v3310 = vsel %vm897, %v3305, %v3307
  %v3311 = vsel %vm897, %v3307, %v3309
  %v3315 = vadd.f32 %v3243, %v3305
  %v3316 = vadd.f32 %v3244, %v3310
  %v3317 = vadd.f32 %v3245, %v3311
  %3318 = vset.pattern.permute.xlu0 28
  %3319 = vperm.xlu0 %3318, %v2417
  %v3320 = vpop.permute.xlu0 %3319
  %v3322 = vlaneseq
  %v3323 = vshrl.u32 %v3322, 7
  %v3324 = vsub.s32 0, %v3323
  %v3325 = vrot.slane %v3021, %v3324
  %v3326 = vlaneseq
  %v3327 = vshrl.u32 %v3326, 7
  %v3328 = vsub.s32 0, %v3327
  %v3329 = vrot.slane %v3022, %v3328
  %v3330 = vlaneseq
  %v3331 = vshrl.u32 %v3330, 7
  %v3332 = vsub.s32 0, %v3331
  %v3333 = vrot.slane %v3023, %v3332
  %v3334 = vmul.f32 %v3320, %v3325
  %v3335 = vmul.f32 %v3320, %v3329
  %v3336 = vmul.f32 %v3320, %v3333
  %3340 = vrot.lane.b32.xlu0 %v3334, 95
  %v3341 = vpop.permute.xlu0 %3340
  %3342 = vrot.lane.b32.xlu0 %v3335, 95
  %v3343 = vpop.permute.xlu0 %3342
  %3344 = vrot.lane.b32.xlu0 %v3336, 95
  %v3345 = vpop.permute.xlu0 %3344
  %v3346 = vsel %vm1042, %v3341, %v3343
  %v3347 = vsel %vm1042, %v3343, %v3345
  %v3351 = vadd.f32 %v3279, %v3341
  %v3352 = vadd.f32 %v3280, %v3346
  %v3353 = vadd.f32 %v3281, %v3347
  %3354 = vset.pattern.permute.xlu0 29
  %3355 = vperm.xlu0 %3354, %v2417
  %v3356 = vpop.permute.xlu0 %3355
  %v3358 = vlaneseq
  %v3359 = vshrl.u32 %v3358, 7
  %v3360 = vsub.s32 1, %v3359
  %v3361 = vrot.slane %v3021, %v3360
  %v3362 = vlaneseq
  %v3363 = vshrl.u32 %v3362, 7
  %v3364 = vsub.s32 1, %v3363
  %v3365 = vrot.slane %v3022, %v3364
  %v3366 = vlaneseq
  %v3367 = vshrl.u32 %v3366, 7
  %v3368 = vsub.s32 1, %v3367
  %v3369 = vrot.slane %v3023, %v3368
  %v3370 = vmul.f32 %v3356, %v3361
  %v3371 = vmul.f32 %v3356, %v3365
  %v3372 = vmul.f32 %v3356, %v3369
  %3376 = vrot.lane.b32.xlu0 %v3370, 95
  %v3377 = vpop.permute.xlu0 %3376
  %3378 = vrot.lane.b32.xlu0 %v3371, 95
  %v3379 = vpop.permute.xlu0 %3378
  %3380 = vrot.lane.b32.xlu0 %v3372, 95
  %v3381 = vpop.permute.xlu0 %3380
  %v3382 = vsel %vm1042, %v3377, %v3379
  %v3383 = vsel %vm1042, %v3379, %v3381
  %v3387 = vadd.f32 %v3315, %v3377
  %v3388 = vadd.f32 %v3316, %v3382
  %v3389 = vadd.f32 %v3317, %v3383
  %3390 = vset.pattern.permute.xlu0 30
  %3391 = vperm.xlu0 %3390, %v2417
  %v3392 = vpop.permute.xlu0 %3391
  %v3394 = vlaneseq
  %v3395 = vshrl.u32 %v3394, 7
  %v3396 = vsub.s32 2, %v3395
  %v3397 = vrot.slane %v3021, %v3396
  %v3398 = vlaneseq
  %v3399 = vshrl.u32 %v3398, 7
  %v3400 = vsub.s32 2, %v3399
  %v3401 = vrot.slane %v3022, %v3400
  %v3402 = vlaneseq
  %v3403 = vshrl.u32 %v3402, 7
  %v3404 = vsub.s32 2, %v3403
  %v3405 = vrot.slane %v3023, %v3404
  %v3406 = vmul.f32 %v3392, %v3397
  %v3407 = vmul.f32 %v3392, %v3401
  %v3408 = vmul.f32 %v3392, %v3405
  %3412 = vrot.lane.b32.xlu0 %v3406, 95
  %v3413 = vpop.permute.xlu0 %3412
  %3414 = vrot.lane.b32.xlu0 %v3407, 95
  %v3415 = vpop.permute.xlu0 %3414
  %3416 = vrot.lane.b32.xlu0 %v3408, 95
  %v3417 = vpop.permute.xlu0 %3416
  %v3418 = vsel %vm1042, %v3413, %v3415
  %v3419 = vsel %vm1042, %v3415, %v3417
  %v3423 = vadd.f32 %v3351, %v3413
  %v3424 = vadd.f32 %v3352, %v3418
  %v3425 = vadd.f32 %v3353, %v3419
  %3426 = vset.pattern.permute.xlu0 31
  %3427 = vperm.xlu0 %3426, %v2417
  %v3428 = vpop.permute.xlu0 %3427
  %v3430 = vlaneseq
  %v3431 = vshrl.u32 %v3430, 7
  %v3432 = vsub.s32 3, %v3431
  %v3433 = vrot.slane %v3021, %v3432
  %v3434 = vlaneseq
  %v3435 = vshrl.u32 %v3434, 7
  %v3436 = vsub.s32 3, %v3435
  %v3437 = vrot.slane %v3022, %v3436
  %v3438 = vlaneseq
  %v3439 = vshrl.u32 %v3438, 7
  %v3440 = vsub.s32 3, %v3439
  %v3441 = vrot.slane %v3023, %v3440
  %v3442 = vmul.f32 %v3428, %v3433
  %v3443 = vmul.f32 %v3428, %v3437
  %v3444 = vmul.f32 %v3428, %v3441
  %3448 = vrot.lane.b32.xlu0 %v3442, 95
  %v3449 = vpop.permute.xlu0 %3448
  %3450 = vrot.lane.b32.xlu0 %v3443, 95
  %v3451 = vpop.permute.xlu0 %3450
  %3452 = vrot.lane.b32.xlu0 %v3444, 95
  %v3453 = vpop.permute.xlu0 %3452
  %v3454 = vsel %vm1042, %v3449, %v3451
  %v3455 = vsel %vm1042, %v3451, %v3453
  %v3459 = vadd.f32 %v3387, %v3449
  %v3460 = vadd.f32 %v3388, %v3454
  %v3461 = vadd.f32 %v3389, %v3455
  %v3462 = vmul.f32 %v3021, %v1160
  %v3463 = vmul.f32 %v3022, %v1164
  %v3464 = vmul.f32 %v3023, %v1162
  %3465 = vset.pattern.permute.xlu0 32
  %3466 = vperm.xlu0 %3465, %v2417
  %v3467 = vpop.permute.xlu0 %3466
  %v3469 = vlaneseq
  %v3470 = vshrl.u32 %v3469, 7
  %v3471 = vsub.s32 0, %v3470
  %v3472 = vrot.slane %v3462, %v3471
  %v3473 = vlaneseq
  %v3474 = vshrl.u32 %v3473, 7
  %v3475 = vsub.s32 0, %v3474
  %v3476 = vrot.slane %v3463, %v3475
  %v3477 = vlaneseq
  %v3478 = vshrl.u32 %v3477, 7
  %v3479 = vsub.s32 0, %v3478
  %v3480 = vrot.slane %v3464, %v3479
  %v3481 = vmul.f32 %v3467, %v3472
  %v3482 = vmul.f32 %v3467, %v3476
  %v3483 = vmul.f32 %v3467, %v3480
  %3487 = vrot.lane.b32.xlu0 %v3481, 94
  %v3488 = vpop.permute.xlu0 %3487
  %3489 = vrot.lane.b32.xlu0 %v3482, 94
  %v3490 = vpop.permute.xlu0 %3489
  %3491 = vrot.lane.b32.xlu0 %v3483, 94
  %v3492 = vpop.permute.xlu0 %3491
  %v3493 = vsel %vm1199, %v3488, %v3490
  %v3494 = vsel %vm1199, %v3490, %v3492
  %v3498 = vadd.f32 %v3423, %v3488
  %v3499 = vadd.f32 %v3424, %v3493
  %v3500 = vadd.f32 %v3425, %v3494
  %3501 = vset.pattern.permute.xlu0 33
  %3502 = vperm.xlu0 %3501, %v2417
  %v3503 = vpop.permute.xlu0 %3502
  %v3505 = vlaneseq
  %v3506 = vshrl.u32 %v3505, 7
  %v3507 = vsub.s32 1, %v3506
  %v3508 = vrot.slane %v3462, %v3507
  %v3509 = vlaneseq
  %v3510 = vshrl.u32 %v3509, 7
  %v3511 = vsub.s32 1, %v3510
  %v3512 = vrot.slane %v3463, %v3511
  %v3513 = vlaneseq
  %v3514 = vshrl.u32 %v3513, 7
  %v3515 = vsub.s32 1, %v3514
  %v3516 = vrot.slane %v3464, %v3515
  %v3517 = vmul.f32 %v3503, %v3508
  %v3518 = vmul.f32 %v3503, %v3512
  %v3519 = vmul.f32 %v3503, %v3516
  %3523 = vrot.lane.b32.xlu0 %v3517, 94
  %v3524 = vpop.permute.xlu0 %3523
  %3525 = vrot.lane.b32.xlu0 %v3518, 94
  %v3526 = vpop.permute.xlu0 %3525
  %3527 = vrot.lane.b32.xlu0 %v3519, 94
  %v3528 = vpop.permute.xlu0 %3527
  %v3529 = vsel %vm1199, %v3524, %v3526
  %v3530 = vsel %vm1199, %v3526, %v3528
  %v3534 = vadd.f32 %v3459, %v3524
  %v3535 = vadd.f32 %v3460, %v3529
  %v3536 = vadd.f32 %v3461, %v3530
  %3537 = vset.pattern.permute.xlu0 34
  %3538 = vperm.xlu0 %3537, %v2417
  %v3539 = vpop.permute.xlu0 %3538
  %v3541 = vlaneseq
  %v3542 = vshrl.u32 %v3541, 7
  %v3543 = vsub.s32 2, %v3542
  %v3544 = vrot.slane %v3462, %v3543
  %v3545 = vlaneseq
  %v3546 = vshrl.u32 %v3545, 7
  %v3547 = vsub.s32 2, %v3546
  %v3548 = vrot.slane %v3463, %v3547
  %v3549 = vlaneseq
  %v3550 = vshrl.u32 %v3549, 7
  %v3551 = vsub.s32 2, %v3550
  %v3552 = vrot.slane %v3464, %v3551
  %v3553 = vmul.f32 %v3539, %v3544
  %v3554 = vmul.f32 %v3539, %v3548
  %v3555 = vmul.f32 %v3539, %v3552
  %3559 = vrot.lane.b32.xlu0 %v3553, 94
  %v3560 = vpop.permute.xlu0 %3559
  %3561 = vrot.lane.b32.xlu0 %v3554, 94
  %v3562 = vpop.permute.xlu0 %3561
  %3563 = vrot.lane.b32.xlu0 %v3555, 94
  %v3564 = vpop.permute.xlu0 %3563
  %v3565 = vsel %vm1199, %v3560, %v3562
  %v3566 = vsel %vm1199, %v3562, %v3564
  %v3570 = vadd.f32 %v3498, %v3560
  %v3571 = vadd.f32 %v3499, %v3565
  %v3572 = vadd.f32 %v3500, %v3566
  %3573 = vset.pattern.permute.xlu0 35
  %3574 = vperm.xlu0 %3573, %v2417
  %v3575 = vpop.permute.xlu0 %3574
  %v3577 = vlaneseq
  %v3578 = vshrl.u32 %v3577, 7
  %v3579 = vsub.s32 3, %v3578
  %v3580 = vrot.slane %v3462, %v3579
  %v3581 = vlaneseq
  %v3582 = vshrl.u32 %v3581, 7
  %v3583 = vsub.s32 3, %v3582
  %v3584 = vrot.slane %v3463, %v3583
  %v3585 = vlaneseq
  %v3586 = vshrl.u32 %v3585, 7
  %v3587 = vsub.s32 3, %v3586
  %v3588 = vrot.slane %v3464, %v3587
  %v3589 = vmul.f32 %v3575, %v3580
  %v3590 = vmul.f32 %v3575, %v3584
  %v3591 = vmul.f32 %v3575, %v3588
  %3595 = vrot.lane.b32.xlu0 %v3589, 94
  %v3596 = vpop.permute.xlu0 %3595
  %3597 = vrot.lane.b32.xlu0 %v3590, 94
  %v3598 = vpop.permute.xlu0 %3597
  %3599 = vrot.lane.b32.xlu0 %v3591, 94
  %v3600 = vpop.permute.xlu0 %3599
  %v3601 = vsel %vm1199, %v3596, %v3598
  %v3602 = vsel %vm1199, %v3598, %v3600
  %v3606 = vadd.f32 %v3534, %v3596
  %v3607 = vadd.f32 %v3535, %v3601
  %v3608 = vadd.f32 %v3536, %v3602
  %v3609 = vadd.f32 %v3570, %v3606
  %v3610 = vadd.f32 %v3571, %v3607
  %v3611 = vadd.f32 %v3572, %v3608
  %v3612 = vld [vmem:[#allocation2] sm:$0xf0]
  %v3613 = vld [vmem:[#allocation2 + $0x8] sm:$0xf0]
  %v3614 = vld [vmem:[#allocation2 + $0x10] sm:$0xf0]
  %v3615 = vmul.f32 %v3612, %v62
  %v3616 = vmul.f32 %v3613, %v66
  %v3617 = vmul.f32 %v3614, %v64
  %v3618 = vlaneseq
  %v3619 = vshrl.u32 %v3618, 7
  %v3620 = vsub.s32 4, %v3619
  %v3621 = vrot.slane %v3615, %v3620
  %v3622 = vlaneseq
  %v3623 = vshrl.u32 %v3622, 7
  %v3624 = vsub.s32 4, %v3623
  %v3625 = vrot.slane %v3616, %v3624
  %v3626 = vlaneseq
  %v3627 = vshrl.u32 %v3626, 7
  %v3628 = vsub.s32 4, %v3627
  %v3629 = vrot.slane %v3617, %v3628
  %v3630 = vmul.f32 %v2421, %v3621
  %v3631 = vmul.f32 %v2421, %v3625
  %v3632 = vmul.f32 %v2421, %v3629
  %v3633 = vadd.f32 %v2409, %v3630
  %v3634 = vadd.f32 %v2409, %v3631
  %v3635 = vadd.f32 %v2409, %v3632
  %v3636 = vlaneseq
  %v3637 = vshrl.u32 %v3636, 7
  %v3638 = vsub.s32 5, %v3637
  %v3639 = vrot.slane %v3615, %v3638
  %v3640 = vlaneseq
  %v3641 = vshrl.u32 %v3640, 7
  %v3642 = vsub.s32 5, %v3641
  %v3643 = vrot.slane %v3616, %v3642
  %v3644 = vlaneseq
  %v3645 = vshrl.u32 %v3644, 7
  %v3646 = vsub.s32 5, %v3645
  %v3647 = vrot.slane %v3617, %v3646
  %v3648 = vmul.f32 %v2443, %v3639
  %v3649 = vmul.f32 %v2443, %v3643
  %v3650 = vmul.f32 %v2443, %v3647
  %v3651 = vadd.f32 %v3648, 0.0
  %v3652 = vadd.f32 %v3649, 0.0
  %v3653 = vadd.f32 %v3650, 0.0
  %v3654 = vlaneseq
  %v3655 = vshrl.u32 %v3654, 7
  %v3656 = vsub.s32 6, %v3655
  %v3657 = vrot.slane %v3615, %v3656
  %v3658 = vlaneseq
  %v3659 = vshrl.u32 %v3658, 7
  %v3660 = vsub.s32 6, %v3659
  %v3661 = vrot.slane %v3616, %v3660
  %v3662 = vlaneseq
  %v3663 = vshrl.u32 %v3662, 7
  %v3664 = vsub.s32 6, %v3663
  %v3665 = vrot.slane %v3617, %v3664
  %v3666 = vmul.f32 %v2465, %v3657
  %v3667 = vmul.f32 %v2465, %v3661
  %v3668 = vmul.f32 %v2465, %v3665
  %v3669 = vadd.f32 %v3633, %v3666
  %v3670 = vadd.f32 %v3634, %v3667
  %v3671 = vadd.f32 %v3635, %v3668
  %v3672 = vlaneseq
  %v3673 = vshrl.u32 %v3672, 7
  %v3674 = vsub.s32 7, %v3673
  %v3675 = vrot.slane %v3615, %v3674
  %v3676 = vlaneseq
  %v3677 = vshrl.u32 %v3676, 7
  %v3678 = vsub.s32 7, %v3677
  %v3679 = vrot.slane %v3616, %v3678
  %v3680 = vlaneseq
  %v3681 = vshrl.u32 %v3680, 7
  %v3682 = vsub.s32 7, %v3681
  %v3683 = vrot.slane %v3617, %v3682
  %v3684 = vmul.f32 %v2487, %v3675
  %v3685 = vmul.f32 %v2487, %v3679
  %v3686 = vmul.f32 %v2487, %v3683
  %v3687 = vadd.f32 %v3651, %v3684
  %v3688 = vadd.f32 %v3652, %v3685
  %v3689 = vadd.f32 %v3653, %v3686
  %v3690 = vlaneseq
  %v3691 = vshrl.u32 %v3690, 7
  %v3692 = vsub.s32 4, %v3691
  %v3693 = vrot.slane %v3612, %v3692
  %v3694 = vlaneseq
  %v3695 = vshrl.u32 %v3694, 7
  %v3696 = vsub.s32 4, %v3695
  %v3697 = vrot.slane %v3613, %v3696
  %v3698 = vlaneseq
  %v3699 = vshrl.u32 %v3698, 7
  %v3700 = vsub.s32 4, %v3699
  %v3701 = vrot.slane %v3614, %v3700
  %v3702 = vmul.f32 %v2509, %v3693
  %v3703 = vmul.f32 %v2509, %v3697
  %v3704 = vmul.f32 %v2509, %v3701
  %3708 = vrot.lane.b32.xlu0 %v3702, 127
  %v3709 = vpop.permute.xlu0 %3708
  %3710 = vrot.lane.b32.xlu0 %v3703, 127
  %v3711 = vpop.permute.xlu0 %3710
  %3712 = vrot.lane.b32.xlu0 %v3704, 127
  %v3713 = vpop.permute.xlu0 %3712
  %v3714 = vsel %vm191, %v3709, %v3711
  %v3715 = vsel %vm191, %v3711, %v3713
  %v3719 = vadd.f32 %v3669, %v3714
  %v3720 = vadd.f32 %v3670, %v3715
  %v3721 = vadd.f32 %v3671, %v3713
  %v3722 = vlaneseq
  %v3723 = vshrl.u32 %v3722, 7
  %v3724 = vsub.s32 5, %v3723
  %v3725 = vrot.slane %v3612, %v3724
  %v3726 = vlaneseq
  %v3727 = vshrl.u32 %v3726, 7
  %v3728 = vsub.s32 5, %v3727
  %v3729 = vrot.slane %v3613, %v3728
  %v3730 = vlaneseq
  %v3731 = vshrl.u32 %v3730, 7
  %v3732 = vsub.s32 5, %v3731
  %v3733 = vrot.slane %v3614, %v3732
  %v3734 = vmul.f32 %v2545, %v3725
  %v3735 = vmul.f32 %v2545, %v3729
  %v3736 = vmul.f32 %v2545, %v3733
  %3740 = vrot.lane.b32.xlu0 %v3734, 127
  %v3741 = vpop.permute.xlu0 %3740
  %3742 = vrot.lane.b32.xlu0 %v3735, 127
  %v3743 = vpop.permute.xlu0 %3742
  %3744 = vrot.lane.b32.xlu0 %v3736, 127
  %v3745 = vpop.permute.xlu0 %3744
  %v3746 = vsel %vm191, %v3741, %v3743
  %v3747 = vsel %vm191, %v3743, %v3745
  %v3751 = vadd.f32 %v3687, %v3746
  %v3752 = vadd.f32 %v3688, %v3747
  %v3753 = vadd.f32 %v3689, %v3745
  %v3754 = vlaneseq
  %v3755 = vshrl.u32 %v3754, 7
  %v3756 = vsub.s32 6, %v3755
  %v3757 = vrot.slane %v3612, %v3756
  %v3758 = vlaneseq
  %v3759 = vshrl.u32 %v3758, 7
  %v3760 = vsub.s32 6, %v3759
  %v3761 = vrot.slane %v3613, %v3760
  %v3762 = vlaneseq
  %v3763 = vshrl.u32 %v3762, 7
  %v3764 = vsub.s32 6, %v3763
  %v3765 = vrot.slane %v3614, %v3764
  %v3766 = vmul.f32 %v2581, %v3757
  %v3767 = vmul.f32 %v2581, %v3761
  %v3768 = vmul.f32 %v2581, %v3765
  %3772 = vrot.lane.b32.xlu0 %v3766, 127
  %v3773 = vpop.permute.xlu0 %3772
  %3774 = vrot.lane.b32.xlu0 %v3767, 127
  %v3775 = vpop.permute.xlu0 %3774
  %3776 = vrot.lane.b32.xlu0 %v3768, 127
  %v3777 = vpop.permute.xlu0 %3776
  %v3778 = vsel %vm191, %v3773, %v3775
  %v3779 = vsel %vm191, %v3775, %v3777
  %v3783 = vadd.f32 %v3719, %v3778
  %v3784 = vadd.f32 %v3720, %v3779
  %v3785 = vadd.f32 %v3721, %v3777
  %v3786 = vlaneseq
  %v3787 = vshrl.u32 %v3786, 7
  %v3788 = vsub.s32 7, %v3787
  %v3789 = vrot.slane %v3612, %v3788
  %v3790 = vlaneseq
  %v3791 = vshrl.u32 %v3790, 7
  %v3792 = vsub.s32 7, %v3791
  %v3793 = vrot.slane %v3613, %v3792
  %v3794 = vlaneseq
  %v3795 = vshrl.u32 %v3794, 7
  %v3796 = vsub.s32 7, %v3795
  %v3797 = vrot.slane %v3614, %v3796
  %v3798 = vmul.f32 %v2617, %v3789
  %v3799 = vmul.f32 %v2617, %v3793
  %v3800 = vmul.f32 %v2617, %v3797
  %3804 = vrot.lane.b32.xlu0 %v3798, 127
  %v3805 = vpop.permute.xlu0 %3804
  %3806 = vrot.lane.b32.xlu0 %v3799, 127
  %v3807 = vpop.permute.xlu0 %3806
  %3808 = vrot.lane.b32.xlu0 %v3800, 127
  %v3809 = vpop.permute.xlu0 %3808
  %v3810 = vsel %vm191, %v3805, %v3807
  %v3811 = vsel %vm191, %v3807, %v3809
  %v3815 = vadd.f32 %v3751, %v3810
  %v3816 = vadd.f32 %v3752, %v3811
  %v3817 = vadd.f32 %v3753, %v3809
  %v3818 = vmul.f32 %v3612, %v309
  %v3819 = vmul.f32 %v3613, %v313
  %v3820 = vmul.f32 %v3614, %v311
  %v3821 = vlaneseq
  %v3822 = vshrl.u32 %v3821, 7
  %v3823 = vsub.s32 4, %v3822
  %v3824 = vrot.slane %v3818, %v3823
  %v3825 = vlaneseq
  %v3826 = vshrl.u32 %v3825, 7
  %v3827 = vsub.s32 4, %v3826
  %v3828 = vrot.slane %v3819, %v3827
  %v3829 = vlaneseq
  %v3830 = vshrl.u32 %v3829, 7
  %v3831 = vsub.s32 4, %v3830
  %v3832 = vrot.slane %v3820, %v3831
  %v3833 = vmul.f32 %v2656, %v3824
  %v3834 = vmul.f32 %v2656, %v3828
  %v3835 = vmul.f32 %v2656, %v3832
  %3839 = vrot.lane.b32.xlu0 %v3833, 126
  %v3840 = vpop.permute.xlu0 %3839
  %3841 = vrot.lane.b32.xlu0 %v3834, 126
  %v3842 = vpop.permute.xlu0 %3841
  %3843 = vrot.lane.b32.xlu0 %v3835, 126
  %v3844 = vpop.permute.xlu0 %3843
  %v3845 = vsel %vm348, %v3840, %v3842
  %v3846 = vsel %vm348, %v3842, %v3844
  %v3850 = vadd.f32 %v3783, %v3845
  %v3851 = vadd.f32 %v3784, %v3846
  %v3852 = vadd.f32 %v3785, %v3844
  %v3853 = vlaneseq
  %v3854 = vshrl.u32 %v3853, 7
  %v3855 = vsub.s32 5, %v3854
  %v3856 = vrot.slane %v3818, %v3855
  %v3857 = vlaneseq
  %v3858 = vshrl.u32 %v3857, 7
  %v3859 = vsub.s32 5, %v3858
  %v3860 = vrot.slane %v3819, %v3859
  %v3861 = vlaneseq
  %v3862 = vshrl.u32 %v3861, 7
  %v3863 = vsub.s32 5, %v3862
  %v3864 = vrot.slane %v3820, %v3863
  %v3865 = vmul.f32 %v2692, %v3856
  %v3866 = vmul.f32 %v2692, %v3860
  %v3867 = vmul.f32 %v2692, %v3864
  %3871 = vrot.lane.b32.xlu0 %v3865, 126
  %v3872 = vpop.permute.xlu0 %3871
  %3873 = vrot.lane.b32.xlu0 %v3866, 126
  %v3874 = vpop.permute.xlu0 %3873
  %3875 = vrot.lane.b32.xlu0 %v3867, 126
  %v3876 = vpop.permute.xlu0 %3875
  %v3877 = vsel %vm348, %v3872, %v3874
  %v3878 = vsel %vm348, %v3874, %v3876
  %v3882 = vadd.f32 %v3815, %v3877
  %v3883 = vadd.f32 %v3816, %v3878
  %v3884 = vadd.f32 %v3817, %v3876
  %v3885 = vlaneseq
  %v3886 = vshrl.u32 %v3885, 7
  %v3887 = vsub.s32 6, %v3886
  %v3888 = vrot.slane %v3818, %v3887
  %v3889 = vlaneseq
  %v3890 = vshrl.u32 %v3889, 7
  %v3891 = vsub.s32 6, %v3890
  %v3892 = vrot.slane %v3819, %v3891
  %v3893 = vlaneseq
  %v3894 = vshrl.u32 %v3893, 7
  %v3895 = vsub.s32 6, %v3894
  %v3896 = vrot.slane %v3820, %v3895
  %v3897 = vmul.f32 %v2728, %v3888
  %v3898 = vmul.f32 %v2728, %v3892
  %v3899 = vmul.f32 %v2728, %v3896
  %3903 = vrot.lane.b32.xlu0 %v3897, 126
  %v3904 = vpop.permute.xlu0 %3903
  %3905 = vrot.lane.b32.xlu0 %v3898, 126
  %v3906 = vpop.permute.xlu0 %3905
  %3907 = vrot.lane.b32.xlu0 %v3899, 126
  %v3908 = vpop.permute.xlu0 %3907
  %v3909 = vsel %vm348, %v3904, %v3906
  %v3910 = vsel %vm348, %v3906, %v3908
  %v3914 = vadd.f32 %v3850, %v3909
  %v3915 = vadd.f32 %v3851, %v3910
  %v3916 = vadd.f32 %v3852, %v3908
  %v3917 = vlaneseq
  %v3918 = vshrl.u32 %v3917, 7
  %v3919 = vsub.s32 7, %v3918
  %v3920 = vrot.slane %v3818, %v3919
  %v3921 = vlaneseq
  %v3922 = vshrl.u32 %v3921, 7
  %v3923 = vsub.s32 7, %v3922
  %v3924 = vrot.slane %v3819, %v3923
  %v3925 = vlaneseq
  %v3926 = vshrl.u32 %v3925, 7
  %v3927 = vsub.s32 7, %v3926
  %v3928 = vrot.slane %v3820, %v3927
  %v3929 = vmul.f32 %v2764, %v3920
  %v3930 = vmul.f32 %v2764, %v3924
  %v3931 = vmul.f32 %v2764, %v3928
  %3935 = vrot.lane.b32.xlu0 %v3929, 126
  %v3936 = vpop.permute.xlu0 %3935
  %3937 = vrot.lane.b32.xlu0 %v3930, 126
  %v3938 = vpop.permute.xlu0 %3937
  %3939 = vrot.lane.b32.xlu0 %v3931, 126
  %v3940 = vpop.permute.xlu0 %3939
  %v3941 = vsel %vm348, %v3936, %v3938
  %v3942 = vsel %vm348, %v3938, %v3940
  %v3946 = vadd.f32 %v3882, %v3941
  %v3947 = vadd.f32 %v3883, %v3942
  %v3948 = vadd.f32 %v3884, %v3940
  %v3949 = vmul.f32 %v3612, %v466
  %v3950 = vmul.f32 %v3613, %v469
  %v3951 = vmul.f32 %v3614, %v468
  %v3952 = vlaneseq
  %v3953 = vshrl.u32 %v3952, 7
  %v3954 = vsub.s32 4, %v3953
  %v3955 = vrot.slane %v3949, %v3954
  %v3956 = vlaneseq
  %v3957 = vshrl.u32 %v3956, 7
  %v3958 = vsub.s32 4, %v3957
  %v3959 = vrot.slane %v3950, %v3958
  %v3960 = vlaneseq
  %v3961 = vshrl.u32 %v3960, 7
  %v3962 = vsub.s32 4, %v3961
  %v3963 = vrot.slane %v3951, %v3962
  %v3964 = vmul.f32 %v2803, %v3955
  %v3965 = vmul.f32 %v2803, %v3959
  %v3966 = vmul.f32 %v2803, %v3963
  %3970 = vrot.lane.b32.xlu0 %v3964, 112
  %v3971 = vpop.permute.xlu0 %3970
  %3972 = vrot.lane.b32.xlu0 %v3965, 112
  %v3973 = vpop.permute.xlu0 %3972
  %3974 = vrot.lane.b32.xlu0 %v3966, 112
  %v3975 = vpop.permute.xlu0 %3974
  %v3976 = vsel %vm504, %v3971, %v3973
  %v3977 = vsel %vm504, %v3973, %v3975
  %v3981 = vadd.f32 %v3914, %v3976
  %v3982 = vadd.f32 %v3915, %v3977
  %v3983 = vadd.f32 %v3916, %v3975
  %v3984 = vlaneseq
  %v3985 = vshrl.u32 %v3984, 7
  %v3986 = vsub.s32 5, %v3985
  %v3987 = vrot.slane %v3949, %v3986
  %v3988 = vlaneseq
  %v3989 = vshrl.u32 %v3988, 7
  %v3990 = vsub.s32 5, %v3989
  %v3991 = vrot.slane %v3950, %v3990
  %v3992 = vlaneseq
  %v3993 = vshrl.u32 %v3992, 7
  %v3994 = vsub.s32 5, %v3993
  %v3995 = vrot.slane %v3951, %v3994
  %v3996 = vmul.f32 %v2839, %v3987
  %v3997 = vmul.f32 %v2839, %v3991
  %v3998 = vmul.f32 %v2839, %v3995
  %4002 = vrot.lane.b32.xlu0 %v3996, 112
  %v4003 = vpop.permute.xlu0 %4002
  %4004 = vrot.lane.b32.xlu0 %v3997, 112
  %v4005 = vpop.permute.xlu0 %4004
  %4006 = vrot.lane.b32.xlu0 %v3998, 112
  %v4007 = vpop.permute.xlu0 %4006
  %v4008 = vsel %vm504, %v4003, %v4005
  %v4009 = vsel %vm504, %v4005, %v4007
  %v4013 = vadd.f32 %v3946, %v4008
  %v4014 = vadd.f32 %v3947, %v4009
  %v4015 = vadd.f32 %v3948, %v4007
  %v4016 = vlaneseq
  %v4017 = vshrl.u32 %v4016, 7
  %v4018 = vsub.s32 6, %v4017
  %v4019 = vrot.slane %v3949, %v4018
  %v4020 = vlaneseq
  %v4021 = vshrl.u32 %v4020, 7
  %v4022 = vsub.s32 6, %v4021
  %v4023 = vrot.slane %v3950, %v4022
  %v4024 = vlaneseq
  %v4025 = vshrl.u32 %v4024, 7
  %v4026 = vsub.s32 6, %v4025
  %v4027 = vrot.slane %v3951, %v4026
  %v4028 = vmul.f32 %v2875, %v4019
  %v4029 = vmul.f32 %v2875, %v4023
  %v4030 = vmul.f32 %v2875, %v4027
  %4034 = vrot.lane.b32.xlu0 %v4028, 112
  %v4035 = vpop.permute.xlu0 %4034
  %4036 = vrot.lane.b32.xlu0 %v4029, 112
  %v4037 = vpop.permute.xlu0 %4036
  %4038 = vrot.lane.b32.xlu0 %v4030, 112
  %v4039 = vpop.permute.xlu0 %4038
  %v4040 = vsel %vm504, %v4035, %v4037
  %v4041 = vsel %vm504, %v4037, %v4039
  %v4045 = vadd.f32 %v3981, %v4040
  %v4046 = vadd.f32 %v3982, %v4041
  %v4047 = vadd.f32 %v3983, %v4039
  %v4048 = vlaneseq
  %v4049 = vshrl.u32 %v4048, 7
  %v4050 = vsub.s32 7, %v4049
  %v4051 = vrot.slane %v3949, %v4050
  %v4052 = vlaneseq
  %v4053 = vshrl.u32 %v4052, 7
  %v4054 = vsub.s32 7, %v4053
  %v4055 = vrot.slane %v3950, %v4054
  %v4056 = vlaneseq
  %v4057 = vshrl.u32 %v4056, 7
  %v4058 = vsub.s32 7, %v4057
  %v4059 = vrot.slane %v3951, %v4058
  %v4060 = vmul.f32 %v2911, %v4051
  %v4061 = vmul.f32 %v2911, %v4055
  %v4062 = vmul.f32 %v2911, %v4059
  %4066 = vrot.lane.b32.xlu0 %v4060, 112
  %v4067 = vpop.permute.xlu0 %4066
  %4068 = vrot.lane.b32.xlu0 %v4061, 112
  %v4069 = vpop.permute.xlu0 %4068
  %4070 = vrot.lane.b32.xlu0 %v4062, 112
  %v4071 = vpop.permute.xlu0 %4070
  %v4072 = vsel %vm504, %v4067, %v4069
  %v4073 = vsel %vm504, %v4069, %v4071
  %v4077 = vadd.f32 %v4013, %v4072
  %v4078 = vadd.f32 %v4014, %v4073
  %v4079 = vadd.f32 %v4015, %v4071
  %v4080 = vmul.f32 %v2947, %v3697
  %v4081 = vmul.f32 %v2947, %v3701
  %4084 = vrot.lane.b32.xlu0 %v4080, 111
  %v4085 = vpop.permute.xlu0 %4084
  %4086 = vrot.lane.b32.xlu0 %v4081, 111
  %v4087 = vpop.permute.xlu0 %4086
  %v4088 = vsel %vm65, %v4085, %v4087
  %v4092 = vadd.f32 %v4045, %v4085
  %v4093 = vadd.f32 %v4046, %v4088
  %v4094 = vadd.f32 %v4047, %v4087
  %v4095 = vmul.f32 %v2966, %v3729
  %v4096 = vmul.f32 %v2966, %v3733
  %4099 = vrot.lane.b32.xlu0 %v4095, 111
  %v4100 = vpop.permute.xlu0 %4099
  %4101 = vrot.lane.b32.xlu0 %v4096, 111
  %v4102 = vpop.permute.xlu0 %4101
  %v4103 = vsel %vm65, %v4100, %v4102
  %v4107 = vadd.f32 %v4077, %v4100
  %v4108 = vadd.f32 %v4078, %v4103
  %v4109 = vadd.f32 %v4079, %v4102
  %v4110 = vmul.f32 %v2985, %v3761
  %v4111 = vmul.f32 %v2985, %v3765
  %4114 = vrot.lane.b32.xlu0 %v4110, 111
  %v4115 = vpop.permute.xlu0 %4114
  %4116 = vrot.lane.b32.xlu0 %v4111, 111
  %v4117 = vpop.permute.xlu0 %4116
  %v4118 = vsel %vm65, %v4115, %v4117
  %v4122 = vadd.f32 %v4092, %v4115
  %v4123 = vadd.f32 %v4093, %v4118
  %v4124 = vadd.f32 %v4094, %v4117
  %v4125 = vmul.f32 %v3004, %v3793
  %v4126 = vmul.f32 %v3004, %v3797
  %4129 = vrot.lane.b32.xlu0 %v4125, 111
  %v4130 = vpop.permute.xlu0 %4129
  %4131 = vrot.lane.b32.xlu0 %v4126, 111
  %v4132 = vpop.permute.xlu0 %4131
  %v4133 = vsel %vm65, %v4130, %v4132
  %v4137 = vadd.f32 %v4107, %v4130
  %v4138 = vadd.f32 %v4108, %v4133
  %v4139 = vadd.f32 %v4109, %v4132
  %v4140 = vld [vmem:[#allocation2 + $0x8] sm:$0xf0]
  %v4141 = vld [vmem:[#allocation2 + $0x10] sm:$0xf0]
  %v4142 = vld [vmem:[#allocation2 + $0x18] sm:$0xf0]
  %v4143 = vmul.f32 %v4140, %v701
  %v4144 = vmul.f32 %v4141, %v705
  %v4145 = vmul.f32 %v4142, %v703
  %v4146 = vlaneseq
  %v4147 = vshrl.u32 %v4146, 7
  %v4148 = vsub.s32 4, %v4147
  %v4149 = vrot.slane %v4143, %v4148
  %v4150 = vlaneseq
  %v4151 = vshrl.u32 %v4150, 7
  %v4152 = vsub.s32 4, %v4151
  %v4153 = vrot.slane %v4144, %v4152
  %v4154 = vlaneseq
  %v4155 = vshrl.u32 %v4154, 7
  %v4156 = vsub.s32 4, %v4155
  %v4157 = vrot.slane %v4145, %v4156
  %v4158 = vmul.f32 %v3029, %v4149
  %v4159 = vmul.f32 %v3029, %v4153
  %v4160 = vmul.f32 %v3029, %v4157
  %4164 = vrot.lane.b32.xlu0 %v4158, 110
  %v4165 = vpop.permute.xlu0 %4164
  %4166 = vrot.lane.b32.xlu0 %v4159, 110
  %v4167 = vpop.permute.xlu0 %4166
  %4168 = vrot.lane.b32.xlu0 %v4160, 110
  %v4169 = vpop.permute.xlu0 %4168
  %v4170 = vsel %vm740, %v4165, %v4167
  %v4171 = vsel %vm740, %v4167, %v4169
  %v4175 = vadd.f32 %v4122, %v4165
  %v4176 = vadd.f32 %v4123, %v4170
  %v4177 = vadd.f32 %v4124, %v4171
  %v4178 = vlaneseq
  %v4179 = vshrl.u32 %v4178, 7
  %v4180 = vsub.s32 5, %v4179
  %v4181 = vrot.slane %v4143, %v4180
  %v4182 = vlaneseq
  %v4183 = vshrl.u32 %v4182, 7
  %v4184 = vsub.s32 5, %v4183
  %v4185 = vrot.slane %v4144, %v4184
  %v4186 = vlaneseq
  %v4187 = vshrl.u32 %v4186, 7
  %v4188 = vsub.s32 5, %v4187
  %v4189 = vrot.slane %v4145, %v4188
  %v4190 = vmul.f32 %v3065, %v4181
  %v4191 = vmul.f32 %v3065, %v4185
  %v4192 = vmul.f32 %v3065, %v4189
  %4196 = vrot.lane.b32.xlu0 %v4190, 110
  %v4197 = vpop.permute.xlu0 %4196
  %4198 = vrot.lane.b32.xlu0 %v4191, 110
  %v4199 = vpop.permute.xlu0 %4198
  %4200 = vrot.lane.b32.xlu0 %v4192, 110
  %v4201 = vpop.permute.xlu0 %4200
  %v4202 = vsel %vm740, %v4197, %v4199
  %v4203 = vsel %vm740, %v4199, %v4201
  %v4207 = vadd.f32 %v4137, %v4197
  %v4208 = vadd.f32 %v4138, %v4202
  %v4209 = vadd.f32 %v4139, %v4203
  %v4210 = vlaneseq
  %v4211 = vshrl.u32 %v4210, 7
  %v4212 = vsub.s32 6, %v4211
  %v4213 = vrot.slane %v4143, %v4212
  %v4214 = vlaneseq
  %v4215 = vshrl.u32 %v4214, 7
  %v4216 = vsub.s32 6, %v4215
  %v4217 = vrot.slane %v4144, %v4216
  %v4218 = vlaneseq
  %v4219 = vshrl.u32 %v4218, 7
  %v4220 = vsub.s32 6, %v4219
  %v4221 = vrot.slane %v4145, %v4220
  %v4222 = vmul.f32 %v3101, %v4213
  %v4223 = vmul.f32 %v3101, %v4217
  %v4224 = vmul.f32 %v3101, %v4221
  %4228 = vrot.lane.b32.xlu0 %v4222, 110
  %v4229 = vpop.permute.xlu0 %4228
  %4230 = vrot.lane.b32.xlu0 %v4223, 110
  %v4231 = vpop.permute.xlu0 %4230
  %4232 = vrot.lane.b32.xlu0 %v4224, 110
  %v4233 = vpop.permute.xlu0 %4232
  %v4234 = vsel %vm740, %v4229, %v4231
  %v4235 = vsel %vm740, %v4231, %v4233
  %v4239 = vadd.f32 %v4175, %v4229
  %v4240 = vadd.f32 %v4176, %v4234
  %v4241 = vadd.f32 %v4177, %v4235
  %v4242 = vlaneseq
  %v4243 = vshrl.u32 %v4242, 7
  %v4244 = vsub.s32 7, %v4243
  %v4245 = vrot.slane %v4143, %v4244
  %v4246 = vlaneseq
  %v4247 = vshrl.u32 %v4246, 7
  %v4248 = vsub.s32 7, %v4247
  %v4249 = vrot.slane %v4144, %v4248
  %v4250 = vlaneseq
  %v4251 = vshrl.u32 %v4250, 7
  %v4252 = vsub.s32 7, %v4251
  %v4253 = vrot.slane %v4145, %v4252
  %v4254 = vmul.f32 %v3137, %v4245
  %v4255 = vmul.f32 %v3137, %v4249
  %v4256 = vmul.f32 %v3137, %v4253
  %4260 = vrot.lane.b32.xlu0 %v4254, 110
  %v4261 = vpop.permute.xlu0 %4260
  %4262 = vrot.lane.b32.xlu0 %v4255, 110
  %v4263 = vpop.permute.xlu0 %4262
  %4264 = vrot.lane.b32.xlu0 %v4256, 110
  %v4265 = vpop.permute.xlu0 %4264
  %v4266 = vsel %vm740, %v4261, %v4263
  %v4267 = vsel %vm740, %v4263, %v4265
  %v4271 = vadd.f32 %v4207, %v4261
  %v4272 = vadd.f32 %v4208, %v4266
  %v4273 = vadd.f32 %v4209, %v4267
  %v4274 = vmul.f32 %v4140, %v858
  %v4275 = vmul.f32 %v4141, %v862
  %v4276 = vmul.f32 %v4142, %v860
  %v4277 = vlaneseq
  %v4278 = vshrl.u32 %v4277, 7
  %v4279 = vsub.s32 4, %v4278
  %v4280 = vrot.slane %v4274, %v4279
  %v4281 = vlaneseq
  %v4282 = vshrl.u32 %v4281, 7
  %v4283 = vsub.s32 4, %v4282
  %v4284 = vrot.slane %v4275, %v4283
  %v4285 = vlaneseq
  %v4286 = vshrl.u32 %v4285, 7
  %v4287 = vsub.s32 4, %v4286
  %v4288 = vrot.slane %v4276, %v4287
  %v4289 = vmul.f32 %v3176, %v4280
  %v4290 = vmul.f32 %v3176, %v4284
  %v4291 = vmul.f32 %v3176, %v4288
  %4295 = vrot.lane.b32.xlu0 %v4289, 96
  %v4296 = vpop.permute.xlu0 %4295
  %4297 = vrot.lane.b32.xlu0 %v4290, 96
  %v4298 = vpop.permute.xlu0 %4297
  %4299 = vrot.lane.b32.xlu0 %v4291, 96
  %v4300 = vpop.permute.xlu0 %4299
  %v4301 = vsel %vm897, %v4296, %v4298
  %v4302 = vsel %vm897, %v4298, %v4300
  %v4306 = vadd.f32 %v4239, %v4296
  %v4307 = vadd.f32 %v4240, %v4301
  %v4308 = vadd.f32 %v4241, %v4302
  %v4309 = vlaneseq
  %v4310 = vshrl.u32 %v4309, 7
  %v4311 = vsub.s32 5, %v4310
  %v4312 = vrot.slane %v4274, %v4311
  %v4313 = vlaneseq
  %v4314 = vshrl.u32 %v4313, 7
  %v4315 = vsub.s32 5, %v4314
  %v4316 = vrot.slane %v4275, %v4315
  %v4317 = vlaneseq
  %v4318 = vshrl.u32 %v4317, 7
  %v4319 = vsub.s32 5, %v4318
  %v4320 = vrot.slane %v4276, %v4319
  %v4321 = vmul.f32 %v3212, %v4312
  %v4322 = vmul.f32 %v3212, %v4316
  %v4323 = vmul.f32 %v3212, %v4320
  %4327 = vrot.lane.b32.xlu0 %v4321, 96
  %v4328 = vpop.permute.xlu0 %4327
  %4329 = vrot.lane.b32.xlu0 %v4322, 96
  %v4330 = vpop.permute.xlu0 %4329
  %4331 = vrot.lane.b32.xlu0 %v4323, 96
  %v4332 = vpop.permute.xlu0 %4331
  %v4333 = vsel %vm897, %v4328, %v4330
  %v4334 = vsel %vm897, %v4330, %v4332
  %v4338 = vadd.f32 %v4271, %v4328
  %v4339 = vadd.f32 %v4272, %v4333
  %v4340 = vadd.f32 %v4273, %v4334
  %v4341 = vlaneseq
  %v4342 = vshrl.u32 %v4341, 7
  %v4343 = vsub.s32 6, %v4342
  %v4344 = vrot.slane %v4274, %v4343
  %v4345 = vlaneseq
  %v4346 = vshrl.u32 %v4345, 7
  %v4347 = vsub.s32 6, %v4346
  %v4348 = vrot.slane %v4275, %v4347
  %v4349 = vlaneseq
  %v4350 = vshrl.u32 %v4349, 7
  %v4351 = vsub.s32 6, %v4350
  %v4352 = vrot.slane %v4276, %v4351
  %v4353 = vmul.f32 %v3248, %v4344
  %v4354 = vmul.f32 %v3248, %v4348
  %v4355 = vmul.f32 %v3248, %v4352
  %4359 = vrot.lane.b32.xlu0 %v4353, 96
  %v4360 = vpop.permute.xlu0 %4359
  %4361 = vrot.lane.b32.xlu0 %v4354, 96
  %v4362 = vpop.permute.xlu0 %4361
  %4363 = vrot.lane.b32.xlu0 %v4355, 96
  %v4364 = vpop.permute.xlu0 %4363
  %v4365 = vsel %vm897, %v4360, %v4362
  %v4366 = vsel %vm897, %v4362, %v4364
  %v4370 = vadd.f32 %v4306, %v4360
  %v4371 = vadd.f32 %v4307, %v4365
  %v4372 = vadd.f32 %v4308, %v4366
  %v4373 = vlaneseq
  %v4374 = vshrl.u32 %v4373, 7
  %v4375 = vsub.s32 7, %v4374
  %v4376 = vrot.slane %v4274, %v4375
  %v4377 = vlaneseq
  %v4378 = vshrl.u32 %v4377, 7
  %v4379 = vsub.s32 7, %v4378
  %v4380 = vrot.slane %v4275, %v4379
  %v4381 = vlaneseq
  %v4382 = vshrl.u32 %v4381, 7
  %v4383 = vsub.s32 7, %v4382
  %v4384 = vrot.slane %v4276, %v4383
  %v4385 = vmul.f32 %v3284, %v4376
  %v4386 = vmul.f32 %v3284, %v4380
  %v4387 = vmul.f32 %v3284, %v4384
  %4391 = vrot.lane.b32.xlu0 %v4385, 96
  %v4392 = vpop.permute.xlu0 %4391
  %4393 = vrot.lane.b32.xlu0 %v4386, 96
  %v4394 = vpop.permute.xlu0 %4393
  %4395 = vrot.lane.b32.xlu0 %v4387, 96
  %v4396 = vpop.permute.xlu0 %4395
  %v4397 = vsel %vm897, %v4392, %v4394
  %v4398 = vsel %vm897, %v4394, %v4396
  %v4402 = vadd.f32 %v4338, %v4392
  %v4403 = vadd.f32 %v4339, %v4397
  %v4404 = vadd.f32 %v4340, %v4398
  %v4405 = vlaneseq
  %v4406 = vshrl.u32 %v4405, 7
  %v4407 = vsub.s32 4, %v4406
  %v4408 = vrot.slane %v4140, %v4407
  %v4409 = vlaneseq
  %v4410 = vshrl.u32 %v4409, 7
  %v4411 = vsub.s32 4, %v4410
  %v4412 = vrot.slane %v4141, %v4411
  %v4413 = vlaneseq
  %v4414 = vshrl.u32 %v4413, 7
  %v4415 = vsub.s32 4, %v4414
  %v4416 = vrot.slane %v4142, %v4415
  %v4417 = vmul.f32 %v3320, %v4408
  %v4418 = vmul.f32 %v3320, %v4412
  %v4419 = vmul.f32 %v3320, %v4416
  %4423 = vrot.lane.b32.xlu0 %v4417, 95
  %v4424 = vpop.permute.xlu0 %4423
  %4425 = vrot.lane.b32.xlu0 %v4418, 95
  %v4426 = vpop.permute.xlu0 %4425
  %4427 = vrot.lane.b32.xlu0 %v4419, 95
  %v4428 = vpop.permute.xlu0 %4427
  %v4429 = vsel %vm1042, %v4424, %v4426
  %v4430 = vsel %vm1042, %v4426, %v4428
  %v4434 = vadd.f32 %v4370, %v4424
  %v4435 = vadd.f32 %v4371, %v4429
  %v4436 = vadd.f32 %v4372, %v4430
  %v4437 = vlaneseq
  %v4438 = vshrl.u32 %v4437, 7
  %v4439 = vsub.s32 5, %v4438
  %v4440 = vrot.slane %v4140, %v4439
  %v4441 = vlaneseq
  %v4442 = vshrl.u32 %v4441, 7
  %v4443 = vsub.s32 5, %v4442
  %v4444 = vrot.slane %v4141, %v4443
  %v4445 = vlaneseq
  %v4446 = vshrl.u32 %v4445, 7
  %v4447 = vsub.s32 5, %v4446
  %v4448 = vrot.slane %v4142, %v4447
  %v4449 = vmul.f32 %v3356, %v4440
  %v4450 = vmul.f32 %v3356, %v4444
  %v4451 = vmul.f32 %v3356, %v4448
  %4455 = vrot.lane.b32.xlu0 %v4449, 95
  %v4456 = vpop.permute.xlu0 %4455
  %4457 = vrot.lane.b32.xlu0 %v4450, 95
  %v4458 = vpop.permute.xlu0 %4457
  %4459 = vrot.lane.b32.xlu0 %v4451, 95
  %v4460 = vpop.permute.xlu0 %4459
  %v4461 = vsel %vm1042, %v4456, %v4458
  %v4462 = vsel %vm1042, %v4458, %v4460
  %v4466 = vadd.f32 %v4402, %v4456
  %v4467 = vadd.f32 %v4403, %v4461
  %v4468 = vadd.f32 %v4404, %v4462
  %v4469 = vlaneseq
  %v4470 = vshrl.u32 %v4469, 7
  %v4471 = vsub.s32 6, %v4470
  %v4472 = vrot.slane %v4140, %v4471
  %v4473 = vlaneseq
  %v4474 = vshrl.u32 %v4473, 7
  %v4475 = vsub.s32 6, %v4474
  %v4476 = vrot.slane %v4141, %v4475
  %v4477 = vlaneseq
  %v4478 = vshrl.u32 %v4477, 7
  %v4479 = vsub.s32 6, %v4478
  %v4480 = vrot.slane %v4142, %v4479
  %v4481 = vmul.f32 %v3392, %v4472
  %v4482 = vmul.f32 %v3392, %v4476
  %v4483 = vmul.f32 %v3392, %v4480
  %4487 = vrot.lane.b32.xlu0 %v4481, 95
  %v4488 = vpop.permute.xlu0 %4487
  %4489 = vrot.lane.b32.xlu0 %v4482, 95
  %v4490 = vpop.permute.xlu0 %4489
  %4491 = vrot.lane.b32.xlu0 %v4483, 95
  %v4492 = vpop.permute.xlu0 %4491
  %v4493 = vsel %vm1042, %v4488, %v4490
  %v4494 = vsel %vm1042, %v4490, %v4492
  %v4498 = vadd.f32 %v4434, %v4488
  %v4499 = vadd.f32 %v4435, %v4493
  %v4500 = vadd.f32 %v4436, %v4494
  %v4501 = vlaneseq
  %v4502 = vshrl.u32 %v4501, 7
  %v4503 = vsub.s32 7, %v4502
  %v4504 = vrot.slane %v4140, %v4503
  %v4505 = vlaneseq
  %v4506 = vshrl.u32 %v4505, 7
  %v4507 = vsub.s32 7, %v4506
  %v4508 = vrot.slane %v4141, %v4507
  %v4509 = vlaneseq
  %v4510 = vshrl.u32 %v4509, 7
  %v4511 = vsub.s32 7, %v4510
  %v4512 = vrot.slane %v4142, %v4511
  %v4513 = vmul.f32 %v3428, %v4504
  %v4514 = vmul.f32 %v3428, %v4508
  %v4515 = vmul.f32 %v3428, %v4512
  %4519 = vrot.lane.b32.xlu0 %v4513, 95
  %v4520 = vpop.permute.xlu0 %4519
  %4521 = vrot.lane.b32.xlu0 %v4514, 95
  %v4522 = vpop.permute.xlu0 %4521
  %4523 = vrot.lane.b32.xlu0 %v4515, 95
  %v4524 = vpop.permute.xlu0 %4523
  %v4525 = vsel %vm1042, %v4520, %v4522
  %v4526 = vsel %vm1042, %v4522, %v4524
  %v4530 = vadd.f32 %v4466, %v4520
  %v4531 = vadd.f32 %v4467, %v4525
  %v4532 = vadd.f32 %v4468, %v4526
  %v4533 = vmul.f32 %v4140, %v1160
  %v4534 = vmul.f32 %v4141, %v1164
  %v4535 = vmul.f32 %v4142, %v1162
  %v4536 = vlaneseq
  %v4537 = vshrl.u32 %v4536, 7
  %v4538 = vsub.s32 4, %v4537
  %v4539 = vrot.slane %v4533, %v4538
  %v4540 = vlaneseq
  %v4541 = vshrl.u32 %v4540, 7
  %v4542 = vsub.s32 4, %v4541
  %v4543 = vrot.slane %v4534, %v4542
  %v4544 = vlaneseq
  %v4545 = vshrl.u32 %v4544, 7
  %v4546 = vsub.s32 4, %v4545
  %v4547 = vrot.slane %v4535, %v4546
  %v4548 = vmul.f32 %v3467, %v4539
  %v4549 = vmul.f32 %v3467, %v4543
  %v4550 = vmul.f32 %v3467, %v4547
  %4554 = vrot.lane.b32.xlu0 %v4548, 94
  %v4555 = vpop.permute.xlu0 %4554
  %4556 = vrot.lane.b32.xlu0 %v4549, 94
  %v4557 = vpop.permute.xlu0 %4556
  %4558 = vrot.lane.b32.xlu0 %v4550, 94
  %v4559 = vpop.permute.xlu0 %4558
  %v4560 = vsel %vm1199, %v4555, %v4557
  %v4561 = vsel %vm1199, %v4557, %v4559
  %v4565 = vadd.f32 %v4498, %v4555
  %v4566 = vadd.f32 %v4499, %v4560
  %v4567 = vadd.f32 %v4500, %v4561
  %v4568 = vlaneseq
  %v4569 = vshrl.u32 %v4568, 7
  %v4570 = vsub.s32 5, %v4569
  %v4571 = vrot.slane %v4533, %v4570
  %v4572 = vlaneseq
  %v4573 = vshrl.u32 %v4572, 7
  %v4574 = vsub.s32 5, %v4573
  %v4575 = vrot.slane %v4534, %v4574
  %v4576 = vlaneseq
  %v4577 = vshrl.u32 %v4576, 7
  %v4578 = vsub.s32 5, %v4577
  %v4579 = vrot.slane %v4535, %v4578
  %v4580 = vmul.f32 %v3503, %v4571
  %v4581 = vmul.f32 %v3503, %v4575
  %v4582 = vmul.f32 %v3503, %v4579
  %4586 = vrot.lane.b32.xlu0 %v4580, 94
  %v4587 = vpop.permute.xlu0 %4586
  %4588 = vrot.lane.b32.xlu0 %v4581, 94
  %v4589 = vpop.permute.xlu0 %4588
  %4590 = vrot.lane.b32.xlu0 %v4582, 94
  %v4591 = vpop.permute.xlu0 %4590
  %v4592 = vsel %vm1199, %v4587, %v4589
  %v4593 = vsel %vm1199, %v4589, %v4591
  %v4597 = vadd.f32 %v4530, %v4587
  %v4598 = vadd.f32 %v4531, %v4592
  %v4599 = vadd.f32 %v4532, %v4593
  %v4600 = vlaneseq
  %v4601 = vshrl.u32 %v4600, 7
  %v4602 = vsub.s32 6, %v4601
  %v4603 = vrot.slane %v4533, %v4602
  %v4604 = vlaneseq
  %v4605 = vshrl.u32 %v4604, 7
  %v4606 = vsub.s32 6, %v4605
  %v4607 = vrot.slane %v4534, %v4606
  %v4608 = vlaneseq
  %v4609 = vshrl.u32 %v4608, 7
  %v4610 = vsub.s32 6, %v4609
  %v4611 = vrot.slane %v4535, %v4610
  %v4612 = vmul.f32 %v3539, %v4603
  %v4613 = vmul.f32 %v3539, %v4607
  %v4614 = vmul.f32 %v3539, %v4611
  %4618 = vrot.lane.b32.xlu0 %v4612, 94
  %v4619 = vpop.permute.xlu0 %4618
  %4620 = vrot.lane.b32.xlu0 %v4613, 94
  %v4621 = vpop.permute.xlu0 %4620
  %4622 = vrot.lane.b32.xlu0 %v4614, 94
  %v4623 = vpop.permute.xlu0 %4622
  %v4624 = vsel %vm1199, %v4619, %v4621
  %v4625 = vsel %vm1199, %v4621, %v4623
  %v4629 = vadd.f32 %v4565, %v4619
  %v4630 = vadd.f32 %v4566, %v4624
  %v4631 = vadd.f32 %v4567, %v4625
  %v4632 = vlaneseq
  %v4633 = vshrl.u32 %v4632, 7
  %v4634 = vsub.s32 7, %v4633
  %v4635 = vrot.slane %v4533, %v4634
  %v4636 = vlaneseq
  %v4637 = vshrl.u32 %v4636, 7
  %v4638 = vsub.s32 7, %v4637
  %v4639 = vrot.slane %v4534, %v4638
  %v4640 = vlaneseq
  %v4641 = vshrl.u32 %v4640, 7
  %v4642 = vsub.s32 7, %v4641
  %v4643 = vrot.slane %v4535, %v4642
  %v4644 = vmul.f32 %v3575, %v4635
  %v4645 = vmul.f32 %v3575, %v4639
  %v4646 = vmul.f32 %v3575, %v4643
  %4650 = vrot.lane.b32.xlu0 %v4644, 94
  %v4651 = vpop.permute.xlu0 %4650
  %4652 = vrot.lane.b32.xlu0 %v4645, 94
  %v4653 = vpop.permute.xlu0 %4652
  %4654 = vrot.lane.b32.xlu0 %v4646, 94
  %v4655 = vpop.permute.xlu0 %4654
  %v4656 = vsel %vm1199, %v4651, %v4653
  %v4657 = vsel %vm1199, %v4653, %v4655
  %v4661 = vadd.f32 %v4597, %v4651
  %v4662 = vadd.f32 %v4598, %v4656
  %v4663 = vadd.f32 %v4599, %v4657
  %v4664 = vadd.f32 %v4629, %v4661
  %v4665 = vadd.f32 %v4630, %v4662
  %v4666 = vadd.f32 %v4631, %v4663
  %v4670 = vrot.slane %v4664, 4
  %v4671 = vrot.slane %v4665, 4
  %v4672 = vrot.slane %v4666, 4
  %v4676 = vsel %vm2383, %v3609, %v4670
  %v4677 = vsel %vm2383, %v3610, %v4671
  %v4678 = vsel %vm2383, %v3611, %v4672
  %4682 = vrot.lane.b32.xlu0 %v4676, 17
  %v4683 = vpop.permute.xlu0 %4682
  %4684 = vrot.lane.b32.xlu0 %v4677, 17
  %v4685 = vpop.permute.xlu0 %4684
  %4686 = vrot.lane.b32.xlu0 %v4678, 17
  %v4687 = vpop.permute.xlu0 %4686
  %v4688 = vsel %vm1163, %v4683, %v4685
  %v4689 = vsel %vm1163, %v4685, %v4687
  %v4692 = vadd.f32 %v25, %v4688
  %v4693 = vadd.f32 %v26, %v4689
  %4694 = vst [vmem:[%s6] sm:$0xff] %v4692
  %4695 = vst [vmem:[%s6 + $0x8] sm:$0xff] %v4693
  // Predicated region
  $region26: #{resblock_forward.1} parent=0 // pred_check
    _
  $region27: #{resblock_forward.1} parent=0 // pred_check_branch
    %4697 = sbr.rel (0) target = $region29
  $region28: #{resblock_forward.1} parent=0 // pred_region
    _
  $region29: #{resblock_forward.1} parent=0 // pred_fallthru
    _
  // Predicated region
  $region30: #{resblock_forward.1} parent=0 // pred_check
    _
  $region31: #{resblock_forward.1} parent=0 // pred_check_branch
    %4699 = sbr.rel (0) target = $region33
  $region32: #{resblock_forward.1} parent=0 // pred_region
    _
  $region33: #{resblock_forward.1} parent=0 // pred_fallthru
    _

</llo_original>
